<compile_context>
chip_gen: v6e
topology: v6e:2x2x1
jax: 0.10.0
libtpu: 0.0.40
codegen_flags: <defaults>
</compile_context>

<pallas_src>
import functools

import jax
import jax.numpy as jnp
import numpy as np
from jax import lax
from jax.experimental import pallas as pl
from jax.experimental.pallas import tpu as pltpu

EPS = 1e-5


# --------------------------------------------------------------------------
# Parameter init (deterministic, mirrors the PyTorch module's __init__)
# --------------------------------------------------------------------------
def _make_bn(c):
    return dict(g=jnp.ones((c,), jnp.float32), b=jnp.zeros((c,), jnp.float32),
                m=jnp.zeros((c,), jnp.float32), v=jnp.ones((c,), jnp.float32))


def _kaiming_conv(key, cout, cin, k):
    std = (2.0 / (cout * k)) ** 0.5                      # fan_out, relu
    return jax.random.normal(key, (cout, cin, k), jnp.float32) * std


def init_densenet_params(key, cfg):
    keys = iter(jax.random.split(key, 128))
    p = {}
    nif = cfg['num_init_features']
    p['conv0_w'] = _kaiming_conv(next(keys), nif, cfg['input_channels'], 7)
    p['bn0'] = _make_bn(nif)
    num_features = nif
    p['blocks'], p['transitions'] = [], []
    for bi, num_layers in enumerate(cfg['block_config']):
        layers = []
        for li in range(num_layers):
            cin = num_features + li * cfg['growth_rate']
            inter = cfg['bn_size'] * cfg['growth_rate']
            layers.append(dict(
                bn1=_make_bn(cin),
                conv1_w=_kaiming_conv(next(keys), inter, cin, 1),
                bn2=_make_bn(inter),
                conv2_w=_kaiming_conv(next(keys), cfg['growth_rate'], inter, 3),
            ))
        p['blocks'].append(layers)
        num_features += num_layers * cfg['growth_rate']
        if bi != len(cfg['block_config']) - 1:
            nout = int(num_features * cfg['compression'])
            p['transitions'].append(dict(
                bn=_make_bn(num_features),
                conv_w=_kaiming_conv(next(keys), nout, num_features, 1),
            ))
            num_features = nout
    p['bn_final'] = _make_bn(num_features)
    bound = 1.0 / (num_features ** 0.5)
    p['fc_w'] = jax.random.uniform(next(keys), (num_features, cfg['num_classes']),
                                   jnp.float32, -bound, bound)
    p['fc_b'] = jax.random.uniform(next(keys), (cfg['num_classes'],),
                                   jnp.float32, -bound, bound)
    return p


# --------------------------------------------------------------------------
# One-time packing of weights into kernel operands (runs OUTSIDE jit)
# --------------------------------------------------------------------------
def _fold_bn(bn):
    """Inference-mode BN folded to y = x*scale + shift, packed as (2, C) f32."""
    scale = bn['g'] * lax.rsqrt(bn['v'] + EPS)
    shift = bn['b'] - bn['m'] * scale
    return jnp.stack([scale, shift], axis=0)


def _shift_mats(L):
    """(2, L, L) bf16 0/1 matrices: [0] picks row l-1, [1] picks row l+1 (0 at edges)."""
    i = np.arange(L)
    dn = (i[None, :] == i[:, None] - 1).astype(np.float32)
    up = (i[None, :] == i[:, None] + 1).astype(np.float32)
    return jnp.asarray(np.stack([dn, up]), dtype=jnp.bfloat16)


def _maxpool_selectors(lc, lp):
    """(3, lp, lc) bf16 gather matrices for MaxPool1d(k=3, s=2, p=1).

    Row o of matrix t selects input row 2o+t-1; out-of-range rows are all-zero,
    which equals -inf padding because the pooled values are post-ReLU (>= 0).
    """
    o = np.arange(lp)[:, None]
    p = np.arange(lc)[None, :]
    mats = [(p == 2 * o + t).astype(np.float32) for t in (-1, 0, 1)]
    return jnp.asarray(np.stack(mats), dtype=jnp.bfloat16)


def _avgpool_mat(L):
    """(L//2, L) bf16 AvgPool1d(2) matrix (0.5 is exact in bf16)."""
    o = np.arange(L // 2)[:, None]
    p = np.arange(L)[None, :]
    return jnp.asarray(((p == 2 * o) | (p == 2 * o + 1)).astype(np.float32) * 0.5,
                       dtype=jnp.bfloat16)


def prepare_kernel_args(params, cfg, seq_len):
    """Pack weights / folded BN / selection matrices in kernel consumption order."""
    cin = cfg['input_channels']
    args = [jnp.transpose(params['conv0_w'], (2, 1, 0)).reshape(7 * cin, -1)
            .astype(jnp.bfloat16),                       # (K*Cin, C0), tap-major
            _fold_bn(params['bn0'])]
    lc0 = (seq_len + 2 * 3 - 7) // 2 + 1                 # conv0: k=7, s=2, p=3
    lp0 = (lc0 + 2 * 1 - 3) // 2 + 1                     # pool0: k=3, s=2, p=1
    args.append(_maxpool_selectors(lc0, lp0))

    L = lp0
    n_blocks = len(cfg['block_config'])
    for bi, n_layers in enumerate(cfg['block_config']):
        args.append(_shift_mats(L))
        for li in range(n_layers):
            layer = params['blocks'][bi][li]
            args += [_fold_bn(layer['bn1']),
                     layer['conv1_w'][:, :, 0].T.astype(jnp.bfloat16),   # (Cin, inter)
                     _fold_bn(layer['bn2']),
                     jnp.transpose(layer['conv2_w'], (2, 1, 0))          # (3, inter, growth)
                     .astype(jnp.bfloat16)]
        if bi != n_blocks - 1:
            tp = params['transitions'][bi]
            args += [_fold_bn(tp['bn']),
                     tp['conv_w'][:, :, 0].T.astype(jnp.bfloat16),       # (Cin, Cout)
                     _avgpool_mat(L)]
            L //= 2
    args += [_fold_bn(params['bn_final']),
             params['fc_w'].astype(jnp.bfloat16),                        # (C, classes)
             params['fc_b'].reshape(1, -1)]
    return tuple(args)


# --------------------------------------------------------------------------
# The fused Pallas kernel: conv0+bn0+relu0+pool0, all dense blocks,
# all transitions and the classification head -- one grid step per batch item.
# --------------------------------------------------------------------------
def _make_fused_kernel(block_config):
    n_blocks = len(block_config)

    def kernel(*refs):
        o_ref = refs[-1]
        it = iter(refs[:-1])

        def mm(a, b):                                    # bf16 MXU matmul, f32 acc
            return jnp.dot(a, b, preferred_element_type=jnp.float32)

        def bn_relu(x, sb):                              # folded BN + ReLU (f32 VPU)
            return jnp.maximum(x * sb[0:1, :] + sb[1:2, :], 0.0)

        # --- conv0 (k=7, s=2) as an im2col matmul + norm0 + relu0 ---
        cols_ref, w0_ref, sb0_ref, e0_ref = next(it), next(it), next(it), next(it)
        h = bn_relu(mm(cols_ref[0].astype(jnp.bfloat16), w0_ref[...]), sb0_ref[...])

        # --- pool0 = MaxPool1d(3, 2, 1): gather the 3 window taps with 0/1
        #     selection matrices (zero rows == -inf padding for post-ReLU data)
        hb = h.astype(jnp.bfloat16)
        feat = jnp.maximum(jnp.maximum(mm(e0_ref[0], hb), mm(e0_ref[1], hb)),
                           mm(e0_ref[2], hb))            # (Lp0, C0) f32

        # --- dense blocks / transitions ---
        for bi, n_layers in enumerate(block_config):
            s_ref = next(it)                             # (2, L, L) row-shift matrices
            for _ in range(n_layers):
                sb1, w1 = next(it)[...], next(it)[...]
                sb2, w2_ref = next(it)[...], next(it)
                # bn1 + relu1 -> conv1 (1x1) -> bn2 + relu2
                y = mm(bn_relu(feat, sb1).astype(jnp.bfloat16), w1)
                yb = bn_relu(y, sb2).astype(jnp.bfloat16)
                # conv2 (k=3, p=1): out[l] = y[l-1]@W0 + y[l]@W1 + y[l+1]@W2
                prev = mm(s_ref[0], yb).astype(jnp.bfloat16)
                nxt = mm(s_ref[1], yb).astype(jnp.bfloat16)
                z = mm(prev, w2_ref[0]) + mm(yb, w2_ref[1]) + mm(nxt, w2_ref[2])
                feat = jnp.concatenate([feat, z], axis=-1)   # DenseNet concat
            if bi != n_blocks - 1:
                # transition: bn + relu -> AvgPool1d(2) -> conv 1x1
                # (pool and the 1x1 conv commute; pooling first halves matmul M)
                sbt, wt, p_ref = next(it)[...], next(it)[...], next(it)
                pooled = mm(p_ref[...], bn_relu(feat, sbt).astype(jnp.bfloat16))
                feat = mm(pooled.astype(jnp.bfloat16), wt)

        # --- head: norm_final + relu + adaptive_avg_pool1d(1) + fc ---
        sbf, fcw, fcb = next(it)[...], next(it)[...], next(it)[...]
        a = bn_relu(feat, sbf)
        pooled = jnp.sum(a, axis=0, keepdims=True) * (1.0 / a.shape[0])
        o_ref[0] = mm(pooled.astype(jnp.bfloat16), fcw) + fcb

    return kernel


# --------------------------------------------------------------------------
# Wrapper: the only per-call XLA glue is the tiny conv0 im2col.
# --------------------------------------------------------------------------
def _im2col_conv0(x, k=7, stride=2, pad=3):
    B, L, C = x.shape
    lout = (L + 2 * pad - k) // stride + 1
    xp = jnp.pad(x, ((0, 0), (pad, pad), (0, 0)))
    taps = [xp[:, t: t + stride * (lout - 1) + 1: stride, :] for t in range(k)]
    return jnp.concatenate(taps, axis=-1)                # (B, lout, k*C), tap-major


def _const_index_map(ndim):
    return lambda b, _n=ndim: (0,) * _n


def densenet_forward(kargs, x, cfg):
    """x: (B, L, Cin) NLC.  Returns (B, num_classes) logits (DG_method=None path)."""
    B = x.shape[0]
    nc = cfg['num_classes']
    cols = _im2col_conv0(x)

    in_specs = [pl.BlockSpec((1,) + cols.shape[1:], lambda b: (b, 0, 0))]
    in_specs += [pl.BlockSpec(a.shape, _const_index_map(a.ndim)) for a in kargs]

    out = pl.pallas_call(
        _make_fused_kernel(tuple(cfg['block_config'])),
        out_shape=jax.ShapeDtypeStruct((B, 1, nc), jnp.float32),
        grid=(B,),
        in_specs=in_specs,
        out_specs=pl.BlockSpec((1, 1, nc), lambda b: (b, 0, 0)),
        compiler_params=pltpu.CompilerParams(
            dimension_semantics=("parallel",)),          # 2nd TC on v7x; no-op v5e/v6e
    )(cols, *kargs)
    return out[:, 0, :]


# --------------------------------------------------------------------------
# Plain-JAX reference (same inference-mode BN semantics) for a tolerance check
# --------------------------------------------------------------------------
def _ref_forward(params, x, cfg):
    def conv1d(h, w, stride=1, pad=0):
        return lax.conv_general_dilated(
            h, jnp.transpose(w, (2, 1, 0)), (stride,), [(pad, pad)],
            dimension_numbers=('NWC', 'WIO', 'NWC'))

    def bn(h, p):
        s = p['g'] * lax.rsqrt(p['v'] + EPS)
        return h * s + (p['b'] - p['m'] * s)

    h = jax.nn.relu(bn(conv1d(x, params['conv0_w'], 2, 3), params['bn0']))
    lp0 = (h.shape[1] + 2 - 3) // 2 + 1
    hp = jnp.pad(h, ((0, 0), (1, 1), (0, 0)), constant_values=-jnp.inf)
    h = jnp.max(jnp.stack([hp[:, t: t + 2 * (lp0 - 1) + 1: 2, :] for t in range(3)], 0), 0)
    for bi, n_layers in enumerate(cfg['block_config']):
        for li in range(n_layers):
            layer = params['blocks'][bi][li]
            y = conv1d(jax.nn.relu(bn(h, layer['bn1'])), layer['conv1_w'])
            z = conv1d(jax.nn.relu(bn(y, layer['bn2'])), layer['conv2_w'], 1, 1)
            h = jnp.concatenate([h, z], axis=-1)
        if bi != len(cfg['block_config']) - 1:
            tp = params['transitions'][bi]
            h = conv1d(jax.nn.relu(bn(h, tp['bn'])), tp['conv_w'])
            h = 0.5 * (h[:, 0::2, :] + h[:, 1::2, :])
    h = jax.nn.relu(bn(h, params['bn_final']))
    return jnp.mean(h, axis=1) @ params['fc_w'] + params['fc_b']


# --------------------------------------------------------------------------
if __name__ == "__main__":
    cfg = dict(input_channels=4, growth_rate=8, block_config=(2, 2, 2),
               compression=0.5, num_init_features=16, bn_size=2, num_classes=10)

    key = jax.random.PRNGKey(0)
    k_param, k_x = jax.random.split(key)
    params = init_densenet_params(k_param, cfg)

    B, L = 2, 64
    x = jax.random.normal(k_x, (B, L, cfg['input_channels']), jnp.float32)

    kargs = prepare_kernel_args(params, cfg, L)          # one-time packing, outside jit
    fwd = jax.jit(functools.partial(densenet_forward, cfg=cfg))
    out = jax.block_until_ready(fwd(kargs, x))

    ref = jax.jit(functools.partial(_ref_forward, cfg=cfg))(params, x)
    assert out.shape == (B, cfg['num_classes'])
    assert bool(jnp.all(jnp.isfinite(out)))
    assert bool(jnp.allclose(out, ref, atol=5e-2, rtol=5e-2)), \
        f"max abs err {float(jnp.max(jnp.abs(out - ref)))}"
    print("KERNEL_OK")
</pallas_src>

<mosaic_0001>
module attributes {stable_mosaic.version = 11 : i64} {
  func.func @kernel(%arg0: i32, %arg1: memref<1x32x28xf32, #tpu.memory_space<vmem>>, %arg2: memref<28x16xbf16, #tpu.memory_space<vmem>>, %arg3: memref<2x16xf32, #tpu.memory_space<vmem>>, %arg4: memref<3x16x32xbf16, #tpu.memory_space<vmem>>, %arg5: memref<2x16x16xbf16, #tpu.memory_space<vmem>>, %arg6: memref<2x16xf32, #tpu.memory_space<vmem>>, %arg7: memref<16x16xbf16, #tpu.memory_space<vmem>>, %arg8: memref<2x16xf32, #tpu.memory_space<vmem>>, %arg9: memref<3x16x8xbf16, #tpu.memory_space<vmem>>, %arg10: memref<2x24xf32, #tpu.memory_space<vmem>>, %arg11: memref<24x16xbf16, #tpu.memory_space<vmem>>, %arg12: memref<2x16xf32, #tpu.memory_space<vmem>>, %arg13: memref<3x16x8xbf16, #tpu.memory_space<vmem>>, %arg14: memref<2x32xf32, #tpu.memory_space<vmem>>, %arg15: memref<32x16xbf16, #tpu.memory_space<vmem>>, %arg16: memref<8x16xbf16, #tpu.memory_space<vmem>>, %arg17: memref<2x8x8xbf16, #tpu.memory_space<vmem>>, %arg18: memref<2x16xf32, #tpu.memory_space<vmem>>, %arg19: memref<16x16xbf16, #tpu.memory_space<vmem>>, %arg20: memref<2x16xf32, #tpu.memory_space<vmem>>, %arg21: memref<3x16x8xbf16, #tpu.memory_space<vmem>>, %arg22: memref<2x24xf32, #tpu.memory_space<vmem>>, %arg23: memref<24x16xbf16, #tpu.memory_space<vmem>>, %arg24: memref<2x16xf32, #tpu.memory_space<vmem>>, %arg25: memref<3x16x8xbf16, #tpu.memory_space<vmem>>, %arg26: memref<2x32xf32, #tpu.memory_space<vmem>>, %arg27: memref<32x16xbf16, #tpu.memory_space<vmem>>, %arg28: memref<4x8xbf16, #tpu.memory_space<vmem>>, %arg29: memref<2x4x4xbf16, #tpu.memory_space<vmem>>, %arg30: memref<2x16xf32, #tpu.memory_space<vmem>>, %arg31: memref<16x16xbf16, #tpu.memory_space<vmem>>, %arg32: memref<2x16xf32, #tpu.memory_space<vmem>>, %arg33: memref<3x16x8xbf16, #tpu.memory_space<vmem>>, %arg34: memref<2x24xf32, #tpu.memory_space<vmem>>, %arg35: memref<24x16xbf16, #tpu.memory_space<vmem>>, %arg36: memref<2x16xf32, #tpu.memory_space<vmem>>, %arg37: memref<3x16x8xbf16, #tpu.memory_space<vmem>>, %arg38: memref<2x32xf32, #tpu.memory_space<vmem>>, %arg39: memref<32x10xbf16, #tpu.memory_space<vmem>>, %arg40: memref<1x10xf32, #tpu.memory_space<vmem>>, %arg41: memref<1x1x10xf32, #tpu.memory_space<vmem>>) attributes {dimension_semantics = [#tpu.dimension_semantics<parallel>], iteration_bounds = array<i64: 2>, scalar_prefetch = 0 : i64, scratch_operands = 0 : i64, tpu.core_type = #tpu.core_type<tc>, window_params = [{transform_indices = @transform_0, window_bounds = array<i64: 1, 32, 28>}, {pipeline_mode = #tpu.pipeline_mode<synchronous>, transform_indices = @transform_1, window_bounds = array<i64: 28, 16>}, {pipeline_mode = #tpu.pipeline_mode<synchronous>, transform_indices = @transform_2, window_bounds = array<i64: 2, 16>}, {pipeline_mode = #tpu.pipeline_mode<synchronous>, transform_indices = @transform_3, window_bounds = array<i64: 3, 16, 32>}, {pipeline_mode = #tpu.pipeline_mode<synchronous>, transform_indices = @transform_4, window_bounds = array<i64: 2, 16, 16>}, {pipeline_mode = #tpu.pipeline_mode<synchronous>, transform_indices = @transform_5, window_bounds = array<i64: 2, 16>}, {pipeline_mode = #tpu.pipeline_mode<synchronous>, transform_indices = @transform_6, window_bounds = array<i64: 16, 16>}, {pipeline_mode = #tpu.pipeline_mode<synchronous>, transform_indices = @transform_7, window_bounds = array<i64: 2, 16>}, {pipeline_mode = #tpu.pipeline_mode<synchronous>, transform_indices = @transform_8, window_bounds = array<i64: 3, 16, 8>}, {pipeline_mode = #tpu.pipeline_mode<synchronous>, transform_indices = @transform_9, window_bounds = array<i64: 2, 24>}, {pipeline_mode = #tpu.pipeline_mode<synchronous>, transform_indices = @transform_10, window_bounds = array<i64: 24, 16>}, {pipeline_mode = #tpu.pipeline_mode<synchronous>, transform_indices = @transform_11, window_bounds = array<i64: 2, 16>}, {pipeline_mode = #tpu.pipeline_mode<synchronous>, transform_indices = @transform_12, window_bounds = array<i64: 3, 16, 8>}, {pipeline_mode = #tpu.pipeline_mode<synchronous>, transform_indices = @transform_13, window_bounds = array<i64: 2, 32>}, {pipeline_mode = #tpu.pipeline_mode<synchronous>, transform_indices = @transform_14, window_bounds = array<i64: 32, 16>}, {pipeline_mode = #tpu.pipeline_mode<synchronous>, transform_indices = @transform_15, window_bounds = array<i64: 8, 16>}, {pipeline_mode = #tpu.pipeline_mode<synchronous>, transform_indices = @transform_16, window_bounds = array<i64: 2, 8, 8>}, {pipeline_mode = #tpu.pipeline_mode<synchronous>, transform_indices = @transform_17, window_bounds = array<i64: 2, 16>}, {pipeline_mode = #tpu.pipeline_mode<synchronous>, transform_indices = @transform_18, window_bounds = array<i64: 16, 16>}, {pipeline_mode = #tpu.pipeline_mode<synchronous>, transform_indices = @transform_19, window_bounds = array<i64: 2, 16>}, {pipeline_mode = #tpu.pipeline_mode<synchronous>, transform_indices = @transform_20, window_bounds = array<i64: 3, 16, 8>}, {pipeline_mode = #tpu.pipeline_mode<synchronous>, transform_indices = @transform_21, window_bounds = array<i64: 2, 24>}, {pipeline_mode = #tpu.pipeline_mode<synchronous>, transform_indices = @transform_22, window_bounds = array<i64: 24, 16>}, {pipeline_mode = #tpu.pipeline_mode<synchronous>, transform_indices = @transform_23, window_bounds = array<i64: 2, 16>}, {pipeline_mode = #tpu.pipeline_mode<synchronous>, transform_indices = @transform_24, window_bounds = array<i64: 3, 16, 8>}, {pipeline_mode = #tpu.pipeline_mode<synchronous>, transform_indices = @transform_25, window_bounds = array<i64: 2, 32>}, {pipeline_mode = #tpu.pipeline_mode<synchronous>, transform_indices = @transform_26, window_bounds = array<i64: 32, 16>}, {pipeline_mode = #tpu.pipeline_mode<synchronous>, transform_indices = @transform_27, window_bounds = array<i64: 4, 8>}, {pipeline_mode = #tpu.pipeline_mode<synchronous>, transform_indices = @transform_28, window_bounds = array<i64: 2, 4, 4>}, {pipeline_mode = #tpu.pipeline_mode<synchronous>, transform_indices = @transform_29, window_bounds = array<i64: 2, 16>}, {pipeline_mode = #tpu.pipeline_mode<synchronous>, transform_indices = @transform_30, window_bounds = array<i64: 16, 16>}, {pipeline_mode = #tpu.pipeline_mode<synchronous>, transform_indices = @transform_31, window_bounds = array<i64: 2, 16>}, {pipeline_mode = #tpu.pipeline_mode<synchronous>, transform_indices = @transform_32, window_bounds = array<i64: 3, 16, 8>}, {pipeline_mode = #tpu.pipeline_mode<synchronous>, transform_indices = @transform_33, window_bounds = array<i64: 2, 24>}, {pipeline_mode = #tpu.pipeline_mode<synchronous>, transform_indices = @transform_34, window_bounds = array<i64: 24, 16>}, {pipeline_mode = #tpu.pipeline_mode<synchronous>, transform_indices = @transform_35, window_bounds = array<i64: 2, 16>}, {pipeline_mode = #tpu.pipeline_mode<synchronous>, transform_indices = @transform_36, window_bounds = array<i64: 3, 16, 8>}, {pipeline_mode = #tpu.pipeline_mode<synchronous>, transform_indices = @transform_37, window_bounds = array<i64: 2, 32>}, {pipeline_mode = #tpu.pipeline_mode<synchronous>, transform_indices = @transform_38, window_bounds = array<i64: 32, 10>}, {pipeline_mode = #tpu.pipeline_mode<synchronous>, transform_indices = @transform_39, window_bounds = array<i64: 1, 10>}, {transform_indices = @transform_40, window_bounds = array<i64: 1, 1, 10>}]} {
    %c0 = arith.constant 0 : index
    %c0_0 = arith.constant 0 : index
    %c0_1 = arith.constant 0 : index
    %0 = vector.load %arg1[%c0, %c0_0, %c0_1] : memref<1x32x28xf32, #tpu.memory_space<vmem>>, vector<1x32x28xf32>
    %1 = vector.shape_cast %0 : vector<1x32x28xf32> to vector<32x28xf32>
    %2 = arith.truncf %1 : vector<32x28xf32> to vector<32x28xbf16>
    %c0_2 = arith.constant 0 : index
    %c0_3 = arith.constant 0 : index
    %3 = vector.load %arg2[%c0_2, %c0_3] : memref<28x16xbf16, #tpu.memory_space<vmem>>, vector<28x16xbf16>
    %cst = arith.constant dense<0.000000e+00> : vector<32x16xf32>
    %4 = tpu.matmul %2, %3, %cst {dimension_numbers = #tpu.dot_dimension_numbers<[1], [0], [0], [1], [0, 0, 1, 1], [], []>} : vector<32x28xbf16>, vector<28x16xbf16>, vector<32x16xf32> -> vector<32x16xf32>
    %c0_4 = arith.constant 0 : index
    %c0_5 = arith.constant 0 : index
    %5 = vector.load %arg3[%c0_4, %c0_5] : memref<2x16xf32, #tpu.memory_space<vmem>>, vector<2x16xf32>
    %6 = vector.extract_strided_slice %5 {offsets = [0, 0], sizes = [1, 16], strides = [1, 1]} : vector<2x16xf32> to vector<1x16xf32>
    %7 = vector.broadcast %6 : vector<1x16xf32> to vector<32x16xf32>
    %8 = arith.mulf %4, %7 : vector<32x16xf32>
    %9 = vector.extract_strided_slice %5 {offsets = [1, 0], sizes = [1, 16], strides = [1, 1]} : vector<2x16xf32> to vector<1x16xf32>
    %10 = vector.broadcast %9 : vector<1x16xf32> to vector<32x16xf32>
    %11 = arith.addf %8, %10 : vector<32x16xf32>
    %cst_6 = arith.constant 0.000000e+00 : f32
    %12 = vector.broadcast %cst_6 : f32 to vector<32x16xf32>
    %13 = arith.maximumf %11, %12 : vector<32x16xf32>
    %14 = arith.truncf %13 : vector<32x16xf32> to vector<32x16xbf16>
    %c0_7 = arith.constant 0 : index
    %c0_8 = arith.constant 0 : index
    %c0_9 = arith.constant 0 : index
    %15 = vector.load %arg4[%c0_7, %c0_8, %c0_9] : memref<3x16x32xbf16, #tpu.memory_space<vmem>>, vector<1x16x32xbf16>
    %16 = vector.shape_cast %15 : vector<1x16x32xbf16> to vector<16x32xbf16>
    %cst_10 = arith.constant dense<0.000000e+00> : vector<16x16xf32>
    %17 = tpu.matmul %16, %14, %cst_10 {dimension_numbers = #tpu.dot_dimension_numbers<[1], [0], [0], [1], [0, 0, 1, 1], [], []>} : vector<16x32xbf16>, vector<32x16xbf16>, vector<16x16xf32> -> vector<16x16xf32>
    %c1 = arith.constant 1 : index
    %c0_11 = arith.constant 0 : index
    %c0_12 = arith.constant 0 : index
    %18 = vector.load %arg4[%c1, %c0_11, %c0_12] : memref<3x16x32xbf16, #tpu.memory_space<vmem>>, vector<1x16x32xbf16>
    %19 = vector.shape_cast %18 : vector<1x16x32xbf16> to vector<16x32xbf16>
    %cst_13 = arith.constant dense<0.000000e+00> : vector<16x16xf32>
    %20 = tpu.matmul %19, %14, %cst_13 {dimension_numbers = #tpu.dot_dimension_numbers<[1], [0], [0], [1], [0, 0, 1, 1], [], []>} : vector<16x32xbf16>, vector<32x16xbf16>, vector<16x16xf32> -> vector<16x16xf32>
    %21 = arith.maximumf %17, %20 : vector<16x16xf32>
    %c2 = arith.constant 2 : index
    %c0_14 = arith.constant 0 : index
    %c0_15 = arith.constant 0 : index
    %22 = vector.load %arg4[%c2, %c0_14, %c0_15] : memref<3x16x32xbf16, #tpu.memory_space<vmem>>, vector<1x16x32xbf16>
    %23 = vector.shape_cast %22 : vector<1x16x32xbf16> to vector<16x32xbf16>
    %cst_16 = arith.constant dense<0.000000e+00> : vector<16x16xf32>
    %24 = tpu.matmul %23, %14, %cst_16 {dimension_numbers = #tpu.dot_dimension_numbers<[1], [0], [0], [1], [0, 0, 1, 1], [], []>} : vector<16x32xbf16>, vector<32x16xbf16>, vector<16x16xf32> -> vector<16x16xf32>
    %25 = arith.maximumf %21, %24 : vector<16x16xf32>
    %c0_17 = arith.constant 0 : index
    %c0_18 = arith.constant 0 : index
    %26 = vector.load %arg6[%c0_17, %c0_18] : memref<2x16xf32, #tpu.memory_space<vmem>>, vector<2x16xf32>
    %c0_19 = arith.constant 0 : index
    %c0_20 = arith.constant 0 : index
    %27 = vector.load %arg7[%c0_19, %c0_20] : memref<16x16xbf16, #tpu.memory_space<vmem>>, vector<16x16xbf16>
    %c0_21 = arith.constant 0 : index
    %c0_22 = arith.constant 0 : index
    %28 = vector.load %arg8[%c0_21, %c0_22] : memref<2x16xf32, #tpu.memory_space<vmem>>, vector<2x16xf32>
    %29 = vector.extract_strided_slice %26 {offsets = [0, 0], sizes = [1, 16], strides = [1, 1]} : vector<2x16xf32> to vector<1x16xf32>
    %30 = vector.broadcast %29 : vector<1x16xf32> to vector<16x16xf32>
    %31 = arith.mulf %25, %30 : vector<16x16xf32>
    %32 = vector.extract_strided_slice %26 {offsets = [1, 0], sizes = [1, 16], strides = [1, 1]} : vector<2x16xf32> to vector<1x16xf32>
    %33 = vector.broadcast %32 : vector<1x16xf32> to vector<16x16xf32>
    %34 = arith.addf %31, %33 : vector<16x16xf32>
    %cst_23 = arith.constant 0.000000e+00 : f32
    %35 = vector.broadcast %cst_23 : f32 to vector<16x16xf32>
    %36 = arith.maximumf %34, %35 : vector<16x16xf32>
    %37 = arith.truncf %36 : vector<16x16xf32> to vector<16x16xbf16>
    %cst_24 = arith.constant dense<0.000000e+00> : vector<16x16xf32>
    %38 = tpu.matmul %37, %27, %cst_24 {dimension_numbers = #tpu.dot_dimension_numbers<[1], [0], [0], [1], [0, 0, 1, 1], [], []>} : vector<16x16xbf16>, vector<16x16xbf16>, vector<16x16xf32> -> vector<16x16xf32>
    %39 = vector.extract_strided_slice %28 {offsets = [0, 0], sizes = [1, 16], strides = [1, 1]} : vector<2x16xf32> to vector<1x16xf32>
    %40 = vector.broadcast %39 : vector<1x16xf32> to vector<16x16xf32>
    %41 = arith.mulf %38, %40 : vector<16x16xf32>
    %42 = vector.extract_strided_slice %28 {offsets = [1, 0], sizes = [1, 16], strides = [1, 1]} : vector<2x16xf32> to vector<1x16xf32>
    %43 = vector.broadcast %42 : vector<1x16xf32> to vector<16x16xf32>
    %44 = arith.addf %41, %43 : vector<16x16xf32>
    %cst_25 = arith.constant 0.000000e+00 : f32
    %45 = vector.broadcast %cst_25 : f32 to vector<16x16xf32>
    %46 = arith.maximumf %44, %45 : vector<16x16xf32>
    %47 = arith.truncf %46 : vector<16x16xf32> to vector<16x16xbf16>
    %c0_26 = arith.constant 0 : index
    %c0_27 = arith.constant 0 : index
    %c0_28 = arith.constant 0 : index
    %48 = vector.load %arg5[%c0_26, %c0_27, %c0_28] : memref<2x16x16xbf16, #tpu.memory_space<vmem>>, vector<1x16x16xbf16>
    %49 = vector.shape_cast %48 : vector<1x16x16xbf16> to vector<16x16xbf16>
    %cst_29 = arith.constant dense<0.000000e+00> : vector<16x16xf32>
    %50 = tpu.matmul %49, %47, %cst_29 {dimension_numbers = #tpu.dot_dimension_numbers<[1], [0], [0], [1], [0, 0, 1, 1], [], []>} : vector<16x16xbf16>, vector<16x16xbf16>, vector<16x16xf32> -> vector<16x16xf32>
    %51 = arith.truncf %50 : vector<16x16xf32> to vector<16x16xbf16>
    %c1_30 = arith.constant 1 : index
    %c0_31 = arith.constant 0 : index
    %c0_32 = arith.constant 0 : index
    %52 = vector.load %arg5[%c1_30, %c0_31, %c0_32] : memref<2x16x16xbf16, #tpu.memory_space<vmem>>, vector<1x16x16xbf16>
    %53 = vector.shape_cast %52 : vector<1x16x16xbf16> to vector<16x16xbf16>
    %cst_33 = arith.constant dense<0.000000e+00> : vector<16x16xf32>
    %54 = tpu.matmul %53, %47, %cst_33 {dimension_numbers = #tpu.dot_dimension_numbers<[1], [0], [0], [1], [0, 0, 1, 1], [], []>} : vector<16x16xbf16>, vector<16x16xbf16>, vector<16x16xf32> -> vector<16x16xf32>
    %55 = arith.truncf %54 : vector<16x16xf32> to vector<16x16xbf16>
    %c0_34 = arith.constant 0 : index
    %c0_35 = arith.constant 0 : index
    %c0_36 = arith.constant 0 : index
    %56 = vector.load %arg9[%c0_34, %c0_35, %c0_36] : memref<3x16x8xbf16, #tpu.memory_space<vmem>>, vector<1x16x8xbf16>
    %57 = vector.shape_cast %56 : vector<1x16x8xbf16> to vector<16x8xbf16>
    %cst_37 = arith.constant dense<0.000000e+00> : vector<16x8xf32>
    %58 = tpu.matmul %51, %57, %cst_37 {dimension_numbers = #tpu.dot_dimension_numbers<[1], [0], [0], [1], [0, 0, 1, 1], [], []>} : vector<16x16xbf16>, vector<16x8xbf16>, vector<16x8xf32> -> vector<16x8xf32>
    %c1_38 = arith.constant 1 : index
    %c0_39 = arith.constant 0 : index
    %c0_40 = arith.constant 0 : index
    %59 = vector.load %arg9[%c1_38, %c0_39, %c0_40] : memref<3x16x8xbf16, #tpu.memory_space<vmem>>, vector<1x16x8xbf16>
    %60 = vector.shape_cast %59 : vector<1x16x8xbf16> to vector<16x8xbf16>
    %cst_41 = arith.constant dense<0.000000e+00> : vector<16x8xf32>
    %61 = tpu.matmul %47, %60, %cst_41 {dimension_numbers = #tpu.dot_dimension_numbers<[1], [0], [0], [1], [0, 0, 1, 1], [], []>} : vector<16x16xbf16>, vector<16x8xbf16>, vector<16x8xf32> -> vector<16x8xf32>
    %62 = arith.addf %58, %61 : vector<16x8xf32>
    %c2_42 = arith.constant 2 : index
    %c0_43 = arith.constant 0 : index
    %c0_44 = arith.constant 0 : index
    %63 = vector.load %arg9[%c2_42, %c0_43, %c0_44] : memref<3x16x8xbf16, #tpu.memory_space<vmem>>, vector<1x16x8xbf16>
    %64 = vector.shape_cast %63 : vector<1x16x8xbf16> to vector<16x8xbf16>
    %cst_45 = arith.constant dense<0.000000e+00> : vector<16x8xf32>
    %65 = tpu.matmul %55, %64, %cst_45 {dimension_numbers = #tpu.dot_dimension_numbers<[1], [0], [0], [1], [0, 0, 1, 1], [], []>} : vector<16x16xbf16>, vector<16x8xbf16>, vector<16x8xf32> -> vector<16x8xf32>
    %66 = arith.addf %62, %65 : vector<16x8xf32>
    %67 = tpu.concatenate %25, %66 in 1 : vector<16x16xf32>, vector<16x8xf32> -> vector<16x24xf32>
    %c0_46 = arith.constant 0 : index
    %c0_47 = arith.constant 0 : index
    %68 = vector.load %arg10[%c0_46, %c0_47] : memref<2x24xf32, #tpu.memory_space<vmem>>, vector<2x24xf32>
    %c0_48 = arith.constant 0 : index
    %c0_49 = arith.constant 0 : index
    %69 = vector.load %arg11[%c0_48, %c0_49] : memref<24x16xbf16, #tpu.memory_space<vmem>>, vector<24x16xbf16>
    %c0_50 = arith.constant 0 : index
    %c0_51 = arith.constant 0 : index
    %70 = vector.load %arg12[%c0_50, %c0_51] : memref<2x16xf32, #tpu.memory_space<vmem>>, vector<2x16xf32>
    %71 = vector.extract_strided_slice %68 {offsets = [0, 0], sizes = [1, 24], strides = [1, 1]} : vector<2x24xf32> to vector<1x24xf32>
    %72 = vector.broadcast %71 : vector<1x24xf32> to vector<16x24xf32>
    %73 = arith.mulf %67, %72 : vector<16x24xf32>
    %74 = vector.extract_strided_slice %68 {offsets = [1, 0], sizes = [1, 24], strides = [1, 1]} : vector<2x24xf32> to vector<1x24xf32>
    %75 = vector.broadcast %74 : vector<1x24xf32> to vector<16x24xf32>
    %76 = arith.addf %73, %75 : vector<16x24xf32>
    %cst_52 = arith.constant 0.000000e+00 : f32
    %77 = vector.broadcast %cst_52 : f32 to vector<16x24xf32>
    %78 = arith.maximumf %76, %77 : vector<16x24xf32>
    %79 = arith.truncf %78 : vector<16x24xf32> to vector<16x24xbf16>
    %cst_53 = arith.constant dense<0.000000e+00> : vector<16x16xf32>
    %80 = tpu.matmul %79, %69, %cst_53 {dimension_numbers = #tpu.dot_dimension_numbers<[1], [0], [0], [1], [0, 0, 1, 1], [], []>} : vector<16x24xbf16>, vector<24x16xbf16>, vector<16x16xf32> -> vector<16x16xf32>
    %81 = vector.extract_strided_slice %70 {offsets = [0, 0], sizes = [1, 16], strides = [1, 1]} : vector<2x16xf32> to vector<1x16xf32>
    %82 = vector.broadcast %81 : vector<1x16xf32> to vector<16x16xf32>
    %83 = arith.mulf %80, %82 : vector<16x16xf32>
    %84 = vector.extract_strided_slice %70 {offsets = [1, 0], sizes = [1, 16], strides = [1, 1]} : vector<2x16xf32> to vector<1x16xf32>
    %85 = vector.broadcast %84 : vector<1x16xf32> to vector<16x16xf32>
    %86 = arith.addf %83, %85 : vector<16x16xf32>
    %cst_54 = arith.constant 0.000000e+00 : f32
    %87 = vector.broadcast %cst_54 : f32 to vector<16x16xf32>
    %88 = arith.maximumf %86, %87 : vector<16x16xf32>
    %89 = arith.truncf %88 : vector<16x16xf32> to vector<16x16xbf16>
    %c0_55 = arith.constant 0 : index
    %c0_56 = arith.constant 0 : index
    %c0_57 = arith.constant 0 : index
    %90 = vector.load %arg5[%c0_55, %c0_56, %c0_57] : memref<2x16x16xbf16, #tpu.memory_space<vmem>>, vector<1x16x16xbf16>
    %91 = vector.shape_cast %90 : vector<1x16x16xbf16> to vector<16x16xbf16>
    %cst_58 = arith.constant dense<0.000000e+00> : vector<16x16xf32>
    %92 = tpu.matmul %91, %89, %cst_58 {dimension_numbers = #tpu.dot_dimension_numbers<[1], [0], [0], [1], [0, 0, 1, 1], [], []>} : vector<16x16xbf16>, vector<16x16xbf16>, vector<16x16xf32> -> vector<16x16xf32>
    %93 = arith.truncf %92 : vector<16x16xf32> to vector<16x16xbf16>
    %c1_59 = arith.constant 1 : index
    %c0_60 = arith.constant 0 : index
    %c0_61 = arith.constant 0 : index
    %94 = vector.load %arg5[%c1_59, %c0_60, %c0_61] : memref<2x16x16xbf16, #tpu.memory_space<vmem>>, vector<1x16x16xbf16>
    %95 = vector.shape_cast %94 : vector<1x16x16xbf16> to vector<16x16xbf16>
    %cst_62 = arith.constant dense<0.000000e+00> : vector<16x16xf32>
    %96 = tpu.matmul %95, %89, %cst_62 {dimension_numbers = #tpu.dot_dimension_numbers<[1], [0], [0], [1], [0, 0, 1, 1], [], []>} : vector<16x16xbf16>, vector<16x16xbf16>, vector<16x16xf32> -> vector<16x16xf32>
    %97 = arith.truncf %96 : vector<16x16xf32> to vector<16x16xbf16>
    %c0_63 = arith.constant 0 : index
    %c0_64 = arith.constant 0 : index
    %c0_65 = arith.constant 0 : index
    %98 = vector.load %arg13[%c0_63, %c0_64, %c0_65] : memref<3x16x8xbf16, #tpu.memory_space<vmem>>, vector<1x16x8xbf16>
    %99 = vector.shape_cast %98 : vector<1x16x8xbf16> to vector<16x8xbf16>
    %cst_66 = arith.constant dense<0.000000e+00> : vector<16x8xf32>
    %100 = tpu.matmul %93, %99, %cst_66 {dimension_numbers = #tpu.dot_dimension_numbers<[1], [0], [0], [1], [0, 0, 1, 1], [], []>} : vector<16x16xbf16>, vector<16x8xbf16>, vector<16x8xf32> -> vector<16x8xf32>
    %c1_67 = arith.constant 1 : index
    %c0_68 = arith.constant 0 : index
    %c0_69 = arith.constant 0 : index
    %101 = vector.load %arg13[%c1_67, %c0_68, %c0_69] : memref<3x16x8xbf16, #tpu.memory_space<vmem>>, vector<1x16x8xbf16>
    %102 = vector.shape_cast %101 : vector<1x16x8xbf16> to vector<16x8xbf16>
    %cst_70 = arith.constant dense<0.000000e+00> : vector<16x8xf32>
    %103 = tpu.matmul %89, %102, %cst_70 {dimension_numbers = #tpu.dot_dimension_numbers<[1], [0], [0], [1], [0, 0, 1, 1], [], []>} : vector<16x16xbf16>, vector<16x8xbf16>, vector<16x8xf32> -> vector<16x8xf32>
    %104 = arith.addf %100, %103 : vector<16x8xf32>
    %c2_71 = arith.constant 2 : index
    %c0_72 = arith.constant 0 : index
    %c0_73 = arith.constant 0 : index
    %105 = vector.load %arg13[%c2_71, %c0_72, %c0_73] : memref<3x16x8xbf16, #tpu.memory_space<vmem>>, vector<1x16x8xbf16>
    %106 = vector.shape_cast %105 : vector<1x16x8xbf16> to vector<16x8xbf16>
    %cst_74 = arith.constant dense<0.000000e+00> : vector<16x8xf32>
    %107 = tpu.matmul %97, %106, %cst_74 {dimension_numbers = #tpu.dot_dimension_numbers<[1], [0], [0], [1], [0, 0, 1, 1], [], []>} : vector<16x16xbf16>, vector<16x8xbf16>, vector<16x8xf32> -> vector<16x8xf32>
    %108 = arith.addf %104, %107 : vector<16x8xf32>
    %109 = tpu.concatenate %67, %108 in 1 : vector<16x24xf32>, vector<16x8xf32> -> vector<16x32xf32>
    %c0_75 = arith.constant 0 : index
    %c0_76 = arith.constant 0 : index
    %110 = vector.load %arg14[%c0_75, %c0_76] : memref<2x32xf32, #tpu.memory_space<vmem>>, vector<2x32xf32>
    %c0_77 = arith.constant 0 : index
    %c0_78 = arith.constant 0 : index
    %111 = vector.load %arg15[%c0_77, %c0_78] : memref<32x16xbf16, #tpu.memory_space<vmem>>, vector<32x16xbf16>
    %c0_79 = arith.constant 0 : index
    %c0_80 = arith.constant 0 : index
    %112 = vector.load %arg16[%c0_79, %c0_80] : memref<8x16xbf16, #tpu.memory_space<vmem>>, vector<8x16xbf16>
    %113 = vector.extract_strided_slice %110 {offsets = [0, 0], sizes = [1, 32], strides = [1, 1]} : vector<2x32xf32> to vector<1x32xf32>
    %114 = vector.broadcast %113 : vector<1x32xf32> to vector<16x32xf32>
    %115 = arith.mulf %109, %114 : vector<16x32xf32>
    %116 = vector.extract_strided_slice %110 {offsets = [1, 0], sizes = [1, 32], strides = [1, 1]} : vector<2x32xf32> to vector<1x32xf32>
    %117 = vector.broadcast %116 : vector<1x32xf32> to vector<16x32xf32>
    %118 = arith.addf %115, %117 : vector<16x32xf32>
    %cst_81 = arith.constant 0.000000e+00 : f32
    %119 = vector.broadcast %cst_81 : f32 to vector<16x32xf32>
    %120 = arith.maximumf %118, %119 : vector<16x32xf32>
    %121 = arith.truncf %120 : vector<16x32xf32> to vector<16x32xbf16>
    %cst_82 = arith.constant dense<0.000000e+00> : vector<8x32xf32>
    %122 = tpu.matmul %112, %121, %cst_82 {dimension_numbers = #tpu.dot_dimension_numbers<[1], [0], [0], [1], [0, 0, 1, 1], [], []>} : vector<8x16xbf16>, vector<16x32xbf16>, vector<8x32xf32> -> vector<8x32xf32>
    %123 = arith.truncf %122 : vector<8x32xf32> to vector<8x32xbf16>
    %cst_83 = arith.constant dense<0.000000e+00> : vector<8x16xf32>
    %124 = tpu.matmul %123, %111, %cst_83 {dimension_numbers = #tpu.dot_dimension_numbers<[1], [0], [0], [1], [0, 0, 1, 1], [], []>} : vector<8x32xbf16>, vector<32x16xbf16>, vector<8x16xf32> -> vector<8x16xf32>
    %c0_84 = arith.constant 0 : index
    %c0_85 = arith.constant 0 : index
    %125 = vector.load %arg18[%c0_84, %c0_85] : memref<2x16xf32, #tpu.memory_space<vmem>>, vector<2x16xf32>
    %c0_86 = arith.constant 0 : index
    %c0_87 = arith.constant 0 : index
    %126 = vector.load %arg19[%c0_86, %c0_87] : memref<16x16xbf16, #tpu.memory_space<vmem>>, vector<16x16xbf16>
    %c0_88 = arith.constant 0 : index
    %c0_89 = arith.constant 0 : index
    %127 = vector.load %arg20[%c0_88, %c0_89] : memref<2x16xf32, #tpu.memory_space<vmem>>, vector<2x16xf32>
    %128 = vector.extract_strided_slice %125 {offsets = [0, 0], sizes = [1, 16], strides = [1, 1]} : vector<2x16xf32> to vector<1x16xf32>
    %129 = vector.broadcast %128 : vector<1x16xf32> to vector<8x16xf32>
    %130 = arith.mulf %124, %129 : vector<8x16xf32>
    %131 = vector.extract_strided_slice %125 {offsets = [1, 0], sizes = [1, 16], strides = [1, 1]} : vector<2x16xf32> to vector<1x16xf32>
    %132 = vector.broadcast %131 : vector<1x16xf32> to vector<8x16xf32>
    %133 = arith.addf %130, %132 : vector<8x16xf32>
    %cst_90 = arith.constant 0.000000e+00 : f32
    %134 = vector.broadcast %cst_90 : f32 to vector<8x16xf32>
    %135 = arith.maximumf %133, %134 : vector<8x16xf32>
    %136 = arith.truncf %135 : vector<8x16xf32> to vector<8x16xbf16>
    %cst_91 = arith.constant dense<0.000000e+00> : vector<8x16xf32>
    %137 = tpu.matmul %136, %126, %cst_91 {dimension_numbers = #tpu.dot_dimension_numbers<[1], [0], [0], [1], [0, 0, 1, 1], [], []>} : vector<8x16xbf16>, vector<16x16xbf16>, vector<8x16xf32> -> vector<8x16xf32>
    %138 = vector.extract_strided_slice %127 {offsets = [0, 0], sizes = [1, 16], strides = [1, 1]} : vector<2x16xf32> to vector<1x16xf32>
    %139 = vector.broadcast %138 : vector<1x16xf32> to vector<8x16xf32>
    %140 = arith.mulf %137, %139 : vector<8x16xf32>
    %141 = vector.extract_strided_slice %127 {offsets = [1, 0], sizes = [1, 16], strides = [1, 1]} : vector<2x16xf32> to vector<1x16xf32>
    %142 = vector.broadcast %141 : vector<1x16xf32> to vector<8x16xf32>
    %143 = arith.addf %140, %142 : vector<8x16xf32>
    %cst_92 = arith.constant 0.000000e+00 : f32
    %144 = vector.broadcast %cst_92 : f32 to vector<8x16xf32>
    %145 = arith.maximumf %143, %144 : vector<8x16xf32>
    %146 = arith.truncf %145 : vector<8x16xf32> to vector<8x16xbf16>
    %c0_93 = arith.constant 0 : index
    %c0_94 = arith.constant 0 : index
    %c0_95 = arith.constant 0 : index
    %147 = vector.load %arg17[%c0_93, %c0_94, %c0_95] : memref<2x8x8xbf16, #tpu.memory_space<vmem>>, vector<1x8x8xbf16>
    %148 = vector.shape_cast %147 : vector<1x8x8xbf16> to vector<8x8xbf16>
    %cst_96 = arith.constant dense<0.000000e+00> : vector<8x16xf32>
    %149 = tpu.matmul %148, %146, %cst_96 {dimension_numbers = #tpu.dot_dimension_numbers<[1], [0], [0], [1], [0, 0, 1, 1], [], []>} : vector<8x8xbf16>, vector<8x16xbf16>, vector<8x16xf32> -> vector<8x16xf32>
    %150 = arith.truncf %149 : vector<8x16xf32> to vector<8x16xbf16>
    %c1_97 = arith.constant 1 : index
    %c0_98 = arith.constant 0 : index
    %c0_99 = arith.constant 0 : index
    %151 = vector.load %arg17[%c1_97, %c0_98, %c0_99] : memref<2x8x8xbf16, #tpu.memory_space<vmem>>, vector<1x8x8xbf16>
    %152 = vector.shape_cast %151 : vector<1x8x8xbf16> to vector<8x8xbf16>
    %cst_100 = arith.constant dense<0.000000e+00> : vector<8x16xf32>
    %153 = tpu.matmul %152, %146, %cst_100 {dimension_numbers = #tpu.dot_dimension_numbers<[1], [0], [0], [1], [0, 0, 1, 1], [], []>} : vector<8x8xbf16>, vector<8x16xbf16>, vector<8x16xf32> -> vector<8x16xf32>
    %154 = arith.truncf %153 : vector<8x16xf32> to vector<8x16xbf16>
    %c0_101 = arith.constant 0 : index
    %c0_102 = arith.constant 0 : index
    %c0_103 = arith.constant 0 : index
    %155 = vector.load %arg21[%c0_101, %c0_102, %c0_103] : memref<3x16x8xbf16, #tpu.memory_space<vmem>>, vector<1x16x8xbf16>
    %156 = vector.shape_cast %155 : vector<1x16x8xbf16> to vector<16x8xbf16>
    %cst_104 = arith.constant dense<0.000000e+00> : vector<8x8xf32>
    %157 = tpu.matmul %150, %156, %cst_104 {dimension_numbers = #tpu.dot_dimension_numbers<[1], [0], [0], [1], [0, 0, 1, 1], [], []>} : vector<8x16xbf16>, vector<16x8xbf16>, vector<8x8xf32> -> vector<8x8xf32>
    %c1_105 = arith.constant 1 : index
    %c0_106 = arith.constant 0 : index
    %c0_107 = arith.constant 0 : index
    %158 = vector.load %arg21[%c1_105, %c0_106, %c0_107] : memref<3x16x8xbf16, #tpu.memory_space<vmem>>, vector<1x16x8xbf16>
    %159 = vector.shape_cast %158 : vector<1x16x8xbf16> to vector<16x8xbf16>
    %cst_108 = arith.constant dense<0.000000e+00> : vector<8x8xf32>
    %160 = tpu.matmul %146, %159, %cst_108 {dimension_numbers = #tpu.dot_dimension_numbers<[1], [0], [0], [1], [0, 0, 1, 1], [], []>} : vector<8x16xbf16>, vector<16x8xbf16>, vector<8x8xf32> -> vector<8x8xf32>
    %161 = arith.addf %157, %160 : vector<8x8xf32>
    %c2_109 = arith.constant 2 : index
    %c0_110 = arith.constant 0 : index
    %c0_111 = arith.constant 0 : index
    %162 = vector.load %arg21[%c2_109, %c0_110, %c0_111] : memref<3x16x8xbf16, #tpu.memory_space<vmem>>, vector<1x16x8xbf16>
    %163 = vector.shape_cast %162 : vector<1x16x8xbf16> to vector<16x8xbf16>
    %cst_112 = arith.constant dense<0.000000e+00> : vector<8x8xf32>
    %164 = tpu.matmul %154, %163, %cst_112 {dimension_numbers = #tpu.dot_dimension_numbers<[1], [0], [0], [1], [0, 0, 1, 1], [], []>} : vector<8x16xbf16>, vector<16x8xbf16>, vector<8x8xf32> -> vector<8x8xf32>
    %165 = arith.addf %161, %164 : vector<8x8xf32>
    %166 = tpu.concatenate %124, %165 in 1 : vector<8x16xf32>, vector<8x8xf32> -> vector<8x24xf32>
    %c0_113 = arith.constant 0 : index
    %c0_114 = arith.constant 0 : index
    %167 = vector.load %arg22[%c0_113, %c0_114] : memref<2x24xf32, #tpu.memory_space<vmem>>, vector<2x24xf32>
    %c0_115 = arith.constant 0 : index
    %c0_116 = arith.constant 0 : index
    %168 = vector.load %arg23[%c0_115, %c0_116] : memref<24x16xbf16, #tpu.memory_space<vmem>>, vector<24x16xbf16>
    %c0_117 = arith.constant 0 : index
    %c0_118 = arith.constant 0 : index
    %169 = vector.load %arg24[%c0_117, %c0_118] : memref<2x16xf32, #tpu.memory_space<vmem>>, vector<2x16xf32>
    %170 = vector.extract_strided_slice %167 {offsets = [0, 0], sizes = [1, 24], strides = [1, 1]} : vector<2x24xf32> to vector<1x24xf32>
    %171 = vector.broadcast %170 : vector<1x24xf32> to vector<8x24xf32>
    %172 = arith.mulf %166, %171 : vector<8x24xf32>
    %173 = vector.extract_strided_slice %167 {offsets = [1, 0], sizes = [1, 24], strides = [1, 1]} : vector<2x24xf32> to vector<1x24xf32>
    %174 = vector.broadcast %173 : vector<1x24xf32> to vector<8x24xf32>
    %175 = arith.addf %172, %174 : vector<8x24xf32>
    %cst_119 = arith.constant 0.000000e+00 : f32
    %176 = vector.broadcast %cst_119 : f32 to vector<8x24xf32>
    %177 = arith.maximumf %175, %176 : vector<8x24xf32>
    %178 = arith.truncf %177 : vector<8x24xf32> to vector<8x24xbf16>
    %cst_120 = arith.constant dense<0.000000e+00> : vector<8x16xf32>
    %179 = tpu.matmul %178, %168, %cst_120 {dimension_numbers = #tpu.dot_dimension_numbers<[1], [0], [0], [1], [0, 0, 1, 1], [], []>} : vector<8x24xbf16>, vector<24x16xbf16>, vector<8x16xf32> -> vector<8x16xf32>
    %180 = vector.extract_strided_slice %169 {offsets = [0, 0], sizes = [1, 16], strides = [1, 1]} : vector<2x16xf32> to vector<1x16xf32>
    %181 = vector.broadcast %180 : vector<1x16xf32> to vector<8x16xf32>
    %182 = arith.mulf %179, %181 : vector<8x16xf32>
    %183 = vector.extract_strided_slice %169 {offsets = [1, 0], sizes = [1, 16], strides = [1, 1]} : vector<2x16xf32> to vector<1x16xf32>
    %184 = vector.broadcast %183 : vector<1x16xf32> to vector<8x16xf32>
    %185 = arith.addf %182, %184 : vector<8x16xf32>
    %cst_121 = arith.constant 0.000000e+00 : f32
    %186 = vector.broadcast %cst_121 : f32 to vector<8x16xf32>
    %187 = arith.maximumf %185, %186 : vector<8x16xf32>
    %188 = arith.truncf %187 : vector<8x16xf32> to vector<8x16xbf16>
    %c0_122 = arith.constant 0 : index
    %c0_123 = arith.constant 0 : index
    %c0_124 = arith.constant 0 : index
    %189 = vector.load %arg17[%c0_122, %c0_123, %c0_124] : memref<2x8x8xbf16, #tpu.memory_space<vmem>>, vector<1x8x8xbf16>
    %190 = vector.shape_cast %189 : vector<1x8x8xbf16> to vector<8x8xbf16>
    %cst_125 = arith.constant dense<0.000000e+00> : vector<8x16xf32>
    %191 = tpu.matmul %190, %188, %cst_125 {dimension_numbers = #tpu.dot_dimension_numbers<[1], [0], [0], [1], [0, 0, 1, 1], [], []>} : vector<8x8xbf16>, vector<8x16xbf16>, vector<8x16xf32> -> vector<8x16xf32>
    %192 = arith.truncf %191 : vector<8x16xf32> to vector<8x16xbf16>
    %c1_126 = arith.constant 1 : index
    %c0_127 = arith.constant 0 : index
    %c0_128 = arith.constant 0 : index
    %193 = vector.load %arg17[%c1_126, %c0_127, %c0_128] : memref<2x8x8xbf16, #tpu.memory_space<vmem>>, vector<1x8x8xbf16>
    %194 = vector.shape_cast %193 : vector<1x8x8xbf16> to vector<8x8xbf16>
    %cst_129 = arith.constant dense<0.000000e+00> : vector<8x16xf32>
    %195 = tpu.matmul %194, %188, %cst_129 {dimension_numbers = #tpu.dot_dimension_numbers<[1], [0], [0], [1], [0, 0, 1, 1], [], []>} : vector<8x8xbf16>, vector<8x16xbf16>, vector<8x16xf32> -> vector<8x16xf32>
    %196 = arith.truncf %195 : vector<8x16xf32> to vector<8x16xbf16>
    %c0_130 = arith.constant 0 : index
    %c0_131 = arith.constant 0 : index
    %c0_132 = arith.constant 0 : index
    %197 = vector.load %arg25[%c0_130, %c0_131, %c0_132] : memref<3x16x8xbf16, #tpu.memory_space<vmem>>, vector<1x16x8xbf16>
    %198 = vector.shape_cast %197 : vector<1x16x8xbf16> to vector<16x8xbf16>
    %cst_133 = arith.constant dense<0.000000e+00> : vector<8x8xf32>
    %199 = tpu.matmul %192, %198, %cst_133 {dimension_numbers = #tpu.dot_dimension_numbers<[1], [0], [0], [1], [0, 0, 1, 1], [], []>} : vector<8x16xbf16>, vector<16x8xbf16>, vector<8x8xf32> -> vector<8x8xf32>
    %c1_134 = arith.constant 1 : index
    %c0_135 = arith.constant 0 : index
    %c0_136 = arith.constant 0 : index
    %200 = vector.load %arg25[%c1_134, %c0_135, %c0_136] : memref<3x16x8xbf16, #tpu.memory_space<vmem>>, vector<1x16x8xbf16>
    %201 = vector.shape_cast %200 : vector<1x16x8xbf16> to vector<16x8xbf16>
    %cst_137 = arith.constant dense<0.000000e+00> : vector<8x8xf32>
    %202 = tpu.matmul %188, %201, %cst_137 {dimension_numbers = #tpu.dot_dimension_numbers<[1], [0], [0], [1], [0, 0, 1, 1], [], []>} : vector<8x16xbf16>, vector<16x8xbf16>, vector<8x8xf32> -> vector<8x8xf32>
    %203 = arith.addf %199, %202 : vector<8x8xf32>
    %c2_138 = arith.constant 2 : index
    %c0_139 = arith.constant 0 : index
    %c0_140 = arith.constant 0 : index
    %204 = vector.load %arg25[%c2_138, %c0_139, %c0_140] : memref<3x16x8xbf16, #tpu.memory_space<vmem>>, vector<1x16x8xbf16>
    %205 = vector.shape_cast %204 : vector<1x16x8xbf16> to vector<16x8xbf16>
    %cst_141 = arith.constant dense<0.000000e+00> : vector<8x8xf32>
    %206 = tpu.matmul %196, %205, %cst_141 {dimension_numbers = #tpu.dot_dimension_numbers<[1], [0], [0], [1], [0, 0, 1, 1], [], []>} : vector<8x16xbf16>, vector<16x8xbf16>, vector<8x8xf32> -> vector<8x8xf32>
    %207 = arith.addf %203, %206 : vector<8x8xf32>
    %208 = tpu.concatenate %166, %207 in 1 : vector<8x24xf32>, vector<8x8xf32> -> vector<8x32xf32>
    %c0_142 = arith.constant 0 : index
    %c0_143 = arith.constant 0 : index
    %209 = vector.load %arg26[%c0_142, %c0_143] : memref<2x32xf32, #tpu.memory_space<vmem>>, vector<2x32xf32>
    %c0_144 = arith.constant 0 : index
    %c0_145 = arith.constant 0 : index
    %210 = vector.load %arg27[%c0_144, %c0_145] : memref<32x16xbf16, #tpu.memory_space<vmem>>, vector<32x16xbf16>
    %c0_146 = arith.constant 0 : index
    %c0_147 = arith.constant 0 : index
    %211 = vector.load %arg28[%c0_146, %c0_147] : memref<4x8xbf16, #tpu.memory_space<vmem>>, vector<4x8xbf16>
    %212 = vector.extract_strided_slice %209 {offsets = [0, 0], sizes = [1, 32], strides = [1, 1]} : vector<2x32xf32> to vector<1x32xf32>
    %213 = vector.broadcast %212 : vector<1x32xf32> to vector<8x32xf32>
    %214 = arith.mulf %208, %213 : vector<8x32xf32>
    %215 = vector.extract_strided_slice %209 {offsets = [1, 0], sizes = [1, 32], strides = [1, 1]} : vector<2x32xf32> to vector<1x32xf32>
    %216 = vector.broadcast %215 : vector<1x32xf32> to vector<8x32xf32>
    %217 = arith.addf %214, %216 : vector<8x32xf32>
    %cst_148 = arith.constant 0.000000e+00 : f32
    %218 = vector.broadcast %cst_148 : f32 to vector<8x32xf32>
    %219 = arith.maximumf %217, %218 : vector<8x32xf32>
    %220 = arith.truncf %219 : vector<8x32xf32> to vector<8x32xbf16>
    %cst_149 = arith.constant dense<0.000000e+00> : vector<4x32xf32>
    %221 = tpu.matmul %211, %220, %cst_149 {dimension_numbers = #tpu.dot_dimension_numbers<[1], [0], [0], [1], [0, 0, 1, 1], [], []>} : vector<4x8xbf16>, vector<8x32xbf16>, vector<4x32xf32> -> vector<4x32xf32>
    %222 = arith.truncf %221 : vector<4x32xf32> to vector<4x32xbf16>
    %cst_150 = arith.constant dense<0.000000e+00> : vector<4x16xf32>
    %223 = tpu.matmul %222, %210, %cst_150 {dimension_numbers = #tpu.dot_dimension_numbers<[1], [0], [0], [1], [0, 0, 1, 1], [], []>} : vector<4x32xbf16>, vector<32x16xbf16>, vector<4x16xf32> -> vector<4x16xf32>
    %c0_151 = arith.constant 0 : index
    %c0_152 = arith.constant 0 : index
    %224 = vector.load %arg30[%c0_151, %c0_152] : memref<2x16xf32, #tpu.memory_space<vmem>>, vector<2x16xf32>
    %c0_153 = arith.constant 0 : index
    %c0_154 = arith.constant 0 : index
    %225 = vector.load %arg31[%c0_153, %c0_154] : memref<16x16xbf16, #tpu.memory_space<vmem>>, vector<16x16xbf16>
    %c0_155 = arith.constant 0 : index
    %c0_156 = arith.constant 0 : index
    %226 = vector.load %arg32[%c0_155, %c0_156] : memref<2x16xf32, #tpu.memory_space<vmem>>, vector<2x16xf32>
    %227 = vector.extract_strided_slice %224 {offsets = [0, 0], sizes = [1, 16], strides = [1, 1]} : vector<2x16xf32> to vector<1x16xf32>
    %228 = vector.broadcast %227 : vector<1x16xf32> to vector<4x16xf32>
    %229 = arith.mulf %223, %228 : vector<4x16xf32>
    %230 = vector.extract_strided_slice %224 {offsets = [1, 0], sizes = [1, 16], strides = [1, 1]} : vector<2x16xf32> to vector<1x16xf32>
    %231 = vector.broadcast %230 : vector<1x16xf32> to vector<4x16xf32>
    %232 = arith.addf %229, %231 : vector<4x16xf32>
    %cst_157 = arith.constant 0.000000e+00 : f32
    %233 = vector.broadcast %cst_157 : f32 to vector<4x16xf32>
    %234 = arith.maximumf %232, %233 : vector<4x16xf32>
    %235 = arith.truncf %234 : vector<4x16xf32> to vector<4x16xbf16>
    %cst_158 = arith.constant dense<0.000000e+00> : vector<4x16xf32>
    %236 = tpu.matmul %235, %225, %cst_158 {dimension_numbers = #tpu.dot_dimension_numbers<[1], [0], [0], [1], [0, 0, 1, 1], [], []>} : vector<4x16xbf16>, vector<16x16xbf16>, vector<4x16xf32> -> vector<4x16xf32>
    %237 = vector.extract_strided_slice %226 {offsets = [0, 0], sizes = [1, 16], strides = [1, 1]} : vector<2x16xf32> to vector<1x16xf32>
    %238 = vector.broadcast %237 : vector<1x16xf32> to vector<4x16xf32>
    %239 = arith.mulf %236, %238 : vector<4x16xf32>
    %240 = vector.extract_strided_slice %226 {offsets = [1, 0], sizes = [1, 16], strides = [1, 1]} : vector<2x16xf32> to vector<1x16xf32>
    %241 = vector.broadcast %240 : vector<1x16xf32> to vector<4x16xf32>
    %242 = arith.addf %239, %241 : vector<4x16xf32>
    %cst_159 = arith.constant 0.000000e+00 : f32
    %243 = vector.broadcast %cst_159 : f32 to vector<4x16xf32>
    %244 = arith.maximumf %242, %243 : vector<4x16xf32>
    %245 = arith.truncf %244 : vector<4x16xf32> to vector<4x16xbf16>
    %c0_160 = arith.constant 0 : index
    %c0_161 = arith.constant 0 : index
    %c0_162 = arith.constant 0 : index
    %246 = vector.load %arg29[%c0_160, %c0_161, %c0_162] : memref<2x4x4xbf16, #tpu.memory_space<vmem>>, vector<1x4x4xbf16>
    %247 = vector.shape_cast %246 : vector<1x4x4xbf16> to vector<4x4xbf16>
    %cst_163 = arith.constant dense<0.000000e+00> : vector<4x16xf32>
    %248 = tpu.matmul %247, %245, %cst_163 {dimension_numbers = #tpu.dot_dimension_numbers<[1], [0], [0], [1], [0, 0, 1, 1], [], []>} : vector<4x4xbf16>, vector<4x16xbf16>, vector<4x16xf32> -> vector<4x16xf32>
    %249 = arith.truncf %248 : vector<4x16xf32> to vector<4x16xbf16>
    %c1_164 = arith.constant 1 : index
    %c0_165 = arith.constant 0 : index
    %c0_166 = arith.constant 0 : index
    %250 = vector.load %arg29[%c1_164, %c0_165, %c0_166] : memref<2x4x4xbf16, #tpu.memory_space<vmem>>, vector<1x4x4xbf16>
    %251 = vector.shape_cast %250 : vector<1x4x4xbf16> to vector<4x4xbf16>
    %cst_167 = arith.constant dense<0.000000e+00> : vector<4x16xf32>
    %252 = tpu.matmul %251, %245, %cst_167 {dimension_numbers = #tpu.dot_dimension_numbers<[1], [0], [0], [1], [0, 0, 1, 1], [], []>} : vector<4x4xbf16>, vector<4x16xbf16>, vector<4x16xf32> -> vector<4x16xf32>
    %253 = arith.truncf %252 : vector<4x16xf32> to vector<4x16xbf16>
    %c0_168 = arith.constant 0 : index
    %c0_169 = arith.constant 0 : index
    %c0_170 = arith.constant 0 : index
    %254 = vector.load %arg33[%c0_168, %c0_169, %c0_170] : memref<3x16x8xbf16, #tpu.memory_space<vmem>>, vector<1x16x8xbf16>
    %255 = vector.shape_cast %254 : vector<1x16x8xbf16> to vector<16x8xbf16>
    %cst_171 = arith.constant dense<0.000000e+00> : vector<4x8xf32>
    %256 = tpu.matmul %249, %255, %cst_171 {dimension_numbers = #tpu.dot_dimension_numbers<[1], [0], [0], [1], [0, 0, 1, 1], [], []>} : vector<4x16xbf16>, vector<16x8xbf16>, vector<4x8xf32> -> vector<4x8xf32>
    %c1_172 = arith.constant 1 : index
    %c0_173 = arith.constant 0 : index
    %c0_174 = arith.constant 0 : index
    %257 = vector.load %arg33[%c1_172, %c0_173, %c0_174] : memref<3x16x8xbf16, #tpu.memory_space<vmem>>, vector<1x16x8xbf16>
    %258 = vector.shape_cast %257 : vector<1x16x8xbf16> to vector<16x8xbf16>
    %cst_175 = arith.constant dense<0.000000e+00> : vector<4x8xf32>
    %259 = tpu.matmul %245, %258, %cst_175 {dimension_numbers = #tpu.dot_dimension_numbers<[1], [0], [0], [1], [0, 0, 1, 1], [], []>} : vector<4x16xbf16>, vector<16x8xbf16>, vector<4x8xf32> -> vector<4x8xf32>
    %260 = arith.addf %256, %259 : vector<4x8xf32>
    %c2_176 = arith.constant 2 : index
    %c0_177 = arith.constant 0 : index
    %c0_178 = arith.constant 0 : index
    %261 = vector.load %arg33[%c2_176, %c0_177, %c0_178] : memref<3x16x8xbf16, #tpu.memory_space<vmem>>, vector<1x16x8xbf16>
    %262 = vector.shape_cast %261 : vector<1x16x8xbf16> to vector<16x8xbf16>
    %cst_179 = arith.constant dense<0.000000e+00> : vector<4x8xf32>
    %263 = tpu.matmul %253, %262, %cst_179 {dimension_numbers = #tpu.dot_dimension_numbers<[1], [0], [0], [1], [0, 0, 1, 1], [], []>} : vector<4x16xbf16>, vector<16x8xbf16>, vector<4x8xf32> -> vector<4x8xf32>
    %264 = arith.addf %260, %263 : vector<4x8xf32>
    %265 = tpu.concatenate %223, %264 in 1 : vector<4x16xf32>, vector<4x8xf32> -> vector<4x24xf32>
    %c0_180 = arith.constant 0 : index
    %c0_181 = arith.constant 0 : index
    %266 = vector.load %arg34[%c0_180, %c0_181] : memref<2x24xf32, #tpu.memory_space<vmem>>, vector<2x24xf32>
    %c0_182 = arith.constant 0 : index
    %c0_183 = arith.constant 0 : index
    %267 = vector.load %arg35[%c0_182, %c0_183] : memref<24x16xbf16, #tpu.memory_space<vmem>>, vector<24x16xbf16>
    %c0_184 = arith.constant 0 : index
    %c0_185 = arith.constant 0 : index
    %268 = vector.load %arg36[%c0_184, %c0_185] : memref<2x16xf32, #tpu.memory_space<vmem>>, vector<2x16xf32>
    %269 = vector.extract_strided_slice %266 {offsets = [0, 0], sizes = [1, 24], strides = [1, 1]} : vector<2x24xf32> to vector<1x24xf32>
    %270 = vector.broadcast %269 : vector<1x24xf32> to vector<4x24xf32>
    %271 = arith.mulf %265, %270 : vector<4x24xf32>
    %272 = vector.extract_strided_slice %266 {offsets = [1, 0], sizes = [1, 24], strides = [1, 1]} : vector<2x24xf32> to vector<1x24xf32>
    %273 = vector.broadcast %272 : vector<1x24xf32> to vector<4x24xf32>
    %274 = arith.addf %271, %273 : vector<4x24xf32>
    %cst_186 = arith.constant 0.000000e+00 : f32
    %275 = vector.broadcast %cst_186 : f32 to vector<4x24xf32>
    %276 = arith.maximumf %274, %275 : vector<4x24xf32>
    %277 = arith.truncf %276 : vector<4x24xf32> to vector<4x24xbf16>
    %cst_187 = arith.constant dense<0.000000e+00> : vector<4x16xf32>
    %278 = tpu.matmul %277, %267, %cst_187 {dimension_numbers = #tpu.dot_dimension_numbers<[1], [0], [0], [1], [0, 0, 1, 1], [], []>} : vector<4x24xbf16>, vector<24x16xbf16>, vector<4x16xf32> -> vector<4x16xf32>
    %279 = vector.extract_strided_slice %268 {offsets = [0, 0], sizes = [1, 16], strides = [1, 1]} : vector<2x16xf32> to vector<1x16xf32>
    %280 = vector.broadcast %279 : vector<1x16xf32> to vector<4x16xf32>
    %281 = arith.mulf %278, %280 : vector<4x16xf32>
    %282 = vector.extract_strided_slice %268 {offsets = [1, 0], sizes = [1, 16], strides = [1, 1]} : vector<2x16xf32> to vector<1x16xf32>
    %283 = vector.broadcast %282 : vector<1x16xf32> to vector<4x16xf32>
    %284 = arith.addf %281, %283 : vector<4x16xf32>
    %cst_188 = arith.constant 0.000000e+00 : f32
    %285 = vector.broadcast %cst_188 : f32 to vector<4x16xf32>
    %286 = arith.maximumf %284, %285 : vector<4x16xf32>
    %287 = arith.truncf %286 : vector<4x16xf32> to vector<4x16xbf16>
    %c0_189 = arith.constant 0 : index
    %c0_190 = arith.constant 0 : index
    %c0_191 = arith.constant 0 : index
    %288 = vector.load %arg29[%c0_189, %c0_190, %c0_191] : memref<2x4x4xbf16, #tpu.memory_space<vmem>>, vector<1x4x4xbf16>
    %289 = vector.shape_cast %288 : vector<1x4x4xbf16> to vector<4x4xbf16>
    %cst_192 = arith.constant dense<0.000000e+00> : vector<4x16xf32>
    %290 = tpu.matmul %289, %287, %cst_192 {dimension_numbers = #tpu.dot_dimension_numbers<[1], [0], [0], [1], [0, 0, 1, 1], [], []>} : vector<4x4xbf16>, vector<4x16xbf16>, vector<4x16xf32> -> vector<4x16xf32>
    %291 = arith.truncf %290 : vector<4x16xf32> to vector<4x16xbf16>
    %c1_193 = arith.constant 1 : index
    %c0_194 = arith.constant 0 : index
    %c0_195 = arith.constant 0 : index
    %292 = vector.load %arg29[%c1_193, %c0_194, %c0_195] : memref<2x4x4xbf16, #tpu.memory_space<vmem>>, vector<1x4x4xbf16>
    %293 = vector.shape_cast %292 : vector<1x4x4xbf16> to vector<4x4xbf16>
    %cst_196 = arith.constant dense<0.000000e+00> : vector<4x16xf32>
    %294 = tpu.matmul %293, %287, %cst_196 {dimension_numbers = #tpu.dot_dimension_numbers<[1], [0], [0], [1], [0, 0, 1, 1], [], []>} : vector<4x4xbf16>, vector<4x16xbf16>, vector<4x16xf32> -> vector<4x16xf32>
    %295 = arith.truncf %294 : vector<4x16xf32> to vector<4x16xbf16>
    %c0_197 = arith.constant 0 : index
    %c0_198 = arith.constant 0 : index
    %c0_199 = arith.constant 0 : index
    %296 = vector.load %arg37[%c0_197, %c0_198, %c0_199] : memref<3x16x8xbf16, #tpu.memory_space<vmem>>, vector<1x16x8xbf16>
    %297 = vector.shape_cast %296 : vector<1x16x8xbf16> to vector<16x8xbf16>
    %cst_200 = arith.constant dense<0.000000e+00> : vector<4x8xf32>
    %298 = tpu.matmul %291, %297, %cst_200 {dimension_numbers = #tpu.dot_dimension_numbers<[1], [0], [0], [1], [0, 0, 1, 1], [], []>} : vector<4x16xbf16>, vector<16x8xbf16>, vector<4x8xf32> -> vector<4x8xf32>
    %c1_201 = arith.constant 1 : index
    %c0_202 = arith.constant 0 : index
    %c0_203 = arith.constant 0 : index
    %299 = vector.load %arg37[%c1_201, %c0_202, %c0_203] : memref<3x16x8xbf16, #tpu.memory_space<vmem>>, vector<1x16x8xbf16>
    %300 = vector.shape_cast %299 : vector<1x16x8xbf16> to vector<16x8xbf16>
    %cst_204 = arith.constant dense<0.000000e+00> : vector<4x8xf32>
    %301 = tpu.matmul %287, %300, %cst_204 {dimension_numbers = #tpu.dot_dimension_numbers<[1], [0], [0], [1], [0, 0, 1, 1], [], []>} : vector<4x16xbf16>, vector<16x8xbf16>, vector<4x8xf32> -> vector<4x8xf32>
    %302 = arith.addf %298, %301 : vector<4x8xf32>
    %c2_205 = arith.constant 2 : index
    %c0_206 = arith.constant 0 : index
    %c0_207 = arith.constant 0 : index
    %303 = vector.load %arg37[%c2_205, %c0_206, %c0_207] : memref<3x16x8xbf16, #tpu.memory_space<vmem>>, vector<1x16x8xbf16>
    %304 = vector.shape_cast %303 : vector<1x16x8xbf16> to vector<16x8xbf16>
    %cst_208 = arith.constant dense<0.000000e+00> : vector<4x8xf32>
    %305 = tpu.matmul %295, %304, %cst_208 {dimension_numbers = #tpu.dot_dimension_numbers<[1], [0], [0], [1], [0, 0, 1, 1], [], []>} : vector<4x16xbf16>, vector<16x8xbf16>, vector<4x8xf32> -> vector<4x8xf32>
    %306 = arith.addf %302, %305 : vector<4x8xf32>
    %307 = tpu.concatenate %265, %306 in 1 : vector<4x24xf32>, vector<4x8xf32> -> vector<4x32xf32>
    %c0_209 = arith.constant 0 : index
    %c0_210 = arith.constant 0 : index
    %308 = vector.load %arg38[%c0_209, %c0_210] : memref<2x32xf32, #tpu.memory_space<vmem>>, vector<2x32xf32>
    %c0_211 = arith.constant 0 : index
    %c0_212 = arith.constant 0 : index
    %309 = vector.load %arg39[%c0_211, %c0_212] : memref<32x10xbf16, #tpu.memory_space<vmem>>, vector<32x10xbf16>
    %c0_213 = arith.constant 0 : index
    %c0_214 = arith.constant 0 : index
    %310 = vector.load %arg40[%c0_213, %c0_214] : memref<1x10xf32, #tpu.memory_space<vmem>>, vector<1x10xf32>
    %311 = vector.extract_strided_slice %308 {offsets = [0, 0], sizes = [1, 32], strides = [1, 1]} : vector<2x32xf32> to vector<1x32xf32>
    %312 = vector.broadcast %311 : vector<1x32xf32> to vector<4x32xf32>
    %313 = arith.mulf %307, %312 : vector<4x32xf32>
    %314 = vector.extract_strided_slice %308 {offsets = [1, 0], sizes = [1, 32], strides = [1, 1]} : vector<2x32xf32> to vector<1x32xf32>
    %315 = vector.broadcast %314 : vector<1x32xf32> to vector<4x32xf32>
    %316 = arith.addf %313, %315 : vector<4x32xf32>
    %cst_215 = arith.constant 0.000000e+00 : f32
    %317 = vector.broadcast %cst_215 : f32 to vector<4x32xf32>
    %318 = arith.maximumf %316, %317 : vector<4x32xf32>
    %cst_216 = arith.constant dense<0.000000e+00> : vector<32xf32>
    %319 = vector.multi_reduction <add>, %318, %cst_216 [0] : vector<4x32xf32> to vector<32xf32>
    %320 = vector.shape_cast %319 : vector<32xf32> to vector<1x32xf32>
    %cst_217 = arith.constant 2.500000e-01 : f32
    %321 = vector.broadcast %cst_217 : f32 to vector<1x32xf32>
    %322 = arith.mulf %320, %321 : vector<1x32xf32>
    %323 = arith.truncf %322 : vector<1x32xf32> to vector<1x32xbf16>
    %cst_218 = arith.constant dense<0.000000e+00> : vector<1x10xf32>
    %324 = tpu.matmul %323, %309, %cst_218 {dimension_numbers = #tpu.dot_dimension_numbers<[1], [0], [0], [1], [0, 0, 1, 1], [], []>} : vector<1x32xbf16>, vector<32x10xbf16>, vector<1x10xf32> -> vector<1x10xf32>
    %325 = arith.addf %324, %310 : vector<1x10xf32>
    %c0_219 = arith.constant 0 : index
    %c0_220 = arith.constant 0 : index
    %c0_221 = arith.constant 0 : index
    %326 = vector.load %arg41[%c0_219, %c0_220, %c0_221] : memref<1x1x10xf32, #tpu.memory_space<vmem>>, vector<1x1x10xf32>
    %327 = vector.shape_cast %326 : vector<1x1x10xf32> to vector<1x10xf32>
    %328 = vector.shape_cast %325 : vector<1x10xf32> to vector<1x1x10xf32>
    tpu.vector_store %arg41[%c0_219, %c0_220, %c0_221], %328 {strides = array<i32>} : memref<1x1x10xf32, #tpu.memory_space<vmem>>, vector<1x1x10xf32>,
    return
  }
  func.func @transform_0(%arg0: i32) -> (i32, i32, i32) {
    %c0_i32 = arith.constant 0 : i32
    %c0_i32_0 = arith.constant 0 : i32
    %c0_i32_1 = arith.constant 0 : i32
    return %arg0, %c0_i32, %c0_i32_0 : i32, i32, i32
  }
  func.func @transform_1(%arg0: i32) -> (i32, i32) {
    %c0_i32 = arith.constant 0 : i32
    %c0_i32_0 = arith.constant 0 : i32
    %c0_i32_1 = arith.constant 0 : i32
    return %c0_i32, %c0_i32_0 : i32, i32
  }
  func.func @transform_2(%arg0: i32) -> (i32, i32) {
    %c0_i32 = arith.constant 0 : i32
    %c0_i32_0 = arith.constant 0 : i32
    %c0_i32_1 = arith.constant 0 : i32
    return %c0_i32, %c0_i32_0 : i32, i32
  }
  func.func @transform_3(%arg0: i32) -> (i32, i32, i32) {
    %c0_i32 = arith.constant 0 : i32
    %c0_i32_0 = arith.constant 0 : i32
    %c0_i32_1 = arith.constant 0 : i32
    %c0_i32_2 = arith.constant 0 : i32
    return %c0_i32, %c0_i32_0, %c0_i32_1 : i32, i32, i32
  }
  func.func @transform_4(%arg0: i32) -> (i32, i32, i32) {
    %c0_i32 = arith.constant 0 : i32
    %c0_i32_0 = arith.constant 0 : i32
    %c0_i32_1 = arith.constant 0 : i32
    %c0_i32_2 = arith.constant 0 : i32
    return %c0_i32, %c0_i32_0, %c0_i32_1 : i32, i32, i32
  }
  func.func @transform_5(%arg0: i32) -> (i32, i32) {
    %c0_i32 = arith.constant 0 : i32
    %c0_i32_0 = arith.constant 0 : i32
    %c0_i32_1 = arith.constant 0 : i32
    return %c0_i32, %c0_i32_0 : i32, i32
  }
  func.func @transform_6(%arg0: i32) -> (i32, i32) {
    %c0_i32 = arith.constant 0 : i32
    %c0_i32_0 = arith.constant 0 : i32
    %c0_i32_1 = arith.constant 0 : i32
    return %c0_i32, %c0_i32_0 : i32, i32
  }
  func.func @transform_7(%arg0: i32) -> (i32, i32) {
    %c0_i32 = arith.constant 0 : i32
    %c0_i32_0 = arith.constant 0 : i32
    %c0_i32_1 = arith.constant 0 : i32
    return %c0_i32, %c0_i32_0 : i32, i32
  }
  func.func @transform_8(%arg0: i32) -> (i32, i32, i32) {
    %c0_i32 = arith.constant 0 : i32
    %c0_i32_0 = arith.constant 0 : i32
    %c0_i32_1 = arith.constant 0 : i32
    %c0_i32_2 = arith.constant 0 : i32
    return %c0_i32, %c0_i32_0, %c0_i32_1 : i32, i32, i32
  }
  func.func @transform_9(%arg0: i32) -> (i32, i32) {
    %c0_i32 = arith.constant 0 : i32
    %c0_i32_0 = arith.constant 0 : i32
    %c0_i32_1 = arith.constant 0 : i32
    return %c0_i32, %c0_i32_0 : i32, i32
  }
  func.func @transform_10(%arg0: i32) -> (i32, i32) {
    %c0_i32 = arith.constant 0 : i32
    %c0_i32_0 = arith.constant 0 : i32
    %c0_i32_1 = arith.constant 0 : i32
    return %c0_i32, %c0_i32_0 : i32, i32
  }
  func.func @transform_11(%arg0: i32) -> (i32, i32) {
    %c0_i32 = arith.constant 0 : i32
    %c0_i32_0 = arith.constant 0 : i32
    %c0_i32_1 = arith.constant 0 : i32
    return %c0_i32, %c0_i32_0 : i32, i32
  }
  func.func @transform_12(%arg0: i32) -> (i32, i32, i32) {
    %c0_i32 = arith.constant 0 : i32
    %c0_i32_0 = arith.constant 0 : i32
    %c0_i32_1 = arith.constant 0 : i32
    %c0_i32_2 = arith.constant 0 : i32
    return %c0_i32, %c0_i32_0, %c0_i32_1 : i32, i32, i32
  }
  func.func @transform_13(%arg0: i32) -> (i32, i32) {
    %c0_i32 = arith.constant 0 : i32
    %c0_i32_0 = arith.constant 0 : i32
    %c0_i32_1 = arith.constant 0 : i32
    return %c0_i32, %c0_i32_0 : i32, i32
  }
  func.func @transform_14(%arg0: i32) -> (i32, i32) {
    %c0_i32 = arith.constant 0 : i32
    %c0_i32_0 = arith.constant 0 : i32
    %c0_i32_1 = arith.constant 0 : i32
    return %c0_i32, %c0_i32_0 : i32, i32
  }
  func.func @transform_15(%arg0: i32) -> (i32, i32) {
    %c0_i32 = arith.constant 0 : i32
    %c0_i32_0 = arith.constant 0 : i32
    %c0_i32_1 = arith.constant 0 : i32
    return %c0_i32, %c0_i32_0 : i32, i32
  }
  func.func @transform_16(%arg0: i32) -> (i32, i32, i32) {
    %c0_i32 = arith.constant 0 : i32
    %c0_i32_0 = arith.constant 0 : i32
    %c0_i32_1 = arith.constant 0 : i32
    %c0_i32_2 = arith.constant 0 : i32
    return %c0_i32, %c0_i32_0, %c0_i32_1 : i32, i32, i32
  }
  func.func @transform_17(%arg0: i32) -> (i32, i32) {
    %c0_i32 = arith.constant 0 : i32
    %c0_i32_0 = arith.constant 0 : i32
    %c0_i32_1 = arith.constant 0 : i32
    return %c0_i32, %c0_i32_0 : i32, i32
  }
  func.func @transform_18(%arg0: i32) -> (i32, i32) {
    %c0_i32 = arith.constant 0 : i32
    %c0_i32_0 = arith.constant 0 : i32
    %c0_i32_1 = arith.constant 0 : i32
    return %c0_i32, %c0_i32_0 : i32, i32
  }
  func.func @transform_19(%arg0: i32) -> (i32, i32) {
    %c0_i32 = arith.constant 0 : i32
    %c0_i32_0 = arith.constant 0 : i32
    %c0_i32_1 = arith.constant 0 : i32
    return %c0_i32, %c0_i32_0 : i32, i32
  }
  func.func @transform_20(%arg0: i32) -> (i32, i32, i32) {
    %c0_i32 = arith.constant 0 : i32
    %c0_i32_0 = arith.constant 0 : i32
    %c0_i32_1 = arith.constant 0 : i32
    %c0_i32_2 = arith.constant 0 : i32
    return %c0_i32, %c0_i32_0, %c0_i32_1 : i32, i32, i32
  }
  func.func @transform_21(%arg0: i32) -> (i32, i32) {
    %c0_i32 = arith.constant 0 : i32
    %c0_i32_0 = arith.constant 0 : i32
    %c0_i32_1 = arith.constant 0 : i32
    return %c0_i32, %c0_i32_0 : i32, i32
  }
  func.func @transform_22(%arg0: i32) -> (i32, i32) {
    %c0_i32 = arith.constant 0 : i32
    %c0_i32_0 = arith.constant 0 : i32
    %c0_i32_1 = arith.constant 0 : i32
    return %c0_i32, %c0_i32_0 : i32, i32
  }
  func.func @transform_23(%arg0: i32) -> (i32, i32) {
    %c0_i32 = arith.constant 0 : i32
    %c0_i32_0 = arith.constant 0 : i32
    %c0_i32_1 = arith.constant 0 : i32
    return %c0_i32, %c0_i32_0 : i32, i32
  }
  func.func @transform_24(%arg0: i32) -> (i32, i32, i32) {
    %c0_i32 = arith.constant 0 : i32
    %c0_i32_0 = arith.constant 0 : i32
    %c0_i32_1 = arith.constant 0 : i32
    %c0_i32_2 = arith.constant 0 : i32
    return %c0_i32, %c0_i32_0, %c0_i32_1 : i32, i32, i32
  }
  func.func @transform_25(%arg0: i32) -> (i32, i32) {
    %c0_i32 = arith.constant 0 : i32
    %c0_i32_0 = arith.constant 0 : i32
    %c0_i32_1 = arith.constant 0 : i32
    return %c0_i32, %c0_i32_0 : i32, i32
  }
  func.func @transform_26(%arg0: i32) -> (i32, i32) {
    %c0_i32 = arith.constant 0 : i32
    %c0_i32_0 = arith.constant 0 : i32
    %c0_i32_1 = arith.constant 0 : i32
    return %c0_i32, %c0_i32_0 : i32, i32
  }
  func.func @transform_27(%arg0: i32) -> (i32, i32) {
    %c0_i32 = arith.constant 0 : i32
    %c0_i32_0 = arith.constant 0 : i32
    %c0_i32_1 = arith.constant 0 : i32
    return %c0_i32, %c0_i32_0 : i32, i32
  }
  func.func @transform_28(%arg0: i32) -> (i32, i32, i32) {
    %c0_i32 = arith.constant 0 : i32
    %c0_i32_0 = arith.constant 0 : i32
    %c0_i32_1 = arith.constant 0 : i32
    %c0_i32_2 = arith.constant 0 : i32
    return %c0_i32, %c0_i32_0, %c0_i32_1 : i32, i32, i32
  }
  func.func @transform_29(%arg0: i32) -> (i32, i32) {
    %c0_i32 = arith.constant 0 : i32
    %c0_i32_0 = arith.constant 0 : i32
    %c0_i32_1 = arith.constant 0 : i32
    return %c0_i32, %c0_i32_0 : i32, i32
  }
  func.func @transform_30(%arg0: i32) -> (i32, i32) {
    %c0_i32 = arith.constant 0 : i32
    %c0_i32_0 = arith.constant 0 : i32
    %c0_i32_1 = arith.constant 0 : i32
    return %c0_i32, %c0_i32_0 : i32, i32
  }
  func.func @transform_31(%arg0: i32) -> (i32, i32) {
    %c0_i32 = arith.constant 0 : i32
    %c0_i32_0 = arith.constant 0 : i32
    %c0_i32_1 = arith.constant 0 : i32
    return %c0_i32, %c0_i32_0 : i32, i32
  }
  func.func @transform_32(%arg0: i32) -> (i32, i32, i32) {
    %c0_i32 = arith.constant 0 : i32
    %c0_i32_0 = arith.constant 0 : i32
    %c0_i32_1 = arith.constant 0 : i32
    %c0_i32_2 = arith.constant 0 : i32
    return %c0_i32, %c0_i32_0, %c0_i32_1 : i32, i32, i32
  }
  func.func @transform_33(%arg0: i32) -> (i32, i32) {
    %c0_i32 = arith.constant 0 : i32
    %c0_i32_0 = arith.constant 0 : i32
    %c0_i32_1 = arith.constant 0 : i32
    return %c0_i32, %c0_i32_0 : i32, i32
  }
  func.func @transform_34(%arg0: i32) -> (i32, i32) {
    %c0_i32 = arith.constant 0 : i32
    %c0_i32_0 = arith.constant 0 : i32
    %c0_i32_1 = arith.constant 0 : i32
    return %c0_i32, %c0_i32_0 : i32, i32
  }
  func.func @transform_35(%arg0: i32) -> (i32, i32) {
    %c0_i32 = arith.constant 0 : i32
    %c0_i32_0 = arith.constant 0 : i32
    %c0_i32_1 = arith.constant 0 : i32
    return %c0_i32, %c0_i32_0 : i32, i32
  }
  func.func @transform_36(%arg0: i32) -> (i32, i32, i32) {
    %c0_i32 = arith.constant 0 : i32
    %c0_i32_0 = arith.constant 0 : i32
    %c0_i32_1 = arith.constant 0 : i32
    %c0_i32_2 = arith.constant 0 : i32
    return %c0_i32, %c0_i32_0, %c0_i32_1 : i32, i32, i32
  }
  func.func @transform_37(%arg0: i32) -> (i32, i32) {
    %c0_i32 = arith.constant 0 : i32
    %c0_i32_0 = arith.constant 0 : i32
    %c0_i32_1 = arith.constant 0 : i32
    return %c0_i32, %c0_i32_0 : i32, i32
  }
  func.func @transform_38(%arg0: i32) -> (i32, i32) {
    %c0_i32 = arith.constant 0 : i32
    %c0_i32_0 = arith.constant 0 : i32
    %c0_i32_1 = arith.constant 0 : i32
    return %c0_i32, %c0_i32_0 : i32, i32
  }
  func.func @transform_39(%arg0: i32) -> (i32, i32) {
    %c0_i32 = arith.constant 0 : i32
    %c0_i32_0 = arith.constant 0 : i32
    %c0_i32_1 = arith.constant 0 : i32
    return %c0_i32, %c0_i32_0 : i32, i32
  }
  func.func @transform_40(%arg0: i32) -> (i32, i32, i32) {
    %c0_i32 = arith.constant 0 : i32
    %c0_i32_0 = arith.constant 0 : i32
    %c0_i32_1 = arith.constant 0 : i32
    return %arg0, %c0_i32, %c0_i32_0 : i32, i32, i32
  }
}

</mosaic_0001>

<llo_original>
// kernel: densenet_forward.1
$region0: #{densenet_forward.1}
  #allocation0 [shape = 'u32[]', space=smem, size = 0x4, offset = 0x4, fixed_abs, tag = 'smem constant byte address 0x4 - core index']
  #allocation1 [shape = 'u32[144,128]{1,0:T(1,128)}', space=vmem, size = 0x12000, scoped, tag = 'internal scratch']
  %s0 = inlined_call_operand.smem [shape: u32[41], index: -1, kind: input, shape index: {}]
  %s1 = sld [smem:[%s0]]
  %s2 = scalar_lea.smem %s0, 1
  %s3 = sld [smem:[%s2]]
  %s4 = scalar_lea.smem %s0, 2
  %s5 = sld [smem:[%s4]]
  %s6 = scalar_lea.smem %s0, 3
  %s7 = sld [smem:[%s6]]
  %s8 = scalar_lea.smem %s0, 4
  %s9 = sld [smem:[%s8]]
  %s10 = scalar_lea.smem %s0, 5
  %s11 = sld [smem:[%s10]]
  %s12 = scalar_lea.smem %s0, 6
  %s13 = sld [smem:[%s12]]
  %s14 = scalar_lea.smem %s0, 7
  %s15 = sld [smem:[%s14]]
  %s16 = scalar_lea.smem %s0, 8
  %s17 = sld [smem:[%s16]]
  %s18 = scalar_lea.smem %s0, 9
  %s19 = sld [smem:[%s18]]
  %s20 = scalar_lea.smem %s0, 10
  %s21 = sld [smem:[%s20]]
  %s22 = scalar_lea.smem %s0, 11
  %s23 = sld [smem:[%s22]]
  %s24 = scalar_lea.smem %s0, 12
  %s25 = sld [smem:[%s24]]
  %s26 = scalar_lea.smem %s0, 13
  %s27 = sld [smem:[%s26]]
  %s28 = scalar_lea.smem %s0, 14
  %s29 = sld [smem:[%s28]]
  %s30 = scalar_lea.smem %s0, 15
  %s31 = sld [smem:[%s30]]
  %s32 = scalar_lea.smem %s0, 16
  %s33 = sld [smem:[%s32]]
  %s34 = scalar_lea.smem %s0, 17
  %s35 = sld [smem:[%s34]]
  %s36 = scalar_lea.smem %s0, 18
  %s37 = sld [smem:[%s36]]
  %s38 = scalar_lea.smem %s0, 19
  %s39 = sld [smem:[%s38]]
  %s40 = scalar_lea.smem %s0, 20
  %s41 = sld [smem:[%s40]]
  %s42 = scalar_lea.smem %s0, 21
  %s43 = sld [smem:[%s42]]
  %s44 = scalar_lea.smem %s0, 22
  %s45 = sld [smem:[%s44]]
  %s46 = scalar_lea.smem %s0, 23
  %s47 = sld [smem:[%s46]]
  %s48 = scalar_lea.smem %s0, 24
  %s49 = sld [smem:[%s48]]
  %s50 = scalar_lea.smem %s0, 25
  %s51 = sld [smem:[%s50]]
  %s52 = scalar_lea.smem %s0, 26
  %s53 = sld [smem:[%s52]]
  %s54 = scalar_lea.smem %s0, 27
  %s55 = sld [smem:[%s54]]
  %s56 = scalar_lea.smem %s0, 28
  %s57 = sld [smem:[%s56]]
  %s58 = scalar_lea.smem %s0, 29
  %s59 = sld [smem:[%s58]]
  %s60 = scalar_lea.smem %s0, 30
  %s61 = sld [smem:[%s60]]
  %s62 = scalar_lea.smem %s0, 31
  %s63 = sld [smem:[%s62]]
  %s64 = scalar_lea.smem %s0, 32
  %s65 = sld [smem:[%s64]]
  %s66 = scalar_lea.smem %s0, 33
  %s67 = sld [smem:[%s66]]
  %s68 = scalar_lea.smem %s0, 34
  %s69 = sld [smem:[%s68]]
  %s70 = scalar_lea.smem %s0, 35
  %s71 = sld [smem:[%s70]]
  %s72 = scalar_lea.smem %s0, 36
  %s73 = sld [smem:[%s72]]
  %s74 = scalar_lea.smem %s0, 37
  %s75 = sld [smem:[%s74]]
  %s76 = scalar_lea.smem %s0, 38
  %s77 = sld [smem:[%s76]]
  %s78 = scalar_lea.smem %s0, 39
  %s79 = sld [smem:[%s78]]
  %s80 = scalar_lea.smem %s0, 40
  %s81 = sld [smem:[%s80]]
  %s82 = sld [smem:[#allocation0]]
  $region193: #{densenet_forward.1} parent=0
    _
  %s84 = ssub.s32 1, %s82
  %s85 = scalar_select 0, %s84, %s82
  $region1: #{densenet_forward.1} parent=0
    #allocation2 [shape = 'u8[1024]{0}', space=vmem, size = 0x400, scoped, tag = 'output window, operand 0']
    #allocation3 [shape = 's32[2]{0}', space=sflag, size = 0x8, scoped, tag = 'scoped memory for densenet_forward.1']
    %86 = vsyncpa [#allocation3], 0
    %s87 = scalar_lea.sflag [#allocation3], 1
    %88 = vsyncpa %s87, 0
    loop: start=0, step=1, limit=4
    $region2: #{densenet_forward.1} parent=1 // loop_pre_header
      _
    $region3: #{densenet_forward.1} parent=1 // loop_header
      %s90 = sphi 0, %s94
      %p91 = scmp.ge.s32.totalorder %s90, 4
      %s100 = sphi 0, %s102
      %s103 = sphi 0, %s100
      %s104 = sphi 0, %s103
      %s120 = sphi 0, %s104
      %s124 = sphi 0, %s124
      %s126 = sphi 0, %s124
      %s127 = sphi 0, %s126
      %s141 = sphi 0, %s127
      %s145 = sphi 0, %s145
      %s147 = sphi 0, %s145
      %s148 = sphi 0, %s147
      %s162 = sphi 0, %s148
      %s166 = sphi 0, %s166
      %s168 = sphi 0, %s166
      %s169 = sphi 0, %s168
      %s183 = sphi 0, %s169
      %s187 = sphi 0, %s187
      %s189 = sphi 0, %s187
      %s190 = sphi 0, %s189
      %s204 = sphi 0, %s190
      %s208 = sphi 0, %s208
      %s210 = sphi 0, %s208
      %s211 = sphi 0, %s210
      %s225 = sphi 0, %s211
      %s229 = sphi 0, %s229
      %s231 = sphi 0, %s229
      %s232 = sphi 0, %s231
      %s246 = sphi 0, %s232
      %s250 = sphi 0, %s250
      %s252 = sphi 0, %s250
      %s253 = sphi 0, %s252
      %s267 = sphi 0, %s253
      %s271 = sphi 0, %s271
      %s273 = sphi 0, %s271
      %s274 = sphi 0, %s273
      %s288 = sphi 0, %s274
      %s292 = sphi 0, %s292
      %s294 = sphi 0, %s292
      %s295 = sphi 0, %s294
      %s309 = sphi 0, %s295
      %s313 = sphi 0, %s313
      %s315 = sphi 0, %s313
      %s316 = sphi 0, %s315
      %s330 = sphi 0, %s316
      %s334 = sphi 0, %s334
      %s336 = sphi 0, %s334
      %s337 = sphi 0, %s336
      %s351 = sphi 0, %s337
      %s355 = sphi 0, %s355
      %s357 = sphi 0, %s355
      %s358 = sphi 0, %s357
      %s372 = sphi 0, %s358
      %s376 = sphi 0, %s376
      %s378 = sphi 0, %s376
      %s379 = sphi 0, %s378
      %s393 = sphi 0, %s379
      %s397 = sphi 0, %s397
      %s399 = sphi 0, %s397
      %s400 = sphi 0, %s399
      %s414 = sphi 0, %s400
      %s418 = sphi 0, %s418
      %s420 = sphi 0, %s418
      %s421 = sphi 0, %s420
      %s435 = sphi 0, %s421
      %s439 = sphi 0, %s439
      %s441 = sphi 0, %s439
      %s442 = sphi 0, %s441
      %s456 = sphi 0, %s442
      %s460 = sphi 0, %s460
      %s462 = sphi 0, %s460
      %s463 = sphi 0, %s462
      %s477 = sphi 0, %s463
      %s481 = sphi 0, %s481
      %s483 = sphi 0, %s481
      %s484 = sphi 0, %s483
      %s498 = sphi 0, %s484
      %s502 = sphi 0, %s502
      %s504 = sphi 0, %s502
      %s505 = sphi 0, %s504
      %s519 = sphi 0, %s505
      %s523 = sphi 0, %s523
      %s525 = sphi 0, %s523
      %s526 = sphi 0, %s525
      %s540 = sphi 0, %s526
      %s544 = sphi 0, %s544
      %s546 = sphi 0, %s544
      %s547 = sphi 0, %s546
      %s561 = sphi 0, %s547
      %s565 = sphi 0, %s565
      %s567 = sphi 0, %s565
      %s568 = sphi 0, %s567
      %s582 = sphi 0, %s568
      %s586 = sphi 0, %s586
      %s588 = sphi 0, %s586
      %s589 = sphi 0, %s588
      %s603 = sphi 0, %s589
      %s607 = sphi 0, %s607
      %s609 = sphi 0, %s607
      %s610 = sphi 0, %s609
      %s624 = sphi 0, %s610
      %s628 = sphi 0, %s628
      %s630 = sphi 0, %s628
      %s631 = sphi 0, %s630
      %s645 = sphi 0, %s631
      %s649 = sphi 0, %s649
      %s651 = sphi 0, %s649
      %s652 = sphi 0, %s651
      %s666 = sphi 0, %s652
      %s670 = sphi 0, %s670
      %s672 = sphi 0, %s670
      %s673 = sphi 0, %s672
      %s687 = sphi 0, %s673
      %s691 = sphi 0, %s691
      %s693 = sphi 0, %s691
      %s694 = sphi 0, %s693
      %s708 = sphi 0, %s694
      %s712 = sphi 0, %s712
      %s714 = sphi 0, %s712
      %s715 = sphi 0, %s714
      %s729 = sphi 0, %s715
      %s733 = sphi 0, %s733
      %s735 = sphi 0, %s733
      %s736 = sphi 0, %s735
      %s750 = sphi 0, %s736
      %s754 = sphi 0, %s754
      %s756 = sphi 0, %s754
      %s757 = sphi 0, %s756
      %s771 = sphi 0, %s757
      %s775 = sphi 0, %s775
      %s777 = sphi 0, %s775
      %s778 = sphi 0, %s777
      %s792 = sphi 0, %s778
      %s796 = sphi 0, %s796
      %s798 = sphi 0, %s796
      %s799 = sphi 0, %s798
      %s813 = sphi 0, %s799
      %s817 = sphi 0, %s817
      %s819 = sphi 0, %s817
      %s820 = sphi 0, %s819
      %s834 = sphi 0, %s820
      %s838 = sphi 0, %s838
      %s840 = sphi 0, %s838
      %s841 = sphi 0, %s840
      %s855 = sphi 0, %s841
      %s859 = sphi 0, %s859
      %s861 = sphi 0, %s859
      %s862 = sphi 0, %s861
      %s876 = sphi 0, %s862
      %s880 = sphi 0, %s880
      %s882 = sphi 0, %s880
      %s883 = sphi 0, %s882
      %s897 = sphi 0, %s883
      %s901 = sphi 0, %s901
      %s903 = sphi 0, %s901
      %s904 = sphi 0, %s903
      %s918 = sphi 0, %s904
      %s922 = sphi 0, %s922
      %s924 = sphi 0, %s922
      %s925 = sphi 0, %s924
      %s939 = sphi 0, %s925
      %s945 = sphi 0, %s947
      %s948 = sphi 0, %s945
      %s949 = sphi 0, %s948
      %s965 = sphi 0, %s949
    $region4: #{densenet_forward.1} parent=1 // loop_header_branch
      %93 = sbr.rel (%p91) target = $region8
    $region5: #{densenet_forward.1} parent=1 // loop_body
      %s95 = ssub.s32 %s90, 1
      %s96 = ssub.s32 %s90, 2
      %s97 = sadd.s32 %s90, 1
      %s98 = ssub.s32 %s90, %s97
      %p99 = scmp.eq.s32.totalorder %s98, 0
      %s101 = sadd.s32 %s100, 1
      %s102 = scalar_select %p99, %s100, %s101
      %p105 = pneg %p99
      %p106 = scmp.eq.s32.totalorder %s90, 1
      %p107 = por %p105, %p106
      %p108 = scmp.ne.s32.totalorder %s100, %s103
      %p109 = scmp.eq.s32.totalorder %s90, 0
      %p110 = por %p108, %p109
      %p111 = scmp.ne.s32.totalorder %s100, %s103
      %p112 = scmp.eq.s32.totalorder %s95, 1
      %p113 = por %p111, %p112
      %p114 = scmp.ne.s32.totalorder %s103, %s104
      %p115 = scmp.eq.s32.totalorder %s95, 0
      %p116 = por %p114, %p115
      %p117 = scmp.ne.s32.totalorder %s103, %s104
      %p118 = scmp.eq.s32.totalorder %s96, 1
      %p119 = por %p117, %p118
      %p121 = scmp.ne.s32.totalorder %s104, %s120
      %p122 = scmp.eq.s32.totalorder %s96, 0
      %p123 = por %p121, %p122
      %s125 = sadd.s32 %s124, 1
      %p128 = scmp.eq.s32.totalorder %s90, 1
      %p129 = scmp.ne.s32.totalorder %s124, %s126
      %p130 = scmp.eq.s32.totalorder %s90, 0
      %p131 = por %p129, %p130
      %p132 = scmp.ne.s32.totalorder %s124, %s126
      %p133 = scmp.eq.s32.totalorder %s95, 1
      %p134 = por %p132, %p133
      %p135 = scmp.ne.s32.totalorder %s126, %s127
      %p136 = scmp.eq.s32.totalorder %s95, 0
      %p137 = por %p135, %p136
      %p138 = scmp.ne.s32.totalorder %s126, %s127
      %p139 = scmp.eq.s32.totalorder %s96, 1
      %p140 = por %p138, %p139
      %p142 = scmp.ne.s32.totalorder %s127, %s141
      %p143 = scmp.eq.s32.totalorder %s96, 0
      %p144 = por %p142, %p143
      %s146 = sadd.s32 %s145, 1
      %p149 = scmp.eq.s32.totalorder %s90, 1
      %p150 = scmp.ne.s32.totalorder %s145, %s147
      %p151 = scmp.eq.s32.totalorder %s90, 0
      %p152 = por %p150, %p151
      %p153 = scmp.ne.s32.totalorder %s145, %s147
      %p154 = scmp.eq.s32.totalorder %s95, 1
      %p155 = por %p153, %p154
      %p156 = scmp.ne.s32.totalorder %s147, %s148
      %p157 = scmp.eq.s32.totalorder %s95, 0
      %p158 = por %p156, %p157
      %p159 = scmp.ne.s32.totalorder %s147, %s148
      %p160 = scmp.eq.s32.totalorder %s96, 1
      %p161 = por %p159, %p160
      %p163 = scmp.ne.s32.totalorder %s148, %s162
      %p164 = scmp.eq.s32.totalorder %s96, 0
      %p165 = por %p163, %p164
      %s167 = sadd.s32 %s166, 1
      %p170 = scmp.eq.s32.totalorder %s90, 1
      %p171 = scmp.ne.s32.totalorder %s166, %s168
      %p172 = scmp.eq.s32.totalorder %s90, 0
      %p173 = por %p171, %p172
      %p174 = scmp.ne.s32.totalorder %s166, %s168
      %p175 = scmp.eq.s32.totalorder %s95, 1
      %p176 = por %p174, %p175
      %p177 = scmp.ne.s32.totalorder %s168, %s169
      %p178 = scmp.eq.s32.totalorder %s95, 0
      %p179 = por %p177, %p178
      %p180 = scmp.ne.s32.totalorder %s168, %s169
      %p181 = scmp.eq.s32.totalorder %s96, 1
      %p182 = por %p180, %p181
      %p184 = scmp.ne.s32.totalorder %s169, %s183
      %p185 = scmp.eq.s32.totalorder %s96, 0
      %p186 = por %p184, %p185
      %s188 = sadd.s32 %s187, 1
      %p191 = scmp.eq.s32.totalorder %s90, 1
      %p192 = scmp.ne.s32.totalorder %s187, %s189
      %p193 = scmp.eq.s32.totalorder %s90, 0
      %p194 = por %p192, %p193
      %p195 = scmp.ne.s32.totalorder %s187, %s189
      %p196 = scmp.eq.s32.totalorder %s95, 1
      %p197 = por %p195, %p196
      %p198 = scmp.ne.s32.totalorder %s189, %s190
      %p199 = scmp.eq.s32.totalorder %s95, 0
      %p200 = por %p198, %p199
      %p201 = scmp.ne.s32.totalorder %s189, %s190
      %p202 = scmp.eq.s32.totalorder %s96, 1
      %p203 = por %p201, %p202
      %p205 = scmp.ne.s32.totalorder %s190, %s204
      %p206 = scmp.eq.s32.totalorder %s96, 0
      %p207 = por %p205, %p206
      %s209 = sadd.s32 %s208, 1
      %p212 = scmp.eq.s32.totalorder %s90, 1
      %p213 = scmp.ne.s32.totalorder %s208, %s210
      %p214 = scmp.eq.s32.totalorder %s90, 0
      %p215 = por %p213, %p214
      %p216 = scmp.ne.s32.totalorder %s208, %s210
      %p217 = scmp.eq.s32.totalorder %s95, 1
      %p218 = por %p216, %p217
      %p219 = scmp.ne.s32.totalorder %s210, %s211
      %p220 = scmp.eq.s32.totalorder %s95, 0
      %p221 = por %p219, %p220
      %p222 = scmp.ne.s32.totalorder %s210, %s211
      %p223 = scmp.eq.s32.totalorder %s96, 1
      %p224 = por %p222, %p223
      %p226 = scmp.ne.s32.totalorder %s211, %s225
      %p227 = scmp.eq.s32.totalorder %s96, 0
      %p228 = por %p226, %p227
      %s230 = sadd.s32 %s229, 1
      %p233 = scmp.eq.s32.totalorder %s90, 1
      %p234 = scmp.ne.s32.totalorder %s229, %s231
      %p235 = scmp.eq.s32.totalorder %s90, 0
      %p236 = por %p234, %p235
      %p237 = scmp.ne.s32.totalorder %s229, %s231
      %p238 = scmp.eq.s32.totalorder %s95, 1
      %p239 = por %p237, %p238
      %p240 = scmp.ne.s32.totalorder %s231, %s232
      %p241 = scmp.eq.s32.totalorder %s95, 0
      %p242 = por %p240, %p241
      %p243 = scmp.ne.s32.totalorder %s231, %s232
      %p244 = scmp.eq.s32.totalorder %s96, 1
      %p245 = por %p243, %p244
      %p247 = scmp.ne.s32.totalorder %s232, %s246
      %p248 = scmp.eq.s32.totalorder %s96, 0
      %p249 = por %p247, %p248
      %s251 = sadd.s32 %s250, 1
      %p254 = scmp.eq.s32.totalorder %s90, 1
      %p255 = scmp.ne.s32.totalorder %s250, %s252
      %p256 = scmp.eq.s32.totalorder %s90, 0
      %p257 = por %p255, %p256
      %p258 = scmp.ne.s32.totalorder %s250, %s252
      %p259 = scmp.eq.s32.totalorder %s95, 1
      %p260 = por %p258, %p259
      %p261 = scmp.ne.s32.totalorder %s252, %s253
      %p262 = scmp.eq.s32.totalorder %s95, 0
      %p263 = por %p261, %p262
      %p264 = scmp.ne.s32.totalorder %s252, %s253
      %p265 = scmp.eq.s32.totalorder %s96, 1
      %p266 = por %p264, %p265
      %p268 = scmp.ne.s32.totalorder %s253, %s267
      %p269 = scmp.eq.s32.totalorder %s96, 0
      %p270 = por %p268, %p269
      %s272 = sadd.s32 %s271, 1
      %p275 = scmp.eq.s32.totalorder %s90, 1
      %p276 = scmp.ne.s32.totalorder %s271, %s273
      %p277 = scmp.eq.s32.totalorder %s90, 0
      %p278 = por %p276, %p277
      %p279 = scmp.ne.s32.totalorder %s271, %s273
      %p280 = scmp.eq.s32.totalorder %s95, 1
      %p281 = por %p279, %p280
      %p282 = scmp.ne.s32.totalorder %s273, %s274
      %p283 = scmp.eq.s32.totalorder %s95, 0
      %p284 = por %p282, %p283
      %p285 = scmp.ne.s32.totalorder %s273, %s274
      %p286 = scmp.eq.s32.totalorder %s96, 1
      %p287 = por %p285, %p286
      %p289 = scmp.ne.s32.totalorder %s274, %s288
      %p290 = scmp.eq.s32.totalorder %s96, 0
      %p291 = por %p289, %p290
      %s293 = sadd.s32 %s292, 1
      %p296 = scmp.eq.s32.totalorder %s90, 1
      %p297 = scmp.ne.s32.totalorder %s292, %s294
      %p298 = scmp.eq.s32.totalorder %s90, 0
      %p299 = por %p297, %p298
      %p300 = scmp.ne.s32.totalorder %s292, %s294
      %p301 = scmp.eq.s32.totalorder %s95, 1
      %p302 = por %p300, %p301
      %p303 = scmp.ne.s32.totalorder %s294, %s295
      %p304 = scmp.eq.s32.totalorder %s95, 0
      %p305 = por %p303, %p304
      %p306 = scmp.ne.s32.totalorder %s294, %s295
      %p307 = scmp.eq.s32.totalorder %s96, 1
      %p308 = por %p306, %p307
      %p310 = scmp.ne.s32.totalorder %s295, %s309
      %p311 = scmp.eq.s32.totalorder %s96, 0
      %p312 = por %p310, %p311
      %s314 = sadd.s32 %s313, 1
      %p317 = scmp.eq.s32.totalorder %s90, 1
      %p318 = scmp.ne.s32.totalorder %s313, %s315
      %p319 = scmp.eq.s32.totalorder %s90, 0
      %p320 = por %p318, %p319
      %p321 = scmp.ne.s32.totalorder %s313, %s315
      %p322 = scmp.eq.s32.totalorder %s95, 1
      %p323 = por %p321, %p322
      %p324 = scmp.ne.s32.totalorder %s315, %s316
      %p325 = scmp.eq.s32.totalorder %s95, 0
      %p326 = por %p324, %p325
      %p327 = scmp.ne.s32.totalorder %s315, %s316
      %p328 = scmp.eq.s32.totalorder %s96, 1
      %p329 = por %p327, %p328
      %p331 = scmp.ne.s32.totalorder %s316, %s330
      %p332 = scmp.eq.s32.totalorder %s96, 0
      %p333 = por %p331, %p332
      %s335 = sadd.s32 %s334, 1
      %p338 = scmp.eq.s32.totalorder %s90, 1
      %p339 = scmp.ne.s32.totalorder %s334, %s336
      %p340 = scmp.eq.s32.totalorder %s90, 0
      %p341 = por %p339, %p340
      %p342 = scmp.ne.s32.totalorder %s334, %s336
      %p343 = scmp.eq.s32.totalorder %s95, 1
      %p344 = por %p342, %p343
      %p345 = scmp.ne.s32.totalorder %s336, %s337
      %p346 = scmp.eq.s32.totalorder %s95, 0
      %p347 = por %p345, %p346
      %p348 = scmp.ne.s32.totalorder %s336, %s337
      %p349 = scmp.eq.s32.totalorder %s96, 1
      %p350 = por %p348, %p349
      %p352 = scmp.ne.s32.totalorder %s337, %s351
      %p353 = scmp.eq.s32.totalorder %s96, 0
      %p354 = por %p352, %p353
      %s356 = sadd.s32 %s355, 1
      %p359 = scmp.eq.s32.totalorder %s90, 1
      %p360 = scmp.ne.s32.totalorder %s355, %s357
      %p361 = scmp.eq.s32.totalorder %s90, 0
      %p362 = por %p360, %p361
      %p363 = scmp.ne.s32.totalorder %s355, %s357
      %p364 = scmp.eq.s32.totalorder %s95, 1
      %p365 = por %p363, %p364
      %p366 = scmp.ne.s32.totalorder %s357, %s358
      %p367 = scmp.eq.s32.totalorder %s95, 0
      %p368 = por %p366, %p367
      %p369 = scmp.ne.s32.totalorder %s357, %s358
      %p370 = scmp.eq.s32.totalorder %s96, 1
      %p371 = por %p369, %p370
      %p373 = scmp.ne.s32.totalorder %s358, %s372
      %p374 = scmp.eq.s32.totalorder %s96, 0
      %p375 = por %p373, %p374
      %s377 = sadd.s32 %s376, 1
      %p380 = scmp.eq.s32.totalorder %s90, 1
      %p381 = scmp.ne.s32.totalorder %s376, %s378
      %p382 = scmp.eq.s32.totalorder %s90, 0
      %p383 = por %p381, %p382
      %p384 = scmp.ne.s32.totalorder %s376, %s378
      %p385 = scmp.eq.s32.totalorder %s95, 1
      %p386 = por %p384, %p385
      %p387 = scmp.ne.s32.totalorder %s378, %s379
      %p388 = scmp.eq.s32.totalorder %s95, 0
      %p389 = por %p387, %p388
      %p390 = scmp.ne.s32.totalorder %s378, %s379
      %p391 = scmp.eq.s32.totalorder %s96, 1
      %p392 = por %p390, %p391
      %p394 = scmp.ne.s32.totalorder %s379, %s393
      %p395 = scmp.eq.s32.totalorder %s96, 0
      %p396 = por %p394, %p395
      %s398 = sadd.s32 %s397, 1
      %p401 = scmp.eq.s32.totalorder %s90, 1
      %p402 = scmp.ne.s32.totalorder %s397, %s399
      %p403 = scmp.eq.s32.totalorder %s90, 0
      %p404 = por %p402, %p403
      %p405 = scmp.ne.s32.totalorder %s397, %s399
      %p406 = scmp.eq.s32.totalorder %s95, 1
      %p407 = por %p405, %p406
      %p408 = scmp.ne.s32.totalorder %s399, %s400
      %p409 = scmp.eq.s32.totalorder %s95, 0
      %p410 = por %p408, %p409
      %p411 = scmp.ne.s32.totalorder %s399, %s400
      %p412 = scmp.eq.s32.totalorder %s96, 1
      %p413 = por %p411, %p412
      %p415 = scmp.ne.s32.totalorder %s400, %s414
      %p416 = scmp.eq.s32.totalorder %s96, 0
      %p417 = por %p415, %p416
      %s419 = sadd.s32 %s418, 1
      %p422 = scmp.eq.s32.totalorder %s90, 1
      %p423 = scmp.ne.s32.totalorder %s418, %s420
      %p424 = scmp.eq.s32.totalorder %s90, 0
      %p425 = por %p423, %p424
      %p426 = scmp.ne.s32.totalorder %s418, %s420
      %p427 = scmp.eq.s32.totalorder %s95, 1
      %p428 = por %p426, %p427
      %p429 = scmp.ne.s32.totalorder %s420, %s421
      %p430 = scmp.eq.s32.totalorder %s95, 0
      %p431 = por %p429, %p430
      %p432 = scmp.ne.s32.totalorder %s420, %s421
      %p433 = scmp.eq.s32.totalorder %s96, 1
      %p434 = por %p432, %p433
      %p436 = scmp.ne.s32.totalorder %s421, %s435
      %p437 = scmp.eq.s32.totalorder %s96, 0
      %p438 = por %p436, %p437
      %s440 = sadd.s32 %s439, 1
      %p443 = scmp.eq.s32.totalorder %s90, 1
      %p444 = scmp.ne.s32.totalorder %s439, %s441
      %p445 = scmp.eq.s32.totalorder %s90, 0
      %p446 = por %p444, %p445
      %p447 = scmp.ne.s32.totalorder %s439, %s441
      %p448 = scmp.eq.s32.totalorder %s95, 1
      %p449 = por %p447, %p448
      %p450 = scmp.ne.s32.totalorder %s441, %s442
      %p451 = scmp.eq.s32.totalorder %s95, 0
      %p452 = por %p450, %p451
      %p453 = scmp.ne.s32.totalorder %s441, %s442
      %p454 = scmp.eq.s32.totalorder %s96, 1
      %p455 = por %p453, %p454
      %p457 = scmp.ne.s32.totalorder %s442, %s456
      %p458 = scmp.eq.s32.totalorder %s96, 0
      %p459 = por %p457, %p458
      %s461 = sadd.s32 %s460, 1
      %p464 = scmp.eq.s32.totalorder %s90, 1
      %p465 = scmp.ne.s32.totalorder %s460, %s462
      %p466 = scmp.eq.s32.totalorder %s90, 0
      %p467 = por %p465, %p466
      %p468 = scmp.ne.s32.totalorder %s460, %s462
      %p469 = scmp.eq.s32.totalorder %s95, 1
      %p470 = por %p468, %p469
      %p471 = scmp.ne.s32.totalorder %s462, %s463
      %p472 = scmp.eq.s32.totalorder %s95, 0
      %p473 = por %p471, %p472
      %p474 = scmp.ne.s32.totalorder %s462, %s463
      %p475 = scmp.eq.s32.totalorder %s96, 1
      %p476 = por %p474, %p475
      %p478 = scmp.ne.s32.totalorder %s463, %s477
      %p479 = scmp.eq.s32.totalorder %s96, 0
      %p480 = por %p478, %p479
      %s482 = sadd.s32 %s481, 1
      %p485 = scmp.eq.s32.totalorder %s90, 1
      %p486 = scmp.ne.s32.totalorder %s481, %s483
      %p487 = scmp.eq.s32.totalorder %s90, 0
      %p488 = por %p486, %p487
      %p489 = scmp.ne.s32.totalorder %s481, %s483
      %p490 = scmp.eq.s32.totalorder %s95, 1
      %p491 = por %p489, %p490
      %p492 = scmp.ne.s32.totalorder %s483, %s484
      %p493 = scmp.eq.s32.totalorder %s95, 0
      %p494 = por %p492, %p493
      %p495 = scmp.ne.s32.totalorder %s483, %s484
      %p496 = scmp.eq.s32.totalorder %s96, 1
      %p497 = por %p495, %p496
      %p499 = scmp.ne.s32.totalorder %s484, %s498
      %p500 = scmp.eq.s32.totalorder %s96, 0
      %p501 = por %p499, %p500
      %s503 = sadd.s32 %s502, 1
      %p506 = scmp.eq.s32.totalorder %s90, 1
      %p507 = scmp.ne.s32.totalorder %s502, %s504
      %p508 = scmp.eq.s32.totalorder %s90, 0
      %p509 = por %p507, %p508
      %p510 = scmp.ne.s32.totalorder %s502, %s504
      %p511 = scmp.eq.s32.totalorder %s95, 1
      %p512 = por %p510, %p511
      %p513 = scmp.ne.s32.totalorder %s504, %s505
      %p514 = scmp.eq.s32.totalorder %s95, 0
      %p515 = por %p513, %p514
      %p516 = scmp.ne.s32.totalorder %s504, %s505
      %p517 = scmp.eq.s32.totalorder %s96, 1
      %p518 = por %p516, %p517
      %p520 = scmp.ne.s32.totalorder %s505, %s519
      %p521 = scmp.eq.s32.totalorder %s96, 0
      %p522 = por %p520, %p521
      %s524 = sadd.s32 %s523, 1
      %p527 = scmp.eq.s32.totalorder %s90, 1
      %p528 = scmp.ne.s32.totalorder %s523, %s525
      %p529 = scmp.eq.s32.totalorder %s90, 0
      %p530 = por %p528, %p529
      %p531 = scmp.ne.s32.totalorder %s523, %s525
      %p532 = scmp.eq.s32.totalorder %s95, 1
      %p533 = por %p531, %p532
      %p534 = scmp.ne.s32.totalorder %s525, %s526
      %p535 = scmp.eq.s32.totalorder %s95, 0
      %p536 = por %p534, %p535
      %p537 = scmp.ne.s32.totalorder %s525, %s526
      %p538 = scmp.eq.s32.totalorder %s96, 1
      %p539 = por %p537, %p538
      %p541 = scmp.ne.s32.totalorder %s526, %s540
      %p542 = scmp.eq.s32.totalorder %s96, 0
      %p543 = por %p541, %p542
      %s545 = sadd.s32 %s544, 1
      %p548 = scmp.eq.s32.totalorder %s90, 1
      %p549 = scmp.ne.s32.totalorder %s544, %s546
      %p550 = scmp.eq.s32.totalorder %s90, 0
      %p551 = por %p549, %p550
      %p552 = scmp.ne.s32.totalorder %s544, %s546
      %p553 = scmp.eq.s32.totalorder %s95, 1
      %p554 = por %p552, %p553
      %p555 = scmp.ne.s32.totalorder %s546, %s547
      %p556 = scmp.eq.s32.totalorder %s95, 0
      %p557 = por %p555, %p556
      %p558 = scmp.ne.s32.totalorder %s546, %s547
      %p559 = scmp.eq.s32.totalorder %s96, 1
      %p560 = por %p558, %p559
      %p562 = scmp.ne.s32.totalorder %s547, %s561
      %p563 = scmp.eq.s32.totalorder %s96, 0
      %p564 = por %p562, %p563
      %s566 = sadd.s32 %s565, 1
      %p569 = scmp.eq.s32.totalorder %s90, 1
      %p570 = scmp.ne.s32.totalorder %s565, %s567
      %p571 = scmp.eq.s32.totalorder %s90, 0
      %p572 = por %p570, %p571
      %p573 = scmp.ne.s32.totalorder %s565, %s567
      %p574 = scmp.eq.s32.totalorder %s95, 1
      %p575 = por %p573, %p574
      %p576 = scmp.ne.s32.totalorder %s567, %s568
      %p577 = scmp.eq.s32.totalorder %s95, 0
      %p578 = por %p576, %p577
      %p579 = scmp.ne.s32.totalorder %s567, %s568
      %p580 = scmp.eq.s32.totalorder %s96, 1
      %p581 = por %p579, %p580
      %p583 = scmp.ne.s32.totalorder %s568, %s582
      %p584 = scmp.eq.s32.totalorder %s96, 0
      %p585 = por %p583, %p584
      %s587 = sadd.s32 %s586, 1
      %p590 = scmp.eq.s32.totalorder %s90, 1
      %p591 = scmp.ne.s32.totalorder %s586, %s588
      %p592 = scmp.eq.s32.totalorder %s90, 0
      %p593 = por %p591, %p592
      %p594 = scmp.ne.s32.totalorder %s586, %s588
      %p595 = scmp.eq.s32.totalorder %s95, 1
      %p596 = por %p594, %p595
      %p597 = scmp.ne.s32.totalorder %s588, %s589
      %p598 = scmp.eq.s32.totalorder %s95, 0
      %p599 = por %p597, %p598
      %p600 = scmp.ne.s32.totalorder %s588, %s589
      %p601 = scmp.eq.s32.totalorder %s96, 1
      %p602 = por %p600, %p601
      %p604 = scmp.ne.s32.totalorder %s589, %s603
      %p605 = scmp.eq.s32.totalorder %s96, 0
      %p606 = por %p604, %p605
      %s608 = sadd.s32 %s607, 1
      %p611 = scmp.eq.s32.totalorder %s90, 1
      %p612 = scmp.ne.s32.totalorder %s607, %s609
      %p613 = scmp.eq.s32.totalorder %s90, 0
      %p614 = por %p612, %p613
      %p615 = scmp.ne.s32.totalorder %s607, %s609
      %p616 = scmp.eq.s32.totalorder %s95, 1
      %p617 = por %p615, %p616
      %p618 = scmp.ne.s32.totalorder %s609, %s610
      %p619 = scmp.eq.s32.totalorder %s95, 0
      %p620 = por %p618, %p619
      %p621 = scmp.ne.s32.totalorder %s609, %s610
      %p622 = scmp.eq.s32.totalorder %s96, 1
      %p623 = por %p621, %p622
      %p625 = scmp.ne.s32.totalorder %s610, %s624
      %p626 = scmp.eq.s32.totalorder %s96, 0
      %p627 = por %p625, %p626
      %s629 = sadd.s32 %s628, 1
      %p632 = scmp.eq.s32.totalorder %s90, 1
      %p633 = scmp.ne.s32.totalorder %s628, %s630
      %p634 = scmp.eq.s32.totalorder %s90, 0
      %p635 = por %p633, %p634
      %p636 = scmp.ne.s32.totalorder %s628, %s630
      %p637 = scmp.eq.s32.totalorder %s95, 1
      %p638 = por %p636, %p637
      %p639 = scmp.ne.s32.totalorder %s630, %s631
      %p640 = scmp.eq.s32.totalorder %s95, 0
      %p641 = por %p639, %p640
      %p642 = scmp.ne.s32.totalorder %s630, %s631
      %p643 = scmp.eq.s32.totalorder %s96, 1
      %p644 = por %p642, %p643
      %p646 = scmp.ne.s32.totalorder %s631, %s645
      %p647 = scmp.eq.s32.totalorder %s96, 0
      %p648 = por %p646, %p647
      %s650 = sadd.s32 %s649, 1
      %p653 = scmp.eq.s32.totalorder %s90, 1
      %p654 = scmp.ne.s32.totalorder %s649, %s651
      %p655 = scmp.eq.s32.totalorder %s90, 0
      %p656 = por %p654, %p655
      %p657 = scmp.ne.s32.totalorder %s649, %s651
      %p658 = scmp.eq.s32.totalorder %s95, 1
      %p659 = por %p657, %p658
      %p660 = scmp.ne.s32.totalorder %s651, %s652
      %p661 = scmp.eq.s32.totalorder %s95, 0
      %p662 = por %p660, %p661
      %p663 = scmp.ne.s32.totalorder %s651, %s652
      %p664 = scmp.eq.s32.totalorder %s96, 1
      %p665 = por %p663, %p664
      %p667 = scmp.ne.s32.totalorder %s652, %s666
      %p668 = scmp.eq.s32.totalorder %s96, 0
      %p669 = por %p667, %p668
      %s671 = sadd.s32 %s670, 1
      %p674 = scmp.eq.s32.totalorder %s90, 1
      %p675 = scmp.ne.s32.totalorder %s670, %s672
      %p676 = scmp.eq.s32.totalorder %s90, 0
      %p677 = por %p675, %p676
      %p678 = scmp.ne.s32.totalorder %s670, %s672
      %p679 = scmp.eq.s32.totalorder %s95, 1
      %p680 = por %p678, %p679
      %p681 = scmp.ne.s32.totalorder %s672, %s673
      %p682 = scmp.eq.s32.totalorder %s95, 0
      %p683 = por %p681, %p682
      %p684 = scmp.ne.s32.totalorder %s672, %s673
      %p685 = scmp.eq.s32.totalorder %s96, 1
      %p686 = por %p684, %p685
      %p688 = scmp.ne.s32.totalorder %s673, %s687
      %p689 = scmp.eq.s32.totalorder %s96, 0
      %p690 = por %p688, %p689
      %s692 = sadd.s32 %s691, 1
      %p695 = scmp.eq.s32.totalorder %s90, 1
      %p696 = scmp.ne.s32.totalorder %s691, %s693
      %p697 = scmp.eq.s32.totalorder %s90, 0
      %p698 = por %p696, %p697
      %p699 = scmp.ne.s32.totalorder %s691, %s693
      %p700 = scmp.eq.s32.totalorder %s95, 1
      %p701 = por %p699, %p700
      %p702 = scmp.ne.s32.totalorder %s693, %s694
      %p703 = scmp.eq.s32.totalorder %s95, 0
      %p704 = por %p702, %p703
      %p705 = scmp.ne.s32.totalorder %s693, %s694
      %p706 = scmp.eq.s32.totalorder %s96, 1
      %p707 = por %p705, %p706
      %p709 = scmp.ne.s32.totalorder %s694, %s708
      %p710 = scmp.eq.s32.totalorder %s96, 0
      %p711 = por %p709, %p710
      %s713 = sadd.s32 %s712, 1
      %p716 = scmp.eq.s32.totalorder %s90, 1
      %p717 = scmp.ne.s32.totalorder %s712, %s714
      %p718 = scmp.eq.s32.totalorder %s90, 0
      %p719 = por %p717, %p718
      %p720 = scmp.ne.s32.totalorder %s712, %s714
      %p721 = scmp.eq.s32.totalorder %s95, 1
      %p722 = por %p720, %p721
      %p723 = scmp.ne.s32.totalorder %s714, %s715
      %p724 = scmp.eq.s32.totalorder %s95, 0
      %p725 = por %p723, %p724
      %p726 = scmp.ne.s32.totalorder %s714, %s715
      %p727 = scmp.eq.s32.totalorder %s96, 1
      %p728 = por %p726, %p727
      %p730 = scmp.ne.s32.totalorder %s715, %s729
      %p731 = scmp.eq.s32.totalorder %s96, 0
      %p732 = por %p730, %p731
      %s734 = sadd.s32 %s733, 1
      %p737 = scmp.eq.s32.totalorder %s90, 1
      %p738 = scmp.ne.s32.totalorder %s733, %s735
      %p739 = scmp.eq.s32.totalorder %s90, 0
      %p740 = por %p738, %p739
      %p741 = scmp.ne.s32.totalorder %s733, %s735
      %p742 = scmp.eq.s32.totalorder %s95, 1
      %p743 = por %p741, %p742
      %p744 = scmp.ne.s32.totalorder %s735, %s736
      %p745 = scmp.eq.s32.totalorder %s95, 0
      %p746 = por %p744, %p745
      %p747 = scmp.ne.s32.totalorder %s735, %s736
      %p748 = scmp.eq.s32.totalorder %s96, 1
      %p749 = por %p747, %p748
      %p751 = scmp.ne.s32.totalorder %s736, %s750
      %p752 = scmp.eq.s32.totalorder %s96, 0
      %p753 = por %p751, %p752
      %s755 = sadd.s32 %s754, 1
      %p758 = scmp.eq.s32.totalorder %s90, 1
      %p759 = scmp.ne.s32.totalorder %s754, %s756
      %p760 = scmp.eq.s32.totalorder %s90, 0
      %p761 = por %p759, %p760
      %p762 = scmp.ne.s32.totalorder %s754, %s756
      %p763 = scmp.eq.s32.totalorder %s95, 1
      %p764 = por %p762, %p763
      %p765 = scmp.ne.s32.totalorder %s756, %s757
      %p766 = scmp.eq.s32.totalorder %s95, 0
      %p767 = por %p765, %p766
      %p768 = scmp.ne.s32.totalorder %s756, %s757
      %p769 = scmp.eq.s32.totalorder %s96, 1
      %p770 = por %p768, %p769
      %p772 = scmp.ne.s32.totalorder %s757, %s771
      %p773 = scmp.eq.s32.totalorder %s96, 0
      %p774 = por %p772, %p773
      %s776 = sadd.s32 %s775, 1
      %p779 = scmp.eq.s32.totalorder %s90, 1
      %p780 = scmp.ne.s32.totalorder %s775, %s777
      %p781 = scmp.eq.s32.totalorder %s90, 0
      %p782 = por %p780, %p781
      %p783 = scmp.ne.s32.totalorder %s775, %s777
      %p784 = scmp.eq.s32.totalorder %s95, 1
      %p785 = por %p783, %p784
      %p786 = scmp.ne.s32.totalorder %s777, %s778
      %p787 = scmp.eq.s32.totalorder %s95, 0
      %p788 = por %p786, %p787
      %p789 = scmp.ne.s32.totalorder %s777, %s778
      %p790 = scmp.eq.s32.totalorder %s96, 1
      %p791 = por %p789, %p790
      %p793 = scmp.ne.s32.totalorder %s778, %s792
      %p794 = scmp.eq.s32.totalorder %s96, 0
      %p795 = por %p793, %p794
      %s797 = sadd.s32 %s796, 1
      %p800 = scmp.eq.s32.totalorder %s90, 1
      %p801 = scmp.ne.s32.totalorder %s796, %s798
      %p802 = scmp.eq.s32.totalorder %s90, 0
      %p803 = por %p801, %p802
      %p804 = scmp.ne.s32.totalorder %s796, %s798
      %p805 = scmp.eq.s32.totalorder %s95, 1
      %p806 = por %p804, %p805
      %p807 = scmp.ne.s32.totalorder %s798, %s799
      %p808 = scmp.eq.s32.totalorder %s95, 0
      %p809 = por %p807, %p808
      %p810 = scmp.ne.s32.totalorder %s798, %s799
      %p811 = scmp.eq.s32.totalorder %s96, 1
      %p812 = por %p810, %p811
      %p814 = scmp.ne.s32.totalorder %s799, %s813
      %p815 = scmp.eq.s32.totalorder %s96, 0
      %p816 = por %p814, %p815
      %s818 = sadd.s32 %s817, 1
      %p821 = scmp.eq.s32.totalorder %s90, 1
      %p822 = scmp.ne.s32.totalorder %s817, %s819
      %p823 = scmp.eq.s32.totalorder %s90, 0
      %p824 = por %p822, %p823
      %p825 = scmp.ne.s32.totalorder %s817, %s819
      %p826 = scmp.eq.s32.totalorder %s95, 1
      %p827 = por %p825, %p826
      %p828 = scmp.ne.s32.totalorder %s819, %s820
      %p829 = scmp.eq.s32.totalorder %s95, 0
      %p830 = por %p828, %p829
      %p831 = scmp.ne.s32.totalorder %s819, %s820
      %p832 = scmp.eq.s32.totalorder %s96, 1
      %p833 = por %p831, %p832
      %p835 = scmp.ne.s32.totalorder %s820, %s834
      %p836 = scmp.eq.s32.totalorder %s96, 0
      %p837 = por %p835, %p836
      %s839 = sadd.s32 %s838, 1
      %p842 = scmp.eq.s32.totalorder %s90, 1
      %p843 = scmp.ne.s32.totalorder %s838, %s840
      %p844 = scmp.eq.s32.totalorder %s90, 0
      %p845 = por %p843, %p844
      %p846 = scmp.ne.s32.totalorder %s838, %s840
      %p847 = scmp.eq.s32.totalorder %s95, 1
      %p848 = por %p846, %p847
      %p849 = scmp.ne.s32.totalorder %s840, %s841
      %p850 = scmp.eq.s32.totalorder %s95, 0
      %p851 = por %p849, %p850
      %p852 = scmp.ne.s32.totalorder %s840, %s841
      %p853 = scmp.eq.s32.totalorder %s96, 1
      %p854 = por %p852, %p853
      %p856 = scmp.ne.s32.totalorder %s841, %s855
      %p857 = scmp.eq.s32.totalorder %s96, 0
      %p858 = por %p856, %p857
      %s860 = sadd.s32 %s859, 1
      %p863 = scmp.eq.s32.totalorder %s90, 1
      %p864 = scmp.ne.s32.totalorder %s859, %s861
      %p865 = scmp.eq.s32.totalorder %s90, 0
      %p866 = por %p864, %p865
      %p867 = scmp.ne.s32.totalorder %s859, %s861
      %p868 = scmp.eq.s32.totalorder %s95, 1
      %p869 = por %p867, %p868
      %p870 = scmp.ne.s32.totalorder %s861, %s862
      %p871 = scmp.eq.s32.totalorder %s95, 0
      %p872 = por %p870, %p871
      %p873 = scmp.ne.s32.totalorder %s861, %s862
      %p874 = scmp.eq.s32.totalorder %s96, 1
      %p875 = por %p873, %p874
      %p877 = scmp.ne.s32.totalorder %s862, %s876
      %p878 = scmp.eq.s32.totalorder %s96, 0
      %p879 = por %p877, %p878
      %s881 = sadd.s32 %s880, 1
      %p884 = scmp.eq.s32.totalorder %s90, 1
      %p885 = scmp.ne.s32.totalorder %s880, %s882
      %p886 = scmp.eq.s32.totalorder %s90, 0
      %p887 = por %p885, %p886
      %p888 = scmp.ne.s32.totalorder %s880, %s882
      %p889 = scmp.eq.s32.totalorder %s95, 1
      %p890 = por %p888, %p889
      %p891 = scmp.ne.s32.totalorder %s882, %s883
      %p892 = scmp.eq.s32.totalorder %s95, 0
      %p893 = por %p891, %p892
      %p894 = scmp.ne.s32.totalorder %s882, %s883
      %p895 = scmp.eq.s32.totalorder %s96, 1
      %p896 = por %p894, %p895
      %p898 = scmp.ne.s32.totalorder %s883, %s897
      %p899 = scmp.eq.s32.totalorder %s96, 0
      %p900 = por %p898, %p899
      %s902 = sadd.s32 %s901, 1
      %p905 = scmp.eq.s32.totalorder %s90, 1
      %p906 = scmp.ne.s32.totalorder %s901, %s903
      %p907 = scmp.eq.s32.totalorder %s90, 0
      %p908 = por %p906, %p907
      %p909 = scmp.ne.s32.totalorder %s901, %s903
      %p910 = scmp.eq.s32.totalorder %s95, 1
      %p911 = por %p909, %p910
      %p912 = scmp.ne.s32.totalorder %s903, %s904
      %p913 = scmp.eq.s32.totalorder %s95, 0
      %p914 = por %p912, %p913
      %p915 = scmp.ne.s32.totalorder %s903, %s904
      %p916 = scmp.eq.s32.totalorder %s96, 1
      %p917 = por %p915, %p916
      %p919 = scmp.ne.s32.totalorder %s904, %s918
      %p920 = scmp.eq.s32.totalorder %s96, 0
      %p921 = por %p919, %p920
      %s923 = sadd.s32 %s922, 1
      %p926 = scmp.eq.s32.totalorder %s90, 1
      %p927 = scmp.ne.s32.totalorder %s922, %s924
      %p928 = scmp.eq.s32.totalorder %s90, 0
      %p929 = por %p927, %p928
      %p930 = scmp.ne.s32.totalorder %s922, %s924
      %p931 = scmp.eq.s32.totalorder %s95, 1
      %p932 = por %p930, %p931
      %p933 = scmp.ne.s32.totalorder %s924, %s925
      %p934 = scmp.eq.s32.totalorder %s95, 0
      %p935 = por %p933, %p934
      %p936 = scmp.ne.s32.totalorder %s924, %s925
      %p937 = scmp.eq.s32.totalorder %s96, 1
      %p938 = por %p936, %p937
      %p940 = scmp.ne.s32.totalorder %s925, %s939
      %p941 = scmp.eq.s32.totalorder %s96, 0
      %p942 = por %p940, %p941
      %s943 = ssub.s32 %s90, %s97
      %p944 = scmp.eq.s32.totalorder %s943, 0
      %s946 = sadd.s32 %s945, 1
      %s947 = scalar_select %p944, %s945, %s946
      %p950 = pneg %p944
      %p951 = scmp.eq.s32.totalorder %s90, 1
      %p952 = por %p950, %p951
      %p953 = scmp.ne.s32.totalorder %s945, %s948
      %p954 = scmp.eq.s32.totalorder %s90, 0
      %p955 = por %p953, %p954
      %p956 = scmp.ne.s32.totalorder %s945, %s948
      %p957 = scmp.eq.s32.totalorder %s95, 1
      %p958 = por %p956, %p957
      %p959 = scmp.ne.s32.totalorder %s948, %s949
      %p960 = scmp.eq.s32.totalorder %s95, 0
      %p961 = por %p959, %p960
      %p962 = scmp.ne.s32.totalorder %s948, %s949
      %p963 = scmp.eq.s32.totalorder %s96, 1
      %p964 = por %p962, %p963
      %p966 = scmp.ne.s32.totalorder %s949, %s965
      %p967 = scmp.eq.s32.totalorder %s96, 0
      %p968 = por %p966, %p967
      %p969 = scmp.le.s32.totalorder 1, %s90
      %p970 = scmp.lt.s32.totalorder %s90, 3
      %p971 = pnand %p969, %p970
      %p972 = pneg %p971
      // Predicated region
      $region9: #{densenet_forward.1} parent=5 // pred_check
        _
      $region10: #{densenet_forward.1} parent=5 // pred_check_branch
        %974 = sbr.rel (%p971) target = $region12
      $region11: #{densenet_forward.1} parent=5 // pred_region
        %s975 = ssub.s32 %s90, 1
        // Predicated region
        $region13: #{densenet_forward.1} parent=11 // pred_check
          %p976 = pneg %p137
        $region14: #{densenet_forward.1} parent=11 // pred_check_branch
          %978 = sbr.rel (%p976) target = $region16
        $region15: #{densenet_forward.1} parent=11 // pred_region
          _
        $region16: #{densenet_forward.1} parent=11 // pred_fallthru
          _
        // Predicated region
        $region17: #{densenet_forward.1} parent=11 // pred_check
          %p979 = pneg %p158
        $region18: #{densenet_forward.1} parent=11 // pred_check_branch
          %981 = sbr.rel (%p979) target = $region20
        $region19: #{densenet_forward.1} parent=11 // pred_region
          _
        $region20: #{densenet_forward.1} parent=11 // pred_fallthru
          _
        // Predicated region
        $region21: #{densenet_forward.1} parent=11 // pred_check
          %p982 = pneg %p179
        $region22: #{densenet_forward.1} parent=11 // pred_check_branch
          %984 = sbr.rel (%p982) target = $region24
        $region23: #{densenet_forward.1} parent=11 // pred_region
          _
        $region24: #{densenet_forward.1} parent=11 // pred_fallthru
          _
        // Predicated region
        $region25: #{densenet_forward.1} parent=11 // pred_check
          %p985 = pneg %p200
        $region26: #{densenet_forward.1} parent=11 // pred_check_branch
          %987 = sbr.rel (%p985) target = $region28
        $region27: #{densenet_forward.1} parent=11 // pred_region
          _
        $region28: #{densenet_forward.1} parent=11 // pred_fallthru
          _
        // Predicated region
        $region29: #{densenet_forward.1} parent=11 // pred_check
          %p988 = pneg %p221
        $region30: #{densenet_forward.1} parent=11 // pred_check_branch
          %990 = sbr.rel (%p988) target = $region32
        $region31: #{densenet_forward.1} parent=11 // pred_region
          _
        $region32: #{densenet_forward.1} parent=11 // pred_fallthru
          _
        // Predicated region
        $region33: #{densenet_forward.1} parent=11 // pred_check
          %p991 = pneg %p242
        $region34: #{densenet_forward.1} parent=11 // pred_check_branch
          %993 = sbr.rel (%p991) target = $region36
        $region35: #{densenet_forward.1} parent=11 // pred_region
          _
        $region36: #{densenet_forward.1} parent=11 // pred_fallthru
          _
        // Predicated region
        $region37: #{densenet_forward.1} parent=11 // pred_check
          %p994 = pneg %p263
        $region38: #{densenet_forward.1} parent=11 // pred_check_branch
          %996 = sbr.rel (%p994) target = $region40
        $region39: #{densenet_forward.1} parent=11 // pred_region
          _
        $region40: #{densenet_forward.1} parent=11 // pred_fallthru
          _
        // Predicated region
        $region41: #{densenet_forward.1} parent=11 // pred_check
          %p997 = pneg %p284
        $region42: #{densenet_forward.1} parent=11 // pred_check_branch
          %999 = sbr.rel (%p997) target = $region44
        $region43: #{densenet_forward.1} parent=11 // pred_region
          _
        $region44: #{densenet_forward.1} parent=11 // pred_fallthru
          _
        // Predicated region
        $region45: #{densenet_forward.1} parent=11 // pred_check
          %p1000 = pneg %p305
        $region46: #{densenet_forward.1} parent=11 // pred_check_branch
          %1002 = sbr.rel (%p1000) target = $region48
        $region47: #{densenet_forward.1} parent=11 // pred_region
          _
        $region48: #{densenet_forward.1} parent=11 // pred_fallthru
          _
        // Predicated region
        $region49: #{densenet_forward.1} parent=11 // pred_check
          %p1003 = pneg %p326
        $region50: #{densenet_forward.1} parent=11 // pred_check_branch
          %1005 = sbr.rel (%p1003) target = $region52
        $region51: #{densenet_forward.1} parent=11 // pred_region
          _
        $region52: #{densenet_forward.1} parent=11 // pred_fallthru
          _
        // Predicated region
        $region53: #{densenet_forward.1} parent=11 // pred_check
          %p1006 = pneg %p347
        $region54: #{densenet_forward.1} parent=11 // pred_check_branch
          %1008 = sbr.rel (%p1006) target = $region56
        $region55: #{densenet_forward.1} parent=11 // pred_region
          _
        $region56: #{densenet_forward.1} parent=11 // pred_fallthru
          _
        // Predicated region
        $region57: #{densenet_forward.1} parent=11 // pred_check
          %p1009 = pneg %p368
        $region58: #{densenet_forward.1} parent=11 // pred_check_branch
          %1011 = sbr.rel (%p1009) target = $region60
        $region59: #{densenet_forward.1} parent=11 // pred_region
          _
        $region60: #{densenet_forward.1} parent=11 // pred_fallthru
          _
        // Predicated region
        $region61: #{densenet_forward.1} parent=11 // pred_check
          %p1012 = pneg %p389
        $region62: #{densenet_forward.1} parent=11 // pred_check_branch
          %1014 = sbr.rel (%p1012) target = $region64
        $region63: #{densenet_forward.1} parent=11 // pred_region
          _
        $region64: #{densenet_forward.1} parent=11 // pred_fallthru
          _
        // Predicated region
        $region65: #{densenet_forward.1} parent=11 // pred_check
          %p1015 = pneg %p410
        $region66: #{densenet_forward.1} parent=11 // pred_check_branch
          %1017 = sbr.rel (%p1015) target = $region68
        $region67: #{densenet_forward.1} parent=11 // pred_region
          _
        $region68: #{densenet_forward.1} parent=11 // pred_fallthru
          _
        // Predicated region
        $region69: #{densenet_forward.1} parent=11 // pred_check
          %p1018 = pneg %p431
        $region70: #{densenet_forward.1} parent=11 // pred_check_branch
          %1020 = sbr.rel (%p1018) target = $region72
        $region71: #{densenet_forward.1} parent=11 // pred_region
          _
        $region72: #{densenet_forward.1} parent=11 // pred_fallthru
          _
        // Predicated region
        $region73: #{densenet_forward.1} parent=11 // pred_check
          %p1021 = pneg %p452
        $region74: #{densenet_forward.1} parent=11 // pred_check_branch
          %1023 = sbr.rel (%p1021) target = $region76
        $region75: #{densenet_forward.1} parent=11 // pred_region
          _
        $region76: #{densenet_forward.1} parent=11 // pred_fallthru
          _
        // Predicated region
        $region77: #{densenet_forward.1} parent=11 // pred_check
          %p1024 = pneg %p473
        $region78: #{densenet_forward.1} parent=11 // pred_check_branch
          %1026 = sbr.rel (%p1024) target = $region80
        $region79: #{densenet_forward.1} parent=11 // pred_region
          _
        $region80: #{densenet_forward.1} parent=11 // pred_fallthru
          _
        // Predicated region
        $region81: #{densenet_forward.1} parent=11 // pred_check
          %p1027 = pneg %p494
        $region82: #{densenet_forward.1} parent=11 // pred_check_branch
          %1029 = sbr.rel (%p1027) target = $region84
        $region83: #{densenet_forward.1} parent=11 // pred_region
          _
        $region84: #{densenet_forward.1} parent=11 // pred_fallthru
          _
        // Predicated region
        $region85: #{densenet_forward.1} parent=11 // pred_check
          %p1030 = pneg %p515
        $region86: #{densenet_forward.1} parent=11 // pred_check_branch
          %1032 = sbr.rel (%p1030) target = $region88
        $region87: #{densenet_forward.1} parent=11 // pred_region
          _
        $region88: #{densenet_forward.1} parent=11 // pred_fallthru
          _
        // Predicated region
        $region89: #{densenet_forward.1} parent=11 // pred_check
          %p1033 = pneg %p536
        $region90: #{densenet_forward.1} parent=11 // pred_check_branch
          %1035 = sbr.rel (%p1033) target = $region92
        $region91: #{densenet_forward.1} parent=11 // pred_region
          _
        $region92: #{densenet_forward.1} parent=11 // pred_fallthru
          _
        // Predicated region
        $region93: #{densenet_forward.1} parent=11 // pred_check
          %p1036 = pneg %p557
        $region94: #{densenet_forward.1} parent=11 // pred_check_branch
          %1038 = sbr.rel (%p1036) target = $region96
        $region95: #{densenet_forward.1} parent=11 // pred_region
          _
        $region96: #{densenet_forward.1} parent=11 // pred_fallthru
          _
        // Predicated region
        $region97: #{densenet_forward.1} parent=11 // pred_check
          %p1039 = pneg %p578
        $region98: #{densenet_forward.1} parent=11 // pred_check_branch
          %1041 = sbr.rel (%p1039) target = $region100
        $region99: #{densenet_forward.1} parent=11 // pred_region
          _
        $region100: #{densenet_forward.1} parent=11 // pred_fallthru
          _
        // Predicated region
        $region101: #{densenet_forward.1} parent=11 // pred_check
          %p1042 = pneg %p599
        $region102: #{densenet_forward.1} parent=11 // pred_check_branch
          %1044 = sbr.rel (%p1042) target = $region104
        $region103: #{densenet_forward.1} parent=11 // pred_region
          _
        $region104: #{densenet_forward.1} parent=11 // pred_fallthru
          _
        // Predicated region
        $region105: #{densenet_forward.1} parent=11 // pred_check
          %p1045 = pneg %p620
        $region106: #{densenet_forward.1} parent=11 // pred_check_branch
          %1047 = sbr.rel (%p1045) target = $region108
        $region107: #{densenet_forward.1} parent=11 // pred_region
          _
        $region108: #{densenet_forward.1} parent=11 // pred_fallthru
          _
        // Predicated region
        $region109: #{densenet_forward.1} parent=11 // pred_check
          %p1048 = pneg %p641
        $region110: #{densenet_forward.1} parent=11 // pred_check_branch
          %1050 = sbr.rel (%p1048) target = $region112
        $region111: #{densenet_forward.1} parent=11 // pred_region
          _
        $region112: #{densenet_forward.1} parent=11 // pred_fallthru
          _
        // Predicated region
        $region113: #{densenet_forward.1} parent=11 // pred_check
          %p1051 = pneg %p662
        $region114: #{densenet_forward.1} parent=11 // pred_check_branch
          %1053 = sbr.rel (%p1051) target = $region116
        $region115: #{densenet_forward.1} parent=11 // pred_region
          _
        $region116: #{densenet_forward.1} parent=11 // pred_fallthru
          _
        // Predicated region
        $region117: #{densenet_forward.1} parent=11 // pred_check
          %p1054 = pneg %p683
        $region118: #{densenet_forward.1} parent=11 // pred_check_branch
          %1056 = sbr.rel (%p1054) target = $region120
        $region119: #{densenet_forward.1} parent=11 // pred_region
          _
        $region120: #{densenet_forward.1} parent=11 // pred_fallthru
          _
        // Predicated region
        $region121: #{densenet_forward.1} parent=11 // pred_check
          %p1057 = pneg %p704
        $region122: #{densenet_forward.1} parent=11 // pred_check_branch
          %1059 = sbr.rel (%p1057) target = $region124
        $region123: #{densenet_forward.1} parent=11 // pred_region
          _
        $region124: #{densenet_forward.1} parent=11 // pred_fallthru
          _
        // Predicated region
        $region125: #{densenet_forward.1} parent=11 // pred_check
          %p1060 = pneg %p725
        $region126: #{densenet_forward.1} parent=11 // pred_check_branch
          %1062 = sbr.rel (%p1060) target = $region128
        $region127: #{densenet_forward.1} parent=11 // pred_region
          _
        $region128: #{densenet_forward.1} parent=11 // pred_fallthru
          _
        // Predicated region
        $region129: #{densenet_forward.1} parent=11 // pred_check
          %p1063 = pneg %p746
        $region130: #{densenet_forward.1} parent=11 // pred_check_branch
          %1065 = sbr.rel (%p1063) target = $region132
        $region131: #{densenet_forward.1} parent=11 // pred_region
          _
        $region132: #{densenet_forward.1} parent=11 // pred_fallthru
          _
        // Predicated region
        $region133: #{densenet_forward.1} parent=11 // pred_check
          %p1066 = pneg %p767
        $region134: #{densenet_forward.1} parent=11 // pred_check_branch
          %1068 = sbr.rel (%p1066) target = $region136
        $region135: #{densenet_forward.1} parent=11 // pred_region
          _
        $region136: #{densenet_forward.1} parent=11 // pred_fallthru
          _
        // Predicated region
        $region137: #{densenet_forward.1} parent=11 // pred_check
          %p1069 = pneg %p788
        $region138: #{densenet_forward.1} parent=11 // pred_check_branch
          %1071 = sbr.rel (%p1069) target = $region140
        $region139: #{densenet_forward.1} parent=11 // pred_region
          _
        $region140: #{densenet_forward.1} parent=11 // pred_fallthru
          _
        // Predicated region
        $region141: #{densenet_forward.1} parent=11 // pred_check
          %p1072 = pneg %p809
        $region142: #{densenet_forward.1} parent=11 // pred_check_branch
          %1074 = sbr.rel (%p1072) target = $region144
        $region143: #{densenet_forward.1} parent=11 // pred_region
          _
        $region144: #{densenet_forward.1} parent=11 // pred_fallthru
          _
        // Predicated region
        $region145: #{densenet_forward.1} parent=11 // pred_check
          %p1075 = pneg %p830
        $region146: #{densenet_forward.1} parent=11 // pred_check_branch
          %1077 = sbr.rel (%p1075) target = $region148
        $region147: #{densenet_forward.1} parent=11 // pred_region
          _
        $region148: #{densenet_forward.1} parent=11 // pred_fallthru
          _
        // Predicated region
        $region149: #{densenet_forward.1} parent=11 // pred_check
          %p1078 = pneg %p851
        $region150: #{densenet_forward.1} parent=11 // pred_check_branch
          %1080 = sbr.rel (%p1078) target = $region152
        $region151: #{densenet_forward.1} parent=11 // pred_region
          _
        $region152: #{densenet_forward.1} parent=11 // pred_fallthru
          _
        // Predicated region
        $region153: #{densenet_forward.1} parent=11 // pred_check
          %p1081 = pneg %p872
        $region154: #{densenet_forward.1} parent=11 // pred_check_branch
          %1083 = sbr.rel (%p1081) target = $region156
        $region155: #{densenet_forward.1} parent=11 // pred_region
          _
        $region156: #{densenet_forward.1} parent=11 // pred_fallthru
          _
        // Predicated region
        $region157: #{densenet_forward.1} parent=11 // pred_check
          %p1084 = pneg %p893
        $region158: #{densenet_forward.1} parent=11 // pred_check_branch
          %1086 = sbr.rel (%p1084) target = $region160
        $region159: #{densenet_forward.1} parent=11 // pred_region
          _
        $region160: #{densenet_forward.1} parent=11 // pred_fallthru
          _
        // Predicated region
        $region161: #{densenet_forward.1} parent=11 // pred_check
          %p1087 = pneg %p914
        $region162: #{densenet_forward.1} parent=11 // pred_check_branch
          %1089 = sbr.rel (%p1087) target = $region164
        $region163: #{densenet_forward.1} parent=11 // pred_region
          _
        $region164: #{densenet_forward.1} parent=11 // pred_fallthru
          _
        // Predicated region
        $region165: #{densenet_forward.1} parent=11 // pred_check
          %p1090 = pneg %p935
        $region166: #{densenet_forward.1} parent=11 // pred_check_branch
          %1092 = sbr.rel (%p1090) target = $region168
        $region167: #{densenet_forward.1} parent=11 // pred_region
          _
        $region168: #{densenet_forward.1} parent=11 // pred_fallthru
          _
      $region12: #{densenet_forward.1} parent=5 // pred_fallthru
        _
      %p1093 = scmp.lt.s32.totalorder %s90, 2
      // Predicated region
      $region169: #{densenet_forward.1} parent=5 // pred_check
        %p1094 = pneg %p1093
      $region170: #{densenet_forward.1} parent=5 // pred_check_branch
        %1096 = sbr.rel (%p1094) target = $region172
      $region171: #{densenet_forward.1} parent=5 // pred_region
        // Predicated region
        $region173: #{densenet_forward.1} parent=171 // pred_check
          %p1097 = pneg %p110
        $region174: #{densenet_forward.1} parent=171 // pred_check_branch
          %1099 = sbr.rel (%p1097) target = $region176
        $region175: #{densenet_forward.1} parent=171 // pred_region
          %p1100 = scmp.lt.s32.totalorder %s90, 1
          %s1101 = scalar_select %p1100, %s90, 1
          %s1102 = smul.addr %s1101, 4
          %s1103 = smul.addr %s1102, 8
          %s1104 = scalar_lea.vmem %s1, %s1103
        $region176: #{densenet_forward.1} parent=171 // pred_fallthru
          _
      $region172: #{densenet_forward.1} parent=5 // pred_fallthru
        _
      %p1105 = scmp.le.s32.totalorder 1, %s90
      %p1106 = scmp.lt.s32.totalorder %s90, 3
      %p1107 = pnand %p1105, %p1106
      %p1108 = pneg %p1107
      // Predicated region
      $region177: #{densenet_forward.1} parent=5 // pred_check
        _
      $region178: #{densenet_forward.1} parent=5 // pred_check_branch
        %1110 = sbr.rel (%p1107) target = $region180
      $region179: #{densenet_forward.1} parent=5 // pred_region
        %s1111 = ssub.s32 %s90, 1
        %p1112 = scmp.lt.s32.totalorder %s95, 1
        %s1113 = scalar_select %p1112, %s95, 1
        %s1114 = smul.addr %s1113, 4
        %s1115 = smul.addr %s1114, 8
        %s1116 = scalar_lea.vmem %s1, %s1115
        %p1117 = pneg %p116
        %p1118 = pneg %p113
        %p1119 = pneg %p137
        %p1120 = pneg %p134
        %p1121 = pneg %p158
        %p1122 = pneg %p155
        %p1123 = pneg %p179
        %p1124 = pneg %p176
        %p1125 = pneg %p200
        %p1126 = pneg %p197
        %p1127 = pneg %p221
        %p1128 = pneg %p218
        %p1129 = pneg %p242
        %p1130 = pneg %p239
        %p1131 = pneg %p263
        %p1132 = pneg %p260
        %p1133 = pneg %p284
        %p1134 = pneg %p281
        %p1135 = pneg %p305
        %p1136 = pneg %p302
        %p1137 = pneg %p326
        %p1138 = pneg %p323
        %p1139 = pneg %p347
        %p1140 = pneg %p344
        %p1141 = pneg %p368
        %p1142 = pneg %p365
        %p1143 = pneg %p389
        %p1144 = pneg %p386
        %p1145 = pneg %p410
        %p1146 = pneg %p407
        %p1147 = pneg %p431
        %p1148 = pneg %p428
        %p1149 = pneg %p452
        %p1150 = pneg %p449
        %p1151 = pneg %p473
        %p1152 = pneg %p470
        %p1153 = pneg %p494
        %p1154 = pneg %p491
        %p1155 = pneg %p515
        %p1156 = pneg %p512
        %p1157 = pneg %p536
        %p1158 = pneg %p533
        %p1159 = pneg %p557
        %p1160 = pneg %p554
        %p1161 = pneg %p578
        %p1162 = pneg %p575
        %p1163 = pneg %p599
        %p1164 = pneg %p596
        %p1165 = pneg %p620
        %p1166 = pneg %p617
        %p1167 = pneg %p641
        %p1168 = pneg %p638
        %p1169 = pneg %p662
        %p1170 = pneg %p659
        %p1171 = pneg %p683
        %p1172 = pneg %p680
        %p1173 = pneg %p704
        %p1174 = pneg %p701
        %p1175 = pneg %p725
        %p1176 = pneg %p722
        %p1177 = pneg %p746
        %p1178 = pneg %p743
        %p1179 = pneg %p767
        %p1180 = pneg %p764
        %p1181 = pneg %p788
        %p1182 = pneg %p785
        %p1183 = pneg %p809
        %p1184 = pneg %p806
        %p1185 = pneg %p830
        %p1186 = pneg %p827
        %p1187 = pneg %p851
        %p1188 = pneg %p848
        %p1189 = pneg %p872
        %p1190 = pneg %p869
        %p1191 = pneg %p893
        %p1192 = pneg %p890
        %p1193 = pneg %p914
        %p1194 = pneg %p911
        %p1195 = pneg %p935
        %p1196 = pneg %p932
        %p1197 = pneg %p961
        %p1198 = pneg %p958
        %s1199 = sand.u32 %s948, 1
        %s1200 = scalar_lea.sflag [#allocation3], %s1199
        %s1201 = sand.u32 %s948, 1
        %s1202 = scalar_lea.vmem [#allocation2], %s1201
        %p1203 = scmp.lt.s32.totalorder %s95, 1
        %s1204 = scalar_select %p1203, %s95, 1
        %s1205 = smul.addr %s1204, 4
        %s1206 = smul.addr %s1205, 8
        %s1207 = scalar_lea.vmem %s1, %s1206
        %v1209 = vld [vmem:[%s1207] sm:$0xff]
        %v1210 = vld [vmem:[%s1207 + $0x8] sm:$0xff]
        %v1211 = vld [vmem:[%s1207 + $0x10] sm:$0xff]
        %v1212 = vld [vmem:[%s1207 + $0x18] sm:$0xff]
        %v1213 = vpack.c.bf16 %v1210, %v1209
        %v1214 = vpack.c.bf16 %v1212, %v1211
        %v1215 = vld [vmem:[%s3] sm:$0xf]
        %v1216 = vld [vmem:[%s3 + $0x4] sm:$0xf]
        %v1217 = vld [vmem:[%s3 + $0x8] sm:$0xf]
        %v1218 = vld [vmem:[%s3 + $0xc] sm:$0x3]
        %v1223 = vunpack.c.l.b16 %v1215
        %v1224 = vunpack.c.l.b16 %v1216
        %v1225 = vunpack.c.l.b16 %v1217
        %v1226 = vunpack.c.l.b16 %v1218
        %v1227 = vpack.c.b16 %v1224, %v1223
        %v1228 = vpack.c.b16 %v1226, %v1225
        %vm1230 = vcmask 228352
        %v1232 = vsel %vm1230, %v1213, 0
        %v1235 = vsel %vm1230, %v1214, 0
        %vm1237 = vcmask 1045504
        %v1239 = vsel %vm1237, %v1228, 0
        %1241 = vmatprep.subr.bf16.mxu0 0
        %1242 = vmatpush1.bf16.msra.mxu0 0
        %1243 = vmatprep.subr.bf16.mxu0 0
        %1244 = vmatpush1.bf16.msra.mxu0 0
        %1245 = vmatprep.subr.bf16.mxu0 0
        %1246 = vmatpush1.bf16.msra.mxu0 0
        %1247 = vmatprep.subr.bf16.mxu0 0
        %1248 = vmatpush1.bf16.msra.mxu0 0
        %1249 = vmatprep.subr.bf16.mxu0 0
        %1250 = vmatpush1.bf16.msra.mxu0 0
        %1251 = vmatprep.subr.bf16.mxu0 0
        %1252 = vmatpush1.bf16.msra.mxu0 0
        %1253 = vmatprep.subr.bf16.mxu0 0
        %1254 = vmatpush1.bf16.msra.mxu0 %v1239
        %1255 = vmatprep.subr.bf16.mxu0 0
        %1256 = vmatpush1.bf16.msra.mxu0 %v1227
        %1257 = vmatprep.subr.bf16.mxu0 0
        %1258 = vmatpush2.bf16.msra.mxu0 0
        %1259 = vmatprep.subr.bf16.mxu0 0
        %1260 = vmatpush2.bf16.msra.mxu0 0
        %1261 = vmatprep.subr.bf16.mxu0 0
        %1262 = vmatpush2.bf16.msra.mxu0 0
        %1263 = vmatprep.subr.bf16.mxu0 0
        %1264 = vmatpush2.bf16.msra.mxu0 0
        %1265 = vmatprep.subr.bf16.mxu0 0
        %1266 = vmatpush2.bf16.msra.mxu0 0
        %1267 = vmatprep.subr.bf16.mxu0 0
        %1268 = vmatpush2.bf16.msra.mxu0 0
        %1269 = vmatprep.subr.bf16.mxu0 0
        %1270 = vmatpush2.bf16.msra.mxu0 0
        %1271 = vmatprep.subr.bf16.mxu0 0
        %1272 = vmatpush2.bf16.msra.mxu0 0
        %1273 = vmatprep.mubr.bf16.mxu0 0
        %1274 = vmatmul.mubr.bf16.gmra.mxu0 %v1232
        %v1275 = vpop.f32.mrf.mxu0
        %v1276 = vadd.f32 0.0, %v1275
        %v1277 = vpop.f32.mrf.mxu0
        %v1278 = vpop.f32.mrf.mxu0
        %v1279 = vadd.f32 0.0, %v1278
        %v1280 = vpop.f32.mrf.mxu0
        %1281 = vmatprep.mubr.bf16.mxu0 0
        %1282 = vmatmul.mubr.bf16.gmra.mxu0 %v1235
        %v1283 = vpop.f32.mrf.mxu0
        %v1284 = vadd.f32 0.0, %v1283
        %v1285 = vpop.f32.mrf.mxu0
        %v1286 = vpop.f32.mrf.mxu0
        %v1287 = vadd.f32 0.0, %v1286
        %v1288 = vpop.f32.mrf.mxu0
        %1289 = vdwg.mxu0
        %v1290 = vld [vmem:[%s5] sm:$0x3]
        %v1291 = vlaneseq
        %v1292 = vshrl.u32 %v1291, 7
        %v1293 = vsub.s32 0, %v1292
        %v1294 = vrot.slane %v1290, %v1293
        %v1295 = vmul.f32 %v1276, %v1294
        %v1296 = vmul.f32 %v1279, %v1294
        %v1297 = vmul.f32 %v1284, %v1294
        %v1298 = vmul.f32 %v1287, %v1294
        %v1299 = vlaneseq
        %v1300 = vshrl.u32 %v1299, 7
        %v1301 = vsub.s32 1, %v1300
        %v1302 = vrot.slane %v1290, %v1301
        %v1303 = vadd.f32 %v1295, %v1302
        %v1304 = vadd.f32 %v1296, %v1302
        %v1305 = vadd.f32 %v1297, %v1302
        %v1306 = vadd.f32 %v1298, %v1302
        %v1307 = vmax.f32 %v1303, 0.0
        %v1308 = vmax.f32 %v1304, 0.0
        %v1309 = vmax.f32 %v1305, 0.0
        %v1310 = vmax.f32 %v1306, 0.0
        %v1311 = vpack.c.bf16 %v1308, %v1307
        %v1312 = vpack.c.bf16 %v1310, %v1309
        %v1313 = vld [vmem:[%s7] sm:$0xf]
        %v1314 = vld [vmem:[%s7 + $0x4] sm:$0xf]
        %v1317 = vunpack.c.l.b16 %v1313
        %v1318 = vunpack.c.l.b16 %v1314
        %v1319 = vpack.c.b16 %v1318, %v1317
        %vm1320 = vcmask 261120
        %v1322 = vsel %vm1320, %v1319, 0
        %1324 = vmatprep.subr.bf16.mxu0 0
        %1325 = vmatpush1.bf16.msra.mxu0 0
        %1326 = vmatprep.subr.bf16.mxu0 0
        %1327 = vmatpush1.bf16.msra.mxu0 0
        %1328 = vmatprep.subr.bf16.mxu0 0
        %1329 = vmatpush1.bf16.msra.mxu0 0
        %1330 = vmatprep.subr.bf16.mxu0 0
        %1331 = vmatpush1.bf16.msra.mxu0 0
        %1332 = vmatprep.subr.bf16.mxu0 0
        %1333 = vmatpush1.bf16.msra.mxu0 0
        %1334 = vmatprep.subr.bf16.mxu0 0
        %1335 = vmatpush1.bf16.msra.mxu0 0
        %1336 = vmatprep.subr.bf16.mxu0 0
        %1337 = vmatpush1.bf16.msra.mxu0 %v1312
        %1338 = vmatprep.subr.bf16.mxu0 0
        %1339 = vmatpush1.bf16.msra.mxu0 %v1311
        %1340 = vmatprep.subr.bf16.mxu0 0
        %1341 = vmatpush2.bf16.msra.mxu0 0
        %1342 = vmatprep.subr.bf16.mxu0 0
        %1343 = vmatpush2.bf16.msra.mxu0 0
        %1344 = vmatprep.subr.bf16.mxu0 0
        %1345 = vmatpush2.bf16.msra.mxu0 0
        %1346 = vmatprep.subr.bf16.mxu0 0
        %1347 = vmatpush2.bf16.msra.mxu0 0
        %1348 = vmatprep.subr.bf16.mxu0 0
        %1349 = vmatpush2.bf16.msra.mxu0 0
        %1350 = vmatprep.subr.bf16.mxu0 0
        %1351 = vmatpush2.bf16.msra.mxu0 0
        %1352 = vmatprep.subr.bf16.mxu0 0
        %1353 = vmatpush2.bf16.msra.mxu0 0
        %1354 = vmatprep.subr.bf16.mxu0 0
        %1355 = vmatpush2.bf16.msra.mxu0 0
        %1356 = vmatprep.mubr.bf16.mxu0 0
        %1357 = vmatmul.mubr.bf16.gmra.mxu0 %v1322
        %v1358 = vpop.f32.mrf.mxu0
        %v1359 = vadd.f32 0.0, %v1358
        %v1360 = vpop.f32.mrf.mxu0
        %v1361 = vpop.f32.mrf.mxu0
        %v1362 = vadd.f32 0.0, %v1361
        %v1363 = vpop.f32.mrf.mxu0
        %1364 = vdwg.mxu0
        %s1365 = scalar_lea.vmem %s7, 8
        %v1366 = vld [vmem:[%s1365] sm:$0xf]
        %v1367 = vld [vmem:[%s1365 + $0x4] sm:$0xf]
        %v1370 = vunpack.c.l.b16 %v1366
        %v1371 = vunpack.c.l.b16 %v1367
        %v1372 = vpack.c.b16 %v1371, %v1370
        %v1374 = vsel %vm1320, %v1372, 0
        %1376 = vmatprep.subr.bf16.mxu0 0
        %1377 = vmatpush1.bf16.msra.mxu0 0
        %1378 = vmatprep.subr.bf16.mxu0 0
        %1379 = vmatpush1.bf16.msra.mxu0 0
        %1380 = vmatprep.subr.bf16.mxu0 0
        %1381 = vmatpush1.bf16.msra.mxu0 0
        %1382 = vmatprep.subr.bf16.mxu0 0
        %1383 = vmatpush1.bf16.msra.mxu0 0
        %1384 = vmatprep.subr.bf16.mxu0 0
        %1385 = vmatpush1.bf16.msra.mxu0 0
        %1386 = vmatprep.subr.bf16.mxu0 0
        %1387 = vmatpush1.bf16.msra.mxu0 0
        %1388 = vmatprep.subr.bf16.mxu0 0
        %1389 = vmatpush1.bf16.msra.mxu0 %v1312
        %1390 = vmatprep.subr.bf16.mxu0 0
        %1391 = vmatpush1.bf16.msra.mxu0 %v1311
        %1392 = vmatprep.subr.bf16.mxu0 0
        %1393 = vmatpush2.bf16.msra.mxu0 0
        %1394 = vmatprep.subr.bf16.mxu0 0
        %1395 = vmatpush2.bf16.msra.mxu0 0
        %1396 = vmatprep.subr.bf16.mxu0 0
        %1397 = vmatpush2.bf16.msra.mxu0 0
        %1398 = vmatprep.subr.bf16.mxu0 0
        %1399 = vmatpush2.bf16.msra.mxu0 0
        %1400 = vmatprep.subr.bf16.mxu0 0
        %1401 = vmatpush2.bf16.msra.mxu0 0
        %1402 = vmatprep.subr.bf16.mxu0 0
        %1403 = vmatpush2.bf16.msra.mxu0 0
        %1404 = vmatprep.subr.bf16.mxu0 0
        %1405 = vmatpush2.bf16.msra.mxu0 0
        %1406 = vmatprep.subr.bf16.mxu0 0
        %1407 = vmatpush2.bf16.msra.mxu0 0
        %1408 = vmatprep.mubr.bf16.mxu0 0
        %1409 = vmatmul.mubr.bf16.gmra.mxu0 %v1374
        %v1410 = vpop.f32.mrf.mxu0
        %v1411 = vadd.f32 0.0, %v1410
        %v1412 = vpop.f32.mrf.mxu0
        %v1413 = vpop.f32.mrf.mxu0
        %v1414 = vadd.f32 0.0, %v1413
        %v1415 = vpop.f32.mrf.mxu0
        %1416 = vdwg.mxu0
        %v1417 = vmax.f32 %v1359, %v1411
        %v1418 = vmax.f32 %v1362, %v1414
        %s1419 = scalar_lea.vmem %s7, 16
        %v1420 = vld [vmem:[%s1419] sm:$0xf]
        %v1421 = vld [vmem:[%s1419 + $0x4] sm:$0xf]
        %v1424 = vunpack.c.l.b16 %v1420
        %v1425 = vunpack.c.l.b16 %v1421
        %v1426 = vpack.c.b16 %v1425, %v1424
        %v1428 = vsel %vm1320, %v1426, 0
        %1430 = vmatprep.subr.bf16.mxu0 0
        %1431 = vmatpush1.bf16.msra.mxu0 0
        %1432 = vmatprep.subr.bf16.mxu0 0
        %1433 = vmatpush1.bf16.msra.mxu0 0
        %1434 = vmatprep.subr.bf16.mxu0 0
        %1435 = vmatpush1.bf16.msra.mxu0 0
        %1436 = vmatprep.subr.bf16.mxu0 0
        %1437 = vmatpush1.bf16.msra.mxu0 0
        %1438 = vmatprep.subr.bf16.mxu0 0
        %1439 = vmatpush1.bf16.msra.mxu0 0
        %1440 = vmatprep.subr.bf16.mxu0 0
        %1441 = vmatpush1.bf16.msra.mxu0 0
        %1442 = vmatprep.subr.bf16.mxu0 0
        %1443 = vmatpush1.bf16.msra.mxu0 %v1312
        %1444 = vmatprep.subr.bf16.mxu0 0
        %1445 = vmatpush1.bf16.msra.mxu0 %v1311
        %1446 = vmatprep.subr.bf16.mxu0 0
        %1447 = vmatpush2.bf16.msra.mxu0 0
        %1448 = vmatprep.subr.bf16.mxu0 0
        %1449 = vmatpush2.bf16.msra.mxu0 0
        %1450 = vmatprep.subr.bf16.mxu0 0
        %1451 = vmatpush2.bf16.msra.mxu0 0
        %1452 = vmatprep.subr.bf16.mxu0 0
        %1453 = vmatpush2.bf16.msra.mxu0 0
        %1454 = vmatprep.subr.bf16.mxu0 0
        %1455 = vmatpush2.bf16.msra.mxu0 0
        %1456 = vmatprep.subr.bf16.mxu0 0
        %1457 = vmatpush2.bf16.msra.mxu0 0
        %1458 = vmatprep.subr.bf16.mxu0 0
        %1459 = vmatpush2.bf16.msra.mxu0 0
        %1460 = vmatprep.subr.bf16.mxu0 0
        %1461 = vmatpush2.bf16.msra.mxu0 0
        %1462 = vmatprep.mubr.bf16.mxu0 0
        %1463 = vmatmul.mubr.bf16.gmra.mxu0 %v1428
        %v1464 = vpop.f32.mrf.mxu0
        %v1465 = vadd.f32 0.0, %v1464
        %v1466 = vpop.f32.mrf.mxu0
        %v1467 = vpop.f32.mrf.mxu0
        %v1468 = vadd.f32 0.0, %v1467
        %v1469 = vpop.f32.mrf.mxu0
        %1470 = vdwg.mxu0
        %v1471 = vmax.f32 %v1417, %v1465
        %v1472 = vmax.f32 %v1418, %v1468
        %v1473 = vld [vmem:[%s11] sm:$0x3]
        %v1474 = vld [vmem:[%s13] sm:$0xf]
        %v1475 = vld [vmem:[%s13 + $0x4] sm:$0xf]
        %v1476 = vld [vmem:[%s15] sm:$0x3]
        %v1477 = vlaneseq
        %v1478 = vshrl.u32 %v1477, 7
        %v1479 = vsub.s32 0, %v1478
        %v1480 = vrot.slane %v1473, %v1479
        %v1481 = vmul.f32 %v1471, %v1480
        %v1482 = vmul.f32 %v1472, %v1480
        %v1483 = vlaneseq
        %v1484 = vshrl.u32 %v1483, 7
        %v1485 = vsub.s32 1, %v1484
        %v1486 = vrot.slane %v1473, %v1485
        %v1487 = vadd.f32 %v1481, %v1486
        %v1488 = vadd.f32 %v1482, %v1486
        %v1489 = vmax.f32 %v1487, 0.0
        %v1490 = vmax.f32 %v1488, 0.0
        %v1491 = vpack.c.bf16 %v1490, %v1489
        %v1494 = vunpack.c.l.b16 %v1474
        %v1495 = vunpack.c.l.b16 %v1475
        %v1496 = vpack.c.b16 %v1495, %v1494
        %vm1498 = vcmask 130048
        %v1500 = vsel %vm1498, %v1491, 0
        %1502 = vmatprep.subr.bf16.mxu0 0
        %1503 = vmatpush1.bf16.msra.mxu0 0
        %1504 = vmatprep.subr.bf16.mxu0 0
        %1505 = vmatpush1.bf16.msra.mxu0 0
        %1506 = vmatprep.subr.bf16.mxu0 0
        %1507 = vmatpush1.bf16.msra.mxu0 0
        %1508 = vmatprep.subr.bf16.mxu0 0
        %1509 = vmatpush1.bf16.msra.mxu0 0
        %1510 = vmatprep.subr.bf16.mxu0 0
        %1511 = vmatpush1.bf16.msra.mxu0 0
        %1512 = vmatprep.subr.bf16.mxu0 0
        %1513 = vmatpush1.bf16.msra.mxu0 0
        %1514 = vmatprep.subr.bf16.mxu0 0
        %1515 = vmatpush1.bf16.msra.mxu0 0
        %1516 = vmatprep.subr.bf16.mxu0 0
        %1517 = vmatpush1.bf16.msra.mxu0 %v1496
        %1518 = vmatprep.subr.bf16.mxu0 0
        %1519 = vmatpush2.bf16.msra.mxu0 0
        %1520 = vmatprep.subr.bf16.mxu0 0
        %1521 = vmatpush2.bf16.msra.mxu0 0
        %1522 = vmatprep.subr.bf16.mxu0 0
        %1523 = vmatpush2.bf16.msra.mxu0 0
        %1524 = vmatprep.subr.bf16.mxu0 0
        %1525 = vmatpush2.bf16.msra.mxu0 0
        %1526 = vmatprep.subr.bf16.mxu0 0
        %1527 = vmatpush2.bf16.msra.mxu0 0
        %1528 = vmatprep.subr.bf16.mxu0 0
        %1529 = vmatpush2.bf16.msra.mxu0 0
        %1530 = vmatprep.subr.bf16.mxu0 0
        %1531 = vmatpush2.bf16.msra.mxu0 0
        %1532 = vmatprep.subr.bf16.mxu0 0
        %1533 = vmatpush2.bf16.msra.mxu0 0
        %1534 = vmatprep.mubr.bf16.mxu0 0
        %1535 = vmatmul.mubr.bf16.gmra.mxu0 %v1500
        %v1536 = vpop.f32.mrf.mxu0
        %v1537 = vadd.f32 0.0, %v1536
        %v1538 = vpop.f32.mrf.mxu0
        %v1539 = vpop.f32.mrf.mxu0
        %v1540 = vadd.f32 0.0, %v1539
        %v1541 = vpop.f32.mrf.mxu0
        %1542 = vdwg.mxu0
        %v1543 = vlaneseq
        %v1544 = vshrl.u32 %v1543, 7
        %v1545 = vsub.s32 0, %v1544
        %v1546 = vrot.slane %v1476, %v1545
        %v1547 = vmul.f32 %v1537, %v1546
        %v1548 = vmul.f32 %v1540, %v1546
        %v1549 = vlaneseq
        %v1550 = vshrl.u32 %v1549, 7
        %v1551 = vsub.s32 1, %v1550
        %v1552 = vrot.slane %v1476, %v1551
        %v1553 = vadd.f32 %v1547, %v1552
        %v1554 = vadd.f32 %v1548, %v1552
        %v1555 = vmax.f32 %v1553, 0.0
        %v1556 = vmax.f32 %v1554, 0.0
        %v1557 = vpack.c.bf16 %v1556, %v1555
        %v1558 = vld [vmem:[%s9] sm:$0xf]
        %v1559 = vld [vmem:[%s9 + $0x4] sm:$0xf]
        %v1562 = vunpack.c.l.b16 %v1558
        %v1563 = vunpack.c.l.b16 %v1559
        %v1564 = vpack.c.b16 %v1563, %v1562
        %v1566 = vsel %vm1498, %v1564, 0
        %1568 = vmatprep.subr.bf16.mxu0 0
        %1569 = vmatpush1.bf16.msra.mxu0 0
        %1570 = vmatprep.subr.bf16.mxu0 0
        %1571 = vmatpush1.bf16.msra.mxu0 0
        %1572 = vmatprep.subr.bf16.mxu0 0
        %1573 = vmatpush1.bf16.msra.mxu0 0
        %1574 = vmatprep.subr.bf16.mxu0 0
        %1575 = vmatpush1.bf16.msra.mxu0 0
        %1576 = vmatprep.subr.bf16.mxu0 0
        %1577 = vmatpush1.bf16.msra.mxu0 0
        %1578 = vmatprep.subr.bf16.mxu0 0
        %1579 = vmatpush1.bf16.msra.mxu0 0
        %1580 = vmatprep.subr.bf16.mxu0 0
        %1581 = vmatpush1.bf16.msra.mxu0 0
        %1582 = vmatprep.subr.bf16.mxu0 0
        %1583 = vmatpush1.bf16.msra.mxu0 %v1557
        %1584 = vmatprep.subr.bf16.mxu0 0
        %1585 = vmatpush2.bf16.msra.mxu0 0
        %1586 = vmatprep.subr.bf16.mxu0 0
        %1587 = vmatpush2.bf16.msra.mxu0 0
        %1588 = vmatprep.subr.bf16.mxu0 0
        %1589 = vmatpush2.bf16.msra.mxu0 0
        %1590 = vmatprep.subr.bf16.mxu0 0
        %1591 = vmatpush2.bf16.msra.mxu0 0
        %1592 = vmatprep.subr.bf16.mxu0 0
        %1593 = vmatpush2.bf16.msra.mxu0 0
        %1594 = vmatprep.subr.bf16.mxu0 0
        %1595 = vmatpush2.bf16.msra.mxu0 0
        %1596 = vmatprep.subr.bf16.mxu0 0
        %1597 = vmatpush2.bf16.msra.mxu0 0
        %1598 = vmatprep.subr.bf16.mxu0 0
        %1599 = vmatpush2.bf16.msra.mxu0 0
        %1600 = vmatprep.mubr.bf16.mxu0 0
        %1601 = vmatmul.mubr.bf16.gmra.mxu0 %v1566
        %v1602 = vpop.f32.mrf.mxu0
        %v1603 = vadd.f32 0.0, %v1602
        %v1604 = vpop.f32.mrf.mxu0
        %v1605 = vpop.f32.mrf.mxu0
        %v1606 = vadd.f32 0.0, %v1605
        %v1607 = vpop.f32.mrf.mxu0
        %1608 = vdwg.mxu0
        %v1609 = vpack.c.bf16 %v1606, %v1603
        %s1610 = scalar_lea.vmem %s9, 8
        %v1611 = vld [vmem:[%s1610] sm:$0xf]
        %v1612 = vld [vmem:[%s1610 + $0x4] sm:$0xf]
        %v1615 = vunpack.c.l.b16 %v1611
        %v1616 = vunpack.c.l.b16 %v1612
        %v1617 = vpack.c.b16 %v1616, %v1615
        %v1619 = vsel %vm1498, %v1617, 0
        %1621 = vmatprep.subr.bf16.mxu0 0
        %1622 = vmatpush1.bf16.msra.mxu0 0
        %1623 = vmatprep.subr.bf16.mxu0 0
        %1624 = vmatpush1.bf16.msra.mxu0 0
        %1625 = vmatprep.subr.bf16.mxu0 0
        %1626 = vmatpush1.bf16.msra.mxu0 0
        %1627 = vmatprep.subr.bf16.mxu0 0
        %1628 = vmatpush1.bf16.msra.mxu0 0
        %1629 = vmatprep.subr.bf16.mxu0 0
        %1630 = vmatpush1.bf16.msra.mxu0 0
        %1631 = vmatprep.subr.bf16.mxu0 0
        %1632 = vmatpush1.bf16.msra.mxu0 0
        %1633 = vmatprep.subr.bf16.mxu0 0
        %1634 = vmatpush1.bf16.msra.mxu0 0
        %1635 = vmatprep.subr.bf16.mxu0 0
        %1636 = vmatpush1.bf16.msra.mxu0 %v1557
        %1637 = vmatprep.subr.bf16.mxu0 0
        %1638 = vmatpush2.bf16.msra.mxu0 0
        %1639 = vmatprep.subr.bf16.mxu0 0
        %1640 = vmatpush2.bf16.msra.mxu0 0
        %1641 = vmatprep.subr.bf16.mxu0 0
        %1642 = vmatpush2.bf16.msra.mxu0 0
        %1643 = vmatprep.subr.bf16.mxu0 0
        %1644 = vmatpush2.bf16.msra.mxu0 0
        %1645 = vmatprep.subr.bf16.mxu0 0
        %1646 = vmatpush2.bf16.msra.mxu0 0
        %1647 = vmatprep.subr.bf16.mxu0 0
        %1648 = vmatpush2.bf16.msra.mxu0 0
        %1649 = vmatprep.subr.bf16.mxu0 0
        %1650 = vmatpush2.bf16.msra.mxu0 0
        %1651 = vmatprep.subr.bf16.mxu0 0
        %1652 = vmatpush2.bf16.msra.mxu0 0
        %1653 = vmatprep.mubr.bf16.mxu0 0
        %1654 = vmatmul.mubr.bf16.gmra.mxu0 %v1619
        %v1655 = vpop.f32.mrf.mxu0
        %v1656 = vadd.f32 0.0, %v1655
        %v1657 = vpop.f32.mrf.mxu0
        %v1658 = vpop.f32.mrf.mxu0
        %v1659 = vadd.f32 0.0, %v1658
        %v1660 = vpop.f32.mrf.mxu0
        %1661 = vdwg.mxu0
        %v1662 = vpack.c.bf16 %v1659, %v1656
        %v1663 = vld [vmem:[%s17] sm:$0xf]
        %v1664 = vld [vmem:[%s17 + $0x4] sm:$0xf]
        %s1665 = scalar_lea.vmem %s17, 8
        %v1666 = vld [vmem:[%s1665] sm:$0xf]
        %v1667 = vld [vmem:[%s1665 + $0x4] sm:$0xf]
        %v1670 = vunpack.c.l.b16 %v1666
        %v1671 = vunpack.c.l.b16 %v1667
        %v1672 = vpack.c.b16 %v1671, %v1670
        %v1675 = vsel %vm1498, %v1557, 0
        %1677 = vmatprep.subr.bf16.mxu0 0
        %1678 = vmatpush1.bf16.msra.mxu0 0
        %1679 = vmatprep.subr.bf16.mxu0 0
        %1680 = vmatpush1.bf16.msra.mxu0 0
        %1681 = vmatprep.subr.bf16.mxu0 0
        %1682 = vmatpush1.bf16.msra.mxu0 0
        %1683 = vmatprep.subr.bf16.mxu0 0
        %1684 = vmatpush1.bf16.msra.mxu0 0
        %1685 = vmatprep.subr.bf16.mxu0 0
        %1686 = vmatpush1.bf16.msra.mxu0 0
        %1687 = vmatprep.subr.bf16.mxu0 0
        %1688 = vmatpush1.bf16.msra.mxu0 0
        %1689 = vmatprep.subr.bf16.mxu0 0
        %1690 = vmatpush1.bf16.msra.mxu0 0
        %1691 = vmatprep.subr.bf16.mxu0 0
        %1692 = vmatpush1.bf16.msra.mxu0 %v1672
        %1693 = vmatprep.subr.bf16.mxu0 0
        %1694 = vmatpush2.bf16.msra.mxu0 0
        %1695 = vmatprep.subr.bf16.mxu0 0
        %1696 = vmatpush2.bf16.msra.mxu0 0
        %1697 = vmatprep.subr.bf16.mxu0 0
        %1698 = vmatpush2.bf16.msra.mxu0 0
        %1699 = vmatprep.subr.bf16.mxu0 0
        %1700 = vmatpush2.bf16.msra.mxu0 0
        %1701 = vmatprep.subr.bf16.mxu0 0
        %1702 = vmatpush2.bf16.msra.mxu0 0
        %1703 = vmatprep.subr.bf16.mxu0 0
        %1704 = vmatpush2.bf16.msra.mxu0 0
        %1705 = vmatprep.subr.bf16.mxu0 0
        %1706 = vmatpush2.bf16.msra.mxu0 0
        %1707 = vmatprep.subr.bf16.mxu0 0
        %1708 = vmatpush2.bf16.msra.mxu0 0
        %1709 = vmatprep.mubr.bf16.mxu0 0
        %1710 = vmatmul.mubr.bf16.gmra.mxu0 %v1675
        %v1711 = vpop.f32.mrf.mxu0
        %v1712 = vadd.f32 0.0, %v1711
        %v1713 = vpop.f32.mrf.mxu0
        %v1714 = vpop.f32.mrf.mxu0
        %v1715 = vadd.f32 0.0, %v1714
        %v1716 = vpop.f32.mrf.mxu0
        %1717 = vdwg.mxu0
        %v1720 = vunpack.c.l.b16 %v1663
        %v1721 = vunpack.c.l.b16 %v1664
        %v1722 = vpack.c.b16 %v1721, %v1720
        %v1725 = vsel %vm1498, %v1609, 0
        %1727 = vmatprep.subr.bf16.mxu0 0
        %1728 = vmatpush1.bf16.msra.mxu0 0
        %1729 = vmatprep.subr.bf16.mxu0 0
        %1730 = vmatpush1.bf16.msra.mxu0 0
        %1731 = vmatprep.subr.bf16.mxu0 0
        %1732 = vmatpush1.bf16.msra.mxu0 0
        %1733 = vmatprep.subr.bf16.mxu0 0
        %1734 = vmatpush1.bf16.msra.mxu0 0
        %1735 = vmatprep.subr.bf16.mxu0 0
        %1736 = vmatpush1.bf16.msra.mxu0 0
        %1737 = vmatprep.subr.bf16.mxu0 0
        %1738 = vmatpush1.bf16.msra.mxu0 0
        %1739 = vmatprep.subr.bf16.mxu0 0
        %1740 = vmatpush1.bf16.msra.mxu0 0
        %1741 = vmatprep.subr.bf16.mxu0 0
        %1742 = vmatpush1.bf16.msra.mxu0 %v1722
        %1743 = vmatprep.subr.bf16.mxu0 0
        %1744 = vmatpush2.bf16.msra.mxu0 0
        %1745 = vmatprep.subr.bf16.mxu0 0
        %1746 = vmatpush2.bf16.msra.mxu0 0
        %1747 = vmatprep.subr.bf16.mxu0 0
        %1748 = vmatpush2.bf16.msra.mxu0 0
        %1749 = vmatprep.subr.bf16.mxu0 0
        %1750 = vmatpush2.bf16.msra.mxu0 0
        %1751 = vmatprep.subr.bf16.mxu0 0
        %1752 = vmatpush2.bf16.msra.mxu0 0
        %1753 = vmatprep.subr.bf16.mxu0 0
        %1754 = vmatpush2.bf16.msra.mxu0 0
        %1755 = vmatprep.subr.bf16.mxu0 0
        %1756 = vmatpush2.bf16.msra.mxu0 0
        %1757 = vmatprep.subr.bf16.mxu0 0
        %1758 = vmatpush2.bf16.msra.mxu0 0
        %1759 = vmatprep.mubr.bf16.mxu0 0
        %1760 = vmatmul.mubr.bf16.gmra.mxu0 %v1725
        %v1761 = vpop.f32.mrf.mxu0
        %v1762 = vadd.f32 %v1712, %v1761
        %v1763 = vpop.f32.mrf.mxu0
        %v1764 = vpop.f32.mrf.mxu0
        %v1765 = vadd.f32 %v1715, %v1764
        %v1766 = vpop.f32.mrf.mxu0
        %1767 = vdwg.mxu0
        %s1768 = scalar_lea.vmem %s17, 16
        %v1769 = vld [vmem:[%s1768] sm:$0xf]
        %v1770 = vld [vmem:[%s1768 + $0x4] sm:$0xf]
        %v1773 = vunpack.c.l.b16 %v1769
        %v1774 = vunpack.c.l.b16 %v1770
        %v1775 = vpack.c.b16 %v1774, %v1773
        %v1778 = vsel %vm1498, %v1662, 0
        %1780 = vmatprep.subr.bf16.mxu0 0
        %1781 = vmatpush1.bf16.msra.mxu0 0
        %1782 = vmatprep.subr.bf16.mxu0 0
        %1783 = vmatpush1.bf16.msra.mxu0 0
        %1784 = vmatprep.subr.bf16.mxu0 0
        %1785 = vmatpush1.bf16.msra.mxu0 0
        %1786 = vmatprep.subr.bf16.mxu0 0
        %1787 = vmatpush1.bf16.msra.mxu0 0
        %1788 = vmatprep.subr.bf16.mxu0 0
        %1789 = vmatpush1.bf16.msra.mxu0 0
        %1790 = vmatprep.subr.bf16.mxu0 0
        %1791 = vmatpush1.bf16.msra.mxu0 0
        %1792 = vmatprep.subr.bf16.mxu0 0
        %1793 = vmatpush1.bf16.msra.mxu0 0
        %1794 = vmatprep.subr.bf16.mxu0 0
        %1795 = vmatpush1.bf16.msra.mxu0 %v1775
        %1796 = vmatprep.subr.bf16.mxu0 0
        %1797 = vmatpush2.bf16.msra.mxu0 0
        %1798 = vmatprep.subr.bf16.mxu0 0
        %1799 = vmatpush2.bf16.msra.mxu0 0
        %1800 = vmatprep.subr.bf16.mxu0 0
        %1801 = vmatpush2.bf16.msra.mxu0 0
        %1802 = vmatprep.subr.bf16.mxu0 0
        %1803 = vmatpush2.bf16.msra.mxu0 0
        %1804 = vmatprep.subr.bf16.mxu0 0
        %1805 = vmatpush2.bf16.msra.mxu0 0
        %1806 = vmatprep.subr.bf16.mxu0 0
        %1807 = vmatpush2.bf16.msra.mxu0 0
        %1808 = vmatprep.subr.bf16.mxu0 0
        %1809 = vmatpush2.bf16.msra.mxu0 0
        %1810 = vmatprep.subr.bf16.mxu0 0
        %1811 = vmatpush2.bf16.msra.mxu0 0
        %1812 = vmatprep.mubr.bf16.mxu0 0
        %1813 = vmatmul.mubr.bf16.gmra.mxu0 %v1778
        %v1814 = vpop.f32.mrf.mxu0
        %v1815 = vadd.f32 0.0, %v1814
        %v1816 = vpop.f32.mrf.mxu0
        %v1817 = vpop.f32.mrf.mxu0
        %v1818 = vadd.f32 0.0, %v1817
        %v1819 = vpop.f32.mrf.mxu0
        %1820 = vdwg.mxu0
        %v1821 = vadd.f32 %v1762, %v1815
        %v1822 = vadd.f32 %v1765, %v1818
        %1825 = vrot.lane.b32.xlu0 %v1821, 16
        %v1826 = vpop.permute.xlu0 %1825
        %1827 = vrot.lane.b32.xlu0 %v1822, 16
        %v1828 = vpop.permute.xlu0 %1827
        %v1831 = vsel %vm1498, %v1471, %v1826
        %v1832 = vsel %vm1498, %v1472, %v1828
        %v1833 = vld [vmem:[%s19] sm:$0x3]
        %v1834 = vld [vmem:[%s21] sm:$0xf]
        %v1835 = vld [vmem:[%s21 + $0x4] sm:$0xf]
        %v1836 = vld [vmem:[%s21 + $0x8] sm:$0xf]
        %v1837 = vld [vmem:[%s23] sm:$0x3]
        %v1838 = vlaneseq
        %v1839 = vshrl.u32 %v1838, 7
        %v1840 = vsub.s32 0, %v1839
        %v1841 = vrot.slane %v1833, %v1840
        %v1842 = vmul.f32 %v1831, %v1841
        %v1843 = vmul.f32 %v1832, %v1841
        %v1844 = vlaneseq
        %v1845 = vshrl.u32 %v1844, 7
        %v1846 = vsub.s32 1, %v1845
        %v1847 = vrot.slane %v1833, %v1846
        %v1848 = vadd.f32 %v1842, %v1847
        %v1849 = vadd.f32 %v1843, %v1847
        %v1850 = vmax.f32 %v1848, 0.0
        %v1851 = vmax.f32 %v1849, 0.0
        %v1852 = vpack.c.bf16 %v1851, %v1850
        %v1856 = vunpack.c.l.b16 %v1834
        %v1857 = vunpack.c.l.b16 %v1835
        %v1858 = vunpack.c.l.b16 %v1836
        %v1859 = vpack.c.b16 %v1857, %v1856
        %v1860 = vpack.c.b16 %v1858, %v1858
        %vm1862 = vcmask 195584
        %v1864 = vsel %vm1862, %v1852, 0
        %vm1866 = vcmask 1043456
        %v1868 = vsel %vm1866, %v1860, 0
        %1870 = vmatprep.subr.bf16.mxu0 0
        %1871 = vmatpush1.bf16.msra.mxu0 0
        %1872 = vmatprep.subr.bf16.mxu0 0
        %1873 = vmatpush1.bf16.msra.mxu0 0
        %1874 = vmatprep.subr.bf16.mxu0 0
        %1875 = vmatpush1.bf16.msra.mxu0 0
        %1876 = vmatprep.subr.bf16.mxu0 0
        %1877 = vmatpush1.bf16.msra.mxu0 0
        %1878 = vmatprep.subr.bf16.mxu0 0
        %1879 = vmatpush1.bf16.msra.mxu0 0
        %1880 = vmatprep.subr.bf16.mxu0 0
        %1881 = vmatpush1.bf16.msra.mxu0 0
        %1882 = vmatprep.subr.bf16.mxu0 0
        %1883 = vmatpush1.bf16.msra.mxu0 %v1868
        %1884 = vmatprep.subr.bf16.mxu0 0
        %1885 = vmatpush1.bf16.msra.mxu0 %v1859
        %1886 = vmatprep.subr.bf16.mxu0 0
        %1887 = vmatpush2.bf16.msra.mxu0 0
        %1888 = vmatprep.subr.bf16.mxu0 0
        %1889 = vmatpush2.bf16.msra.mxu0 0
        %1890 = vmatprep.subr.bf16.mxu0 0
        %1891 = vmatpush2.bf16.msra.mxu0 0
        %1892 = vmatprep.subr.bf16.mxu0 0
        %1893 = vmatpush2.bf16.msra.mxu0 0
        %1894 = vmatprep.subr.bf16.mxu0 0
        %1895 = vmatpush2.bf16.msra.mxu0 0
        %1896 = vmatprep.subr.bf16.mxu0 0
        %1897 = vmatpush2.bf16.msra.mxu0 0
        %1898 = vmatprep.subr.bf16.mxu0 0
        %1899 = vmatpush2.bf16.msra.mxu0 0
        %1900 = vmatprep.subr.bf16.mxu0 0
        %1901 = vmatpush2.bf16.msra.mxu0 0
        %1902 = vmatprep.mubr.bf16.mxu0 0
        %1903 = vmatmul.mubr.bf16.gmra.mxu0 %v1864
        %v1904 = vpop.f32.mrf.mxu0
        %v1905 = vadd.f32 0.0, %v1904
        %v1906 = vpop.f32.mrf.mxu0
        %v1907 = vpop.f32.mrf.mxu0
        %v1908 = vadd.f32 0.0, %v1907
        %v1909 = vpop.f32.mrf.mxu0
        %1910 = vdwg.mxu0
        %v1911 = vlaneseq
        %v1912 = vshrl.u32 %v1911, 7
        %v1913 = vsub.s32 0, %v1912
        %v1914 = vrot.slane %v1837, %v1913
        %v1915 = vmul.f32 %v1905, %v1914
        %v1916 = vmul.f32 %v1908, %v1914
        %v1917 = vlaneseq
        %v1918 = vshrl.u32 %v1917, 7
        %v1919 = vsub.s32 1, %v1918
        %v1920 = vrot.slane %v1837, %v1919
        %v1921 = vadd.f32 %v1915, %v1920
        %v1922 = vadd.f32 %v1916, %v1920
        %v1923 = vmax.f32 %v1921, 0.0
        %v1924 = vmax.f32 %v1922, 0.0
        %v1925 = vpack.c.bf16 %v1924, %v1923
        %1926 = vmatprep.subr.bf16.mxu0 0
        %1927 = vmatpush1.bf16.msra.mxu0 0
        %1928 = vmatprep.subr.bf16.mxu0 0
        %1929 = vmatpush1.bf16.msra.mxu0 0
        %1930 = vmatprep.subr.bf16.mxu0 0
        %1931 = vmatpush1.bf16.msra.mxu0 0
        %1932 = vmatprep.subr.bf16.mxu0 0
        %1933 = vmatpush1.bf16.msra.mxu0 0
        %1934 = vmatprep.subr.bf16.mxu0 0
        %1935 = vmatpush1.bf16.msra.mxu0 0
        %1936 = vmatprep.subr.bf16.mxu0 0
        %1937 = vmatpush1.bf16.msra.mxu0 0
        %1938 = vmatprep.subr.bf16.mxu0 0
        %1939 = vmatpush1.bf16.msra.mxu0 0
        %1940 = vmatprep.subr.bf16.mxu0 0
        %1941 = vmatpush1.bf16.msra.mxu0 %v1925
        %1942 = vmatprep.subr.bf16.mxu0 0
        %1943 = vmatpush2.bf16.msra.mxu0 0
        %1944 = vmatprep.subr.bf16.mxu0 0
        %1945 = vmatpush2.bf16.msra.mxu0 0
        %1946 = vmatprep.subr.bf16.mxu0 0
        %1947 = vmatpush2.bf16.msra.mxu0 0
        %1948 = vmatprep.subr.bf16.mxu0 0
        %1949 = vmatpush2.bf16.msra.mxu0 0
        %1950 = vmatprep.subr.bf16.mxu0 0
        %1951 = vmatpush2.bf16.msra.mxu0 0
        %1952 = vmatprep.subr.bf16.mxu0 0
        %1953 = vmatpush2.bf16.msra.mxu0 0
        %1954 = vmatprep.subr.bf16.mxu0 0
        %1955 = vmatpush2.bf16.msra.mxu0 0
        %1956 = vmatprep.subr.bf16.mxu0 0
        %1957 = vmatpush2.bf16.msra.mxu0 0
        %1958 = vmatprep.mubr.bf16.mxu0 0
        %1959 = vmatmul.mubr.bf16.gmra.mxu0 %v1566
        %v1960 = vpop.f32.mrf.mxu0
        %v1961 = vadd.f32 0.0, %v1960
        %v1962 = vpop.f32.mrf.mxu0
        %v1963 = vpop.f32.mrf.mxu0
        %v1964 = vadd.f32 0.0, %v1963
        %v1965 = vpop.f32.mrf.mxu0
        %1966 = vdwg.mxu0
        %v1967 = vpack.c.bf16 %v1964, %v1961
        %1968 = vmatprep.subr.bf16.mxu0 0
        %1969 = vmatpush1.bf16.msra.mxu0 0
        %1970 = vmatprep.subr.bf16.mxu0 0
        %1971 = vmatpush1.bf16.msra.mxu0 0
        %1972 = vmatprep.subr.bf16.mxu0 0
        %1973 = vmatpush1.bf16.msra.mxu0 0
        %1974 = vmatprep.subr.bf16.mxu0 0
        %1975 = vmatpush1.bf16.msra.mxu0 0
        %1976 = vmatprep.subr.bf16.mxu0 0
        %1977 = vmatpush1.bf16.msra.mxu0 0
        %1978 = vmatprep.subr.bf16.mxu0 0
        %1979 = vmatpush1.bf16.msra.mxu0 0
        %1980 = vmatprep.subr.bf16.mxu0 0
        %1981 = vmatpush1.bf16.msra.mxu0 0
        %1982 = vmatprep.subr.bf16.mxu0 0
        %1983 = vmatpush1.bf16.msra.mxu0 %v1925
        %1984 = vmatprep.subr.bf16.mxu0 0
        %1985 = vmatpush2.bf16.msra.mxu0 0
        %1986 = vmatprep.subr.bf16.mxu0 0
        %1987 = vmatpush2.bf16.msra.mxu0 0
        %1988 = vmatprep.subr.bf16.mxu0 0
        %1989 = vmatpush2.bf16.msra.mxu0 0
        %1990 = vmatprep.subr.bf16.mxu0 0
        %1991 = vmatpush2.bf16.msra.mxu0 0
        %1992 = vmatprep.subr.bf16.mxu0 0
        %1993 = vmatpush2.bf16.msra.mxu0 0
        %1994 = vmatprep.subr.bf16.mxu0 0
        %1995 = vmatpush2.bf16.msra.mxu0 0
        %1996 = vmatprep.subr.bf16.mxu0 0
        %1997 = vmatpush2.bf16.msra.mxu0 0
        %1998 = vmatprep.subr.bf16.mxu0 0
        %1999 = vmatpush2.bf16.msra.mxu0 0
        %2000 = vmatprep.mubr.bf16.mxu0 0
        %2001 = vmatmul.mubr.bf16.gmra.mxu0 %v1619
        %v2002 = vpop.f32.mrf.mxu0
        %v2003 = vadd.f32 0.0, %v2002
        %v2004 = vpop.f32.mrf.mxu0
        %v2005 = vpop.f32.mrf.mxu0
        %v2006 = vadd.f32 0.0, %v2005
        %v2007 = vpop.f32.mrf.mxu0
        %2008 = vdwg.mxu0
        %v2009 = vpack.c.bf16 %v2006, %v2003
        %v2010 = vld [vmem:[%s25] sm:$0xf]
        %v2011 = vld [vmem:[%s25 + $0x4] sm:$0xf]
        %s2012 = scalar_lea.vmem %s25, 8
        %v2013 = vld [vmem:[%s2012] sm:$0xf]
        %v2014 = vld [vmem:[%s2012 + $0x4] sm:$0xf]
        %v2017 = vunpack.c.l.b16 %v2013
        %v2018 = vunpack.c.l.b16 %v2014
        %v2019 = vpack.c.b16 %v2018, %v2017
        %v2022 = vsel %vm1498, %v1925, 0
        %2024 = vmatprep.subr.bf16.mxu0 0
        %2025 = vmatpush1.bf16.msra.mxu0 0
        %2026 = vmatprep.subr.bf16.mxu0 0
        %2027 = vmatpush1.bf16.msra.mxu0 0
        %2028 = vmatprep.subr.bf16.mxu0 0
        %2029 = vmatpush1.bf16.msra.mxu0 0
        %2030 = vmatprep.subr.bf16.mxu0 0
        %2031 = vmatpush1.bf16.msra.mxu0 0
        %2032 = vmatprep.subr.bf16.mxu0 0
        %2033 = vmatpush1.bf16.msra.mxu0 0
        %2034 = vmatprep.subr.bf16.mxu0 0
        %2035 = vmatpush1.bf16.msra.mxu0 0
        %2036 = vmatprep.subr.bf16.mxu0 0
        %2037 = vmatpush1.bf16.msra.mxu0 0
        %2038 = vmatprep.subr.bf16.mxu0 0
        %2039 = vmatpush1.bf16.msra.mxu0 %v2019
        %2040 = vmatprep.subr.bf16.mxu0 0
        %2041 = vmatpush2.bf16.msra.mxu0 0
        %2042 = vmatprep.subr.bf16.mxu0 0
        %2043 = vmatpush2.bf16.msra.mxu0 0
        %2044 = vmatprep.subr.bf16.mxu0 0
        %2045 = vmatpush2.bf16.msra.mxu0 0
        %2046 = vmatprep.subr.bf16.mxu0 0
        %2047 = vmatpush2.bf16.msra.mxu0 0
        %2048 = vmatprep.subr.bf16.mxu0 0
        %2049 = vmatpush2.bf16.msra.mxu0 0
        %2050 = vmatprep.subr.bf16.mxu0 0
        %2051 = vmatpush2.bf16.msra.mxu0 0
        %2052 = vmatprep.subr.bf16.mxu0 0
        %2053 = vmatpush2.bf16.msra.mxu0 0
        %2054 = vmatprep.subr.bf16.mxu0 0
        %2055 = vmatpush2.bf16.msra.mxu0 0
        %2056 = vmatprep.mubr.bf16.mxu0 0
        %2057 = vmatmul.mubr.bf16.gmra.mxu0 %v2022
        %v2058 = vpop.f32.mrf.mxu0
        %v2059 = vadd.f32 0.0, %v2058
        %v2060 = vpop.f32.mrf.mxu0
        %v2061 = vpop.f32.mrf.mxu0
        %v2062 = vadd.f32 0.0, %v2061
        %v2063 = vpop.f32.mrf.mxu0
        %2064 = vdwg.mxu0
        %v2067 = vunpack.c.l.b16 %v2010
        %v2068 = vunpack.c.l.b16 %v2011
        %v2069 = vpack.c.b16 %v2068, %v2067
        %v2072 = vsel %vm1498, %v1967, 0
        %2074 = vmatprep.subr.bf16.mxu0 0
        %2075 = vmatpush1.bf16.msra.mxu0 0
        %2076 = vmatprep.subr.bf16.mxu0 0
        %2077 = vmatpush1.bf16.msra.mxu0 0
        %2078 = vmatprep.subr.bf16.mxu0 0
        %2079 = vmatpush1.bf16.msra.mxu0 0
        %2080 = vmatprep.subr.bf16.mxu0 0
        %2081 = vmatpush1.bf16.msra.mxu0 0
        %2082 = vmatprep.subr.bf16.mxu0 0
        %2083 = vmatpush1.bf16.msra.mxu0 0
        %2084 = vmatprep.subr.bf16.mxu0 0
        %2085 = vmatpush1.bf16.msra.mxu0 0
        %2086 = vmatprep.subr.bf16.mxu0 0
        %2087 = vmatpush1.bf16.msra.mxu0 0
        %2088 = vmatprep.subr.bf16.mxu0 0
        %2089 = vmatpush1.bf16.msra.mxu0 %v2069
        %2090 = vmatprep.subr.bf16.mxu0 0
        %2091 = vmatpush2.bf16.msra.mxu0 0
        %2092 = vmatprep.subr.bf16.mxu0 0
        %2093 = vmatpush2.bf16.msra.mxu0 0
        %2094 = vmatprep.subr.bf16.mxu0 0
        %2095 = vmatpush2.bf16.msra.mxu0 0
        %2096 = vmatprep.subr.bf16.mxu0 0
        %2097 = vmatpush2.bf16.msra.mxu0 0
        %2098 = vmatprep.subr.bf16.mxu0 0
        %2099 = vmatpush2.bf16.msra.mxu0 0
        %2100 = vmatprep.subr.bf16.mxu0 0
        %2101 = vmatpush2.bf16.msra.mxu0 0
        %2102 = vmatprep.subr.bf16.mxu0 0
        %2103 = vmatpush2.bf16.msra.mxu0 0
        %2104 = vmatprep.subr.bf16.mxu0 0
        %2105 = vmatpush2.bf16.msra.mxu0 0
        %2106 = vmatprep.mubr.bf16.mxu0 0
        %2107 = vmatmul.mubr.bf16.gmra.mxu0 %v2072
        %v2108 = vpop.f32.mrf.mxu0
        %v2109 = vadd.f32 %v2059, %v2108
        %v2110 = vpop.f32.mrf.mxu0
        %v2111 = vpop.f32.mrf.mxu0
        %v2112 = vadd.f32 %v2062, %v2111
        %v2113 = vpop.f32.mrf.mxu0
        %2114 = vdwg.mxu0
        %s2115 = scalar_lea.vmem %s25, 16
        %v2116 = vld [vmem:[%s2115] sm:$0xf]
        %v2117 = vld [vmem:[%s2115 + $0x4] sm:$0xf]
        %v2120 = vunpack.c.l.b16 %v2116
        %v2121 = vunpack.c.l.b16 %v2117
        %v2122 = vpack.c.b16 %v2121, %v2120
        %v2125 = vsel %vm1498, %v2009, 0
        %2127 = vmatprep.subr.bf16.mxu0 0
        %2128 = vmatpush1.bf16.msra.mxu0 0
        %2129 = vmatprep.subr.bf16.mxu0 0
        %2130 = vmatpush1.bf16.msra.mxu0 0
        %2131 = vmatprep.subr.bf16.mxu0 0
        %2132 = vmatpush1.bf16.msra.mxu0 0
        %2133 = vmatprep.subr.bf16.mxu0 0
        %2134 = vmatpush1.bf16.msra.mxu0 0
        %2135 = vmatprep.subr.bf16.mxu0 0
        %2136 = vmatpush1.bf16.msra.mxu0 0
        %2137 = vmatprep.subr.bf16.mxu0 0
        %2138 = vmatpush1.bf16.msra.mxu0 0
        %2139 = vmatprep.subr.bf16.mxu0 0
        %2140 = vmatpush1.bf16.msra.mxu0 0
        %2141 = vmatprep.subr.bf16.mxu0 0
        %2142 = vmatpush1.bf16.msra.mxu0 %v2122
        %2143 = vmatprep.subr.bf16.mxu0 0
        %2144 = vmatpush2.bf16.msra.mxu0 0
        %2145 = vmatprep.subr.bf16.mxu0 0
        %2146 = vmatpush2.bf16.msra.mxu0 0
        %2147 = vmatprep.subr.bf16.mxu0 0
        %2148 = vmatpush2.bf16.msra.mxu0 0
        %2149 = vmatprep.subr.bf16.mxu0 0
        %2150 = vmatpush2.bf16.msra.mxu0 0
        %2151 = vmatprep.subr.bf16.mxu0 0
        %2152 = vmatpush2.bf16.msra.mxu0 0
        %2153 = vmatprep.subr.bf16.mxu0 0
        %2154 = vmatpush2.bf16.msra.mxu0 0
        %2155 = vmatprep.subr.bf16.mxu0 0
        %2156 = vmatpush2.bf16.msra.mxu0 0
        %2157 = vmatprep.subr.bf16.mxu0 0
        %2158 = vmatpush2.bf16.msra.mxu0 0
        %2159 = vmatprep.mubr.bf16.mxu0 0
        %2160 = vmatmul.mubr.bf16.gmra.mxu0 %v2125
        %v2161 = vpop.f32.mrf.mxu0
        %v2162 = vadd.f32 0.0, %v2161
        %v2163 = vpop.f32.mrf.mxu0
        %v2164 = vpop.f32.mrf.mxu0
        %v2165 = vadd.f32 0.0, %v2164
        %v2166 = vpop.f32.mrf.mxu0
        %2167 = vdwg.mxu0
        %v2168 = vadd.f32 %v2109, %v2162
        %v2169 = vadd.f32 %v2112, %v2165
        %2172 = vrot.lane.b32.xlu0 %v2168, 24
        %v2173 = vpop.permute.xlu0 %2172
        %2174 = vrot.lane.b32.xlu0 %v2169, 24
        %v2175 = vpop.permute.xlu0 %2174
        %v2178 = vsel %vm1862, %v1831, %v2173
        %v2179 = vsel %vm1862, %v1832, %v2175
        %v2180 = vld [vmem:[%s27] sm:$0x3]
        %v2181 = vld [vmem:[%s29] sm:$0xf]
        %v2182 = vld [vmem:[%s29 + $0x4] sm:$0xf]
        %v2183 = vld [vmem:[%s29 + $0x8] sm:$0xf]
        %v2184 = vld [vmem:[%s29 + $0xc] sm:$0xf]
        %v2185 = vld [vmem:[%s31] sm:$0xf]
        %v2186 = vlaneseq
        %v2187 = vshrl.u32 %v2186, 7
        %v2188 = vsub.s32 0, %v2187
        %v2189 = vrot.slane %v2180, %v2188
        %v2190 = vmul.f32 %v2178, %v2189
        %v2191 = vmul.f32 %v2179, %v2189
        %v2192 = vlaneseq
        %v2193 = vshrl.u32 %v2192, 7
        %v2194 = vsub.s32 1, %v2193
        %v2195 = vrot.slane %v2180, %v2194
        %v2196 = vadd.f32 %v2190, %v2195
        %v2197 = vadd.f32 %v2191, %v2195
        %v2198 = vmax.f32 %v2196, 0.0
        %v2199 = vmax.f32 %v2197, 0.0
        %v2200 = vpack.c.bf16 %v2199, %v2198
        %v2202 = vsel %vm1498, %v2185, 0
        %2204 = vmatprep.subr.bf16.mxu0 0
        %2205 = vmatpush1.bf16.msra.mxu0 0
        %2206 = vmatprep.subr.bf16.mxu0 0
        %2207 = vmatpush1.bf16.msra.mxu0 0
        %2208 = vmatprep.subr.bf16.mxu0 0
        %2209 = vmatpush1.bf16.msra.mxu0 0
        %2210 = vmatprep.subr.bf16.mxu0 0
        %2211 = vmatpush1.bf16.msra.mxu0 0
        %2212 = vmatprep.subr.bf16.mxu0 0
        %2213 = vmatpush1.bf16.msra.mxu0 0
        %2214 = vmatprep.subr.bf16.mxu0 0
        %2215 = vmatpush1.bf16.msra.mxu0 0
        %2216 = vmatprep.subr.bf16.mxu0 0
        %2217 = vmatpush1.bf16.msra.mxu0 0
        %2218 = vmatprep.subr.bf16.mxu0 0
        %2219 = vmatpush1.bf16.msra.mxu0 %v2200
        %2220 = vmatprep.subr.bf16.mxu0 0
        %2221 = vmatpush2.bf16.msra.mxu0 0
        %2222 = vmatprep.subr.bf16.mxu0 0
        %2223 = vmatpush2.bf16.msra.mxu0 0
        %2224 = vmatprep.subr.bf16.mxu0 0
        %2225 = vmatpush2.bf16.msra.mxu0 0
        %2226 = vmatprep.subr.bf16.mxu0 0
        %2227 = vmatpush2.bf16.msra.mxu0 0
        %2228 = vmatprep.subr.bf16.mxu0 0
        %2229 = vmatpush2.bf16.msra.mxu0 0
        %2230 = vmatprep.subr.bf16.mxu0 0
        %2231 = vmatpush2.bf16.msra.mxu0 0
        %2232 = vmatprep.subr.bf16.mxu0 0
        %2233 = vmatpush2.bf16.msra.mxu0 0
        %2234 = vmatprep.subr.bf16.mxu0 0
        %2235 = vmatpush2.bf16.msra.mxu0 0
        %2236 = vmatprep.mubr.bf16.mxu0 0
        %2237 = vmatmul.mubr.bf16.gmra.mxu0 %v2202
        %v2238 = vpop.f32.mrf.mxu0
        %v2239 = vadd.f32 0.0, %v2238
        %v2240 = vpop.f32.mrf.mxu0
        %v2241 = vpop.f32.mrf.mxu0
        %v2242 = vpop.f32.mrf.mxu0
        %2243 = vdwg.mxu0
        %v2244 = vpack.c.bf16 %v2239, %v2239
        %v2249 = vunpack.c.l.b16 %v2181
        %v2250 = vunpack.c.l.b16 %v2182
        %v2251 = vunpack.c.l.b16 %v2183
        %v2252 = vunpack.c.l.b16 %v2184
        %v2253 = vpack.c.b16 %v2250, %v2249
        %v2254 = vpack.c.b16 %v2252, %v2251
        %v2258 = vsel %vm1320, %v2244, 0
        %2260 = vmatprep.subr.bf16.mxu0 0
        %2261 = vmatpush1.bf16.msra.mxu0 0
        %2262 = vmatprep.subr.bf16.mxu0 0
        %2263 = vmatpush1.bf16.msra.mxu0 0
        %2264 = vmatprep.subr.bf16.mxu0 0
        %2265 = vmatpush1.bf16.msra.mxu0 0
        %2266 = vmatprep.subr.bf16.mxu0 0
        %2267 = vmatpush1.bf16.msra.mxu0 0
        %2268 = vmatprep.subr.bf16.mxu0 0
        %2269 = vmatpush1.bf16.msra.mxu0 0
        %2270 = vmatprep.subr.bf16.mxu0 0
        %2271 = vmatpush1.bf16.msra.mxu0 0
        %2272 = vmatprep.subr.bf16.mxu0 0
        %2273 = vmatpush1.bf16.msra.mxu0 %v2254
        %2274 = vmatprep.subr.bf16.mxu0 0
        %2275 = vmatpush1.bf16.msra.mxu0 %v2253
        %2276 = vmatprep.subr.bf16.mxu0 0
        %2277 = vmatpush2.bf16.msra.mxu0 0
        %2278 = vmatprep.subr.bf16.mxu0 0
        %2279 = vmatpush2.bf16.msra.mxu0 0
        %2280 = vmatprep.subr.bf16.mxu0 0
        %2281 = vmatpush2.bf16.msra.mxu0 0
        %2282 = vmatprep.subr.bf16.mxu0 0
        %2283 = vmatpush2.bf16.msra.mxu0 0
        %2284 = vmatprep.subr.bf16.mxu0 0
        %2285 = vmatpush2.bf16.msra.mxu0 0
        %2286 = vmatprep.subr.bf16.mxu0 0
        %2287 = vmatpush2.bf16.msra.mxu0 0
        %2288 = vmatprep.subr.bf16.mxu0 0
        %2289 = vmatpush2.bf16.msra.mxu0 0
        %2290 = vmatprep.subr.bf16.mxu0 0
        %2291 = vmatpush2.bf16.msra.mxu0 0
        %2292 = vmatprep.mubr.bf16.mxu0 0
        %2293 = vmatmul.mubr.bf16.gmra.mxu0 %v2258
        %v2294 = vpop.f32.mrf.mxu0
        %v2295 = vadd.f32 0.0, %v2294
        %v2296 = vpop.f32.mrf.mxu0
        %v2297 = vpop.f32.mrf.mxu0
        %v2298 = vpop.f32.mrf.mxu0
        %2299 = vdwg.mxu0
        %v2300 = vld [vmem:[%s35] sm:$0x3]
        %v2301 = vld [vmem:[%s37] sm:$0xf]
        %v2302 = vld [vmem:[%s37 + $0x4] sm:$0xf]
        %v2303 = vld [vmem:[%s39] sm:$0x3]
        %v2304 = vlaneseq
        %v2305 = vshrl.u32 %v2304, 7
        %v2306 = vsub.s32 0, %v2305
        %v2307 = vrot.slane %v2300, %v2306
        %v2308 = vmul.f32 %v2295, %v2307
        %v2309 = vlaneseq
        %v2310 = vshrl.u32 %v2309, 7
        %v2311 = vsub.s32 1, %v2310
        %v2312 = vrot.slane %v2300, %v2311
        %v2313 = vadd.f32 %v2308, %v2312
        %v2314 = vmax.f32 %v2313, 0.0
        %v2315 = vpack.c.bf16 %v2314, %v2314
        %v2318 = vunpack.c.l.b16 %v2301
        %v2319 = vunpack.c.l.b16 %v2302
        %v2320 = vpack.c.b16 %v2319, %v2318
        %v2323 = vsel %vm1498, %v2315, 0
        %2325 = vmatprep.subr.bf16.mxu0 0
        %2326 = vmatpush1.bf16.msra.mxu0 0
        %2327 = vmatprep.subr.bf16.mxu0 0
        %2328 = vmatpush1.bf16.msra.mxu0 0
        %2329 = vmatprep.subr.bf16.mxu0 0
        %2330 = vmatpush1.bf16.msra.mxu0 0
        %2331 = vmatprep.subr.bf16.mxu0 0
        %2332 = vmatpush1.bf16.msra.mxu0 0
        %2333 = vmatprep.subr.bf16.mxu0 0
        %2334 = vmatpush1.bf16.msra.mxu0 0
        %2335 = vmatprep.subr.bf16.mxu0 0
        %2336 = vmatpush1.bf16.msra.mxu0 0
        %2337 = vmatprep.subr.bf16.mxu0 0
        %2338 = vmatpush1.bf16.msra.mxu0 0
        %2339 = vmatprep.subr.bf16.mxu0 0
        %2340 = vmatpush1.bf16.msra.mxu0 %v2320
        %2341 = vmatprep.subr.bf16.mxu0 0
        %2342 = vmatpush2.bf16.msra.mxu0 0
        %2343 = vmatprep.subr.bf16.mxu0 0
        %2344 = vmatpush2.bf16.msra.mxu0 0
        %2345 = vmatprep.subr.bf16.mxu0 0
        %2346 = vmatpush2.bf16.msra.mxu0 0
        %2347 = vmatprep.subr.bf16.mxu0 0
        %2348 = vmatpush2.bf16.msra.mxu0 0
        %2349 = vmatprep.subr.bf16.mxu0 0
        %2350 = vmatpush2.bf16.msra.mxu0 0
        %2351 = vmatprep.subr.bf16.mxu0 0
        %2352 = vmatpush2.bf16.msra.mxu0 0
        %2353 = vmatprep.subr.bf16.mxu0 0
        %2354 = vmatpush2.bf16.msra.mxu0 0
        %2355 = vmatprep.subr.bf16.mxu0 0
        %2356 = vmatpush2.bf16.msra.mxu0 0
        %2357 = vmatprep.mubr.bf16.mxu0 0
        %2358 = vmatmul.mubr.bf16.gmra.mxu0 %v2323
        %v2359 = vpop.f32.mrf.mxu0
        %v2360 = vadd.f32 0.0, %v2359
        %v2361 = vpop.f32.mrf.mxu0
        %v2362 = vpop.f32.mrf.mxu0
        %v2363 = vpop.f32.mrf.mxu0
        %2364 = vdwg.mxu0
        %v2365 = vlaneseq
        %v2366 = vshrl.u32 %v2365, 7
        %v2367 = vsub.s32 0, %v2366
        %v2368 = vrot.slane %v2303, %v2367
        %v2369 = vmul.f32 %v2360, %v2368
        %v2370 = vlaneseq
        %v2371 = vshrl.u32 %v2370, 7
        %v2372 = vsub.s32 1, %v2371
        %v2373 = vrot.slane %v2303, %v2372
        %v2374 = vadd.f32 %v2369, %v2373
        %v2375 = vmax.f32 %v2374, 0.0
        %v2376 = vpack.c.bf16 %v2375, %v2375
        %v2377 = vld [vmem:[%s33] sm:$0xf]
        %vm2378 = vcmask 64512
        %v2380 = vsel %vm2378, %v2377, 0
        %v2383 = vsel %vm1866, %v2376, 0
        %2385 = vmatprep.subr.bf16.mxu0 0
        %2386 = vmatpush1.bf16.msra.mxu0 0
        %2387 = vmatprep.subr.bf16.mxu0 0
        %2388 = vmatpush1.bf16.msra.mxu0 0
        %2389 = vmatprep.subr.bf16.mxu0 0
        %2390 = vmatpush1.bf16.msra.mxu0 0
        %2391 = vmatprep.subr.bf16.mxu0 0
        %2392 = vmatpush1.bf16.msra.mxu0 0
        %2393 = vmatprep.subr.bf16.mxu0 0
        %2394 = vmatpush1.bf16.msra.mxu0 0
        %2395 = vmatprep.subr.bf16.mxu0 0
        %2396 = vmatpush1.bf16.msra.mxu0 0
        %2397 = vmatprep.subr.bf16.mxu0 0
        %2398 = vmatpush1.bf16.msra.mxu0 0
        %2399 = vmatprep.subr.bf16.mxu0 0
        %2400 = vmatpush1.bf16.msra.mxu0 %v2383
        %2401 = vmatprep.subr.bf16.mxu0 0
        %2402 = vmatpush2.bf16.msra.mxu0 0
        %2403 = vmatprep.subr.bf16.mxu0 0
        %2404 = vmatpush2.bf16.msra.mxu0 0
        %2405 = vmatprep.subr.bf16.mxu0 0
        %2406 = vmatpush2.bf16.msra.mxu0 0
        %2407 = vmatprep.subr.bf16.mxu0 0
        %2408 = vmatpush2.bf16.msra.mxu0 0
        %2409 = vmatprep.subr.bf16.mxu0 0
        %2410 = vmatpush2.bf16.msra.mxu0 0
        %2411 = vmatprep.subr.bf16.mxu0 0
        %2412 = vmatpush2.bf16.msra.mxu0 0
        %2413 = vmatprep.subr.bf16.mxu0 0
        %2414 = vmatpush2.bf16.msra.mxu0 0
        %2415 = vmatprep.subr.bf16.mxu0 0
        %2416 = vmatpush2.bf16.msra.mxu0 0
        %2417 = vmatprep.mubr.bf16.mxu0 0
        %2418 = vmatmul.mubr.bf16.gmra.mxu0 %v2380
        %v2419 = vpop.f32.mrf.mxu0
        %v2420 = vadd.f32 0.0, %v2419
        %v2421 = vpop.f32.mrf.mxu0
        %v2422 = vpop.f32.mrf.mxu0
        %v2423 = vpop.f32.mrf.mxu0
        %2424 = vdwg.mxu0
        %v2425 = vpack.c.bf16 %v2420, %v2420
        %s2426 = scalar_lea.vmem %s33, 4
        %v2427 = vld [vmem:[%s2426] sm:$0xf]
        %v2429 = vsel %vm2378, %v2427, 0
        %2431 = vmatprep.subr.bf16.mxu0 0
        %2432 = vmatpush1.bf16.msra.mxu0 0
        %2433 = vmatprep.subr.bf16.mxu0 0
        %2434 = vmatpush1.bf16.msra.mxu0 0
        %2435 = vmatprep.subr.bf16.mxu0 0
        %2436 = vmatpush1.bf16.msra.mxu0 0
        %2437 = vmatprep.subr.bf16.mxu0 0
        %2438 = vmatpush1.bf16.msra.mxu0 0
        %2439 = vmatprep.subr.bf16.mxu0 0
        %2440 = vmatpush1.bf16.msra.mxu0 0
        %2441 = vmatprep.subr.bf16.mxu0 0
        %2442 = vmatpush1.bf16.msra.mxu0 0
        %2443 = vmatprep.subr.bf16.mxu0 0
        %2444 = vmatpush1.bf16.msra.mxu0 0
        %2445 = vmatprep.subr.bf16.mxu0 0
        %2446 = vmatpush1.bf16.msra.mxu0 %v2383
        %2447 = vmatprep.subr.bf16.mxu0 0
        %2448 = vmatpush2.bf16.msra.mxu0 0
        %2449 = vmatprep.subr.bf16.mxu0 0
        %2450 = vmatpush2.bf16.msra.mxu0 0
        %2451 = vmatprep.subr.bf16.mxu0 0
        %2452 = vmatpush2.bf16.msra.mxu0 0
        %2453 = vmatprep.subr.bf16.mxu0 0
        %2454 = vmatpush2.bf16.msra.mxu0 0
        %2455 = vmatprep.subr.bf16.mxu0 0
        %2456 = vmatpush2.bf16.msra.mxu0 0
        %2457 = vmatprep.subr.bf16.mxu0 0
        %2458 = vmatpush2.bf16.msra.mxu0 0
        %2459 = vmatprep.subr.bf16.mxu0 0
        %2460 = vmatpush2.bf16.msra.mxu0 0
        %2461 = vmatprep.subr.bf16.mxu0 0
        %2462 = vmatpush2.bf16.msra.mxu0 0
        %2463 = vmatprep.mubr.bf16.mxu0 0
        %2464 = vmatmul.mubr.bf16.gmra.mxu0 %v2429
        %v2465 = vpop.f32.mrf.mxu0
        %v2466 = vadd.f32 0.0, %v2465
        %v2467 = vpop.f32.mrf.mxu0
        %v2468 = vpop.f32.mrf.mxu0
        %v2469 = vpop.f32.mrf.mxu0
        %2470 = vdwg.mxu0
        %v2471 = vpack.c.bf16 %v2466, %v2466
        %v2472 = vld [vmem:[%s41] sm:$0xf]
        %v2473 = vld [vmem:[%s41 + $0x4] sm:$0xf]
        %s2474 = scalar_lea.vmem %s41, 8
        %v2475 = vld [vmem:[%s2474] sm:$0xf]
        %v2476 = vld [vmem:[%s2474 + $0x4] sm:$0xf]
        %v2479 = vunpack.c.l.b16 %v2475
        %v2480 = vunpack.c.l.b16 %v2476
        %v2481 = vpack.c.b16 %v2480, %v2479
        %v2483 = vsel %vm1498, %v2376, 0
        %2485 = vmatprep.subr.bf16.mxu0 0
        %2486 = vmatpush1.bf16.msra.mxu0 0
        %2487 = vmatprep.subr.bf16.mxu0 0
        %2488 = vmatpush1.bf16.msra.mxu0 0
        %2489 = vmatprep.subr.bf16.mxu0 0
        %2490 = vmatpush1.bf16.msra.mxu0 0
        %2491 = vmatprep.subr.bf16.mxu0 0
        %2492 = vmatpush1.bf16.msra.mxu0 0
        %2493 = vmatprep.subr.bf16.mxu0 0
        %2494 = vmatpush1.bf16.msra.mxu0 0
        %2495 = vmatprep.subr.bf16.mxu0 0
        %2496 = vmatpush1.bf16.msra.mxu0 0
        %2497 = vmatprep.subr.bf16.mxu0 0
        %2498 = vmatpush1.bf16.msra.mxu0 0
        %2499 = vmatprep.subr.bf16.mxu0 0
        %2500 = vmatpush1.bf16.msra.mxu0 %v2481
        %2501 = vmatprep.subr.bf16.mxu0 0
        %2502 = vmatpush2.bf16.msra.mxu0 0
        %2503 = vmatprep.subr.bf16.mxu0 0
        %2504 = vmatpush2.bf16.msra.mxu0 0
        %2505 = vmatprep.subr.bf16.mxu0 0
        %2506 = vmatpush2.bf16.msra.mxu0 0
        %2507 = vmatprep.subr.bf16.mxu0 0
        %2508 = vmatpush2.bf16.msra.mxu0 0
        %2509 = vmatprep.subr.bf16.mxu0 0
        %2510 = vmatpush2.bf16.msra.mxu0 0
        %2511 = vmatprep.subr.bf16.mxu0 0
        %2512 = vmatpush2.bf16.msra.mxu0 0
        %2513 = vmatprep.subr.bf16.mxu0 0
        %2514 = vmatpush2.bf16.msra.mxu0 0
        %2515 = vmatprep.subr.bf16.mxu0 0
        %2516 = vmatpush2.bf16.msra.mxu0 0
        %2517 = vmatprep.mubr.bf16.mxu0 0
        %2518 = vmatmul.mubr.bf16.gmra.mxu0 %v2483
        %v2519 = vpop.f32.mrf.mxu0
        %v2520 = vadd.f32 0.0, %v2519
        %v2521 = vpop.f32.mrf.mxu0
        %v2522 = vpop.f32.mrf.mxu0
        %v2523 = vpop.f32.mrf.mxu0
        %2524 = vdwg.mxu0
        %v2527 = vunpack.c.l.b16 %v2472
        %v2528 = vunpack.c.l.b16 %v2473
        %v2529 = vpack.c.b16 %v2528, %v2527
        %v2532 = vsel %vm1498, %v2425, 0
        %2534 = vmatprep.subr.bf16.mxu0 0
        %2535 = vmatpush1.bf16.msra.mxu0 0
        %2536 = vmatprep.subr.bf16.mxu0 0
        %2537 = vmatpush1.bf16.msra.mxu0 0
        %2538 = vmatprep.subr.bf16.mxu0 0
        %2539 = vmatpush1.bf16.msra.mxu0 0
        %2540 = vmatprep.subr.bf16.mxu0 0
        %2541 = vmatpush1.bf16.msra.mxu0 0
        %2542 = vmatprep.subr.bf16.mxu0 0
        %2543 = vmatpush1.bf16.msra.mxu0 0
        %2544 = vmatprep.subr.bf16.mxu0 0
        %2545 = vmatpush1.bf16.msra.mxu0 0
        %2546 = vmatprep.subr.bf16.mxu0 0
        %2547 = vmatpush1.bf16.msra.mxu0 0
        %2548 = vmatprep.subr.bf16.mxu0 0
        %2549 = vmatpush1.bf16.msra.mxu0 %v2529
        %2550 = vmatprep.subr.bf16.mxu0 0
        %2551 = vmatpush2.bf16.msra.mxu0 0
        %2552 = vmatprep.subr.bf16.mxu0 0
        %2553 = vmatpush2.bf16.msra.mxu0 0
        %2554 = vmatprep.subr.bf16.mxu0 0
        %2555 = vmatpush2.bf16.msra.mxu0 0
        %2556 = vmatprep.subr.bf16.mxu0 0
        %2557 = vmatpush2.bf16.msra.mxu0 0
        %2558 = vmatprep.subr.bf16.mxu0 0
        %2559 = vmatpush2.bf16.msra.mxu0 0
        %2560 = vmatprep.subr.bf16.mxu0 0
        %2561 = vmatpush2.bf16.msra.mxu0 0
        %2562 = vmatprep.subr.bf16.mxu0 0
        %2563 = vmatpush2.bf16.msra.mxu0 0
        %2564 = vmatprep.subr.bf16.mxu0 0
        %2565 = vmatpush2.bf16.msra.mxu0 0
        %2566 = vmatprep.mubr.bf16.mxu0 0
        %2567 = vmatmul.mubr.bf16.gmra.mxu0 %v2532
        %v2568 = vpop.f32.mrf.mxu0
        %v2569 = vadd.f32 %v2520, %v2568
        %v2570 = vpop.f32.mrf.mxu0
        %v2571 = vpop.f32.mrf.mxu0
        %v2572 = vpop.f32.mrf.mxu0
        %2573 = vdwg.mxu0
        %s2574 = scalar_lea.vmem %s41, 16
        %v2575 = vld [vmem:[%s2574] sm:$0xf]
        %v2576 = vld [vmem:[%s2574 + $0x4] sm:$0xf]
        %v2579 = vunpack.c.l.b16 %v2575
        %v2580 = vunpack.c.l.b16 %v2576
        %v2581 = vpack.c.b16 %v2580, %v2579
        %v2584 = vsel %vm1498, %v2471, 0
        %2586 = vmatprep.subr.bf16.mxu0 0
        %2587 = vmatpush1.bf16.msra.mxu0 0
        %2588 = vmatprep.subr.bf16.mxu0 0
        %2589 = vmatpush1.bf16.msra.mxu0 0
        %2590 = vmatprep.subr.bf16.mxu0 0
        %2591 = vmatpush1.bf16.msra.mxu0 0
        %2592 = vmatprep.subr.bf16.mxu0 0
        %2593 = vmatpush1.bf16.msra.mxu0 0
        %2594 = vmatprep.subr.bf16.mxu0 0
        %2595 = vmatpush1.bf16.msra.mxu0 0
        %2596 = vmatprep.subr.bf16.mxu0 0
        %2597 = vmatpush1.bf16.msra.mxu0 0
        %2598 = vmatprep.subr.bf16.mxu0 0
        %2599 = vmatpush1.bf16.msra.mxu0 0
        %2600 = vmatprep.subr.bf16.mxu0 0
        %2601 = vmatpush1.bf16.msra.mxu0 %v2581
        %2602 = vmatprep.subr.bf16.mxu0 0
        %2603 = vmatpush2.bf16.msra.mxu0 0
        %2604 = vmatprep.subr.bf16.mxu0 0
        %2605 = vmatpush2.bf16.msra.mxu0 0
        %2606 = vmatprep.subr.bf16.mxu0 0
        %2607 = vmatpush2.bf16.msra.mxu0 0
        %2608 = vmatprep.subr.bf16.mxu0 0
        %2609 = vmatpush2.bf16.msra.mxu0 0
        %2610 = vmatprep.subr.bf16.mxu0 0
        %2611 = vmatpush2.bf16.msra.mxu0 0
        %2612 = vmatprep.subr.bf16.mxu0 0
        %2613 = vmatpush2.bf16.msra.mxu0 0
        %2614 = vmatprep.subr.bf16.mxu0 0
        %2615 = vmatpush2.bf16.msra.mxu0 0
        %2616 = vmatprep.subr.bf16.mxu0 0
        %2617 = vmatpush2.bf16.msra.mxu0 0
        %2618 = vmatprep.mubr.bf16.mxu0 0
        %2619 = vmatmul.mubr.bf16.gmra.mxu0 %v2584
        %v2620 = vpop.f32.mrf.mxu0
        %v2621 = vadd.f32 0.0, %v2620
        %v2622 = vpop.f32.mrf.mxu0
        %v2623 = vpop.f32.mrf.mxu0
        %v2624 = vpop.f32.mrf.mxu0
        %2625 = vdwg.mxu0
        %v2626 = vadd.f32 %v2569, %v2621
        %2628 = vrot.lane.b32.xlu0 %v2626, 16
        %v2629 = vpop.permute.xlu0 %2628
        %v2631 = vsel %vm1498, %v2295, %v2629
        %v2632 = vld [vmem:[%s43] sm:$0x3]
        %v2633 = vld [vmem:[%s45] sm:$0xf]
        %v2634 = vld [vmem:[%s45 + $0x4] sm:$0xf]
        %v2635 = vld [vmem:[%s45 + $0x8] sm:$0xf]
        %v2636 = vld [vmem:[%s47] sm:$0x3]
        %v2637 = vlaneseq
        %v2638 = vshrl.u32 %v2637, 7
        %v2639 = vsub.s32 0, %v2638
        %v2640 = vrot.slane %v2632, %v2639
        %v2641 = vmul.f32 %v2631, %v2640
        %v2642 = vlaneseq
        %v2643 = vshrl.u32 %v2642, 7
        %v2644 = vsub.s32 1, %v2643
        %v2645 = vrot.slane %v2632, %v2644
        %v2646 = vadd.f32 %v2641, %v2645
        %v2647 = vmax.f32 %v2646, 0.0
        %v2648 = vpack.c.bf16 %v2647, %v2647
        %v2652 = vunpack.c.l.b16 %v2633
        %v2653 = vunpack.c.l.b16 %v2634
        %v2654 = vunpack.c.l.b16 %v2635
        %v2655 = vpack.c.b16 %v2653, %v2652
        %v2656 = vpack.c.b16 %v2654, %v2654
        %v2659 = vsel %vm1862, %v2648, 0
        %v2662 = vsel %vm1866, %v2656, 0
        %2664 = vmatprep.subr.bf16.mxu0 0
        %2665 = vmatpush1.bf16.msra.mxu0 0
        %2666 = vmatprep.subr.bf16.mxu0 0
        %2667 = vmatpush1.bf16.msra.mxu0 0
        %2668 = vmatprep.subr.bf16.mxu0 0
        %2669 = vmatpush1.bf16.msra.mxu0 0
        %2670 = vmatprep.subr.bf16.mxu0 0
        %2671 = vmatpush1.bf16.msra.mxu0 0
        %2672 = vmatprep.subr.bf16.mxu0 0
        %2673 = vmatpush1.bf16.msra.mxu0 0
        %2674 = vmatprep.subr.bf16.mxu0 0
        %2675 = vmatpush1.bf16.msra.mxu0 0
        %2676 = vmatprep.subr.bf16.mxu0 0
        %2677 = vmatpush1.bf16.msra.mxu0 %v2662
        %2678 = vmatprep.subr.bf16.mxu0 0
        %2679 = vmatpush1.bf16.msra.mxu0 %v2655
        %2680 = vmatprep.subr.bf16.mxu0 0
        %2681 = vmatpush2.bf16.msra.mxu0 0
        %2682 = vmatprep.subr.bf16.mxu0 0
        %2683 = vmatpush2.bf16.msra.mxu0 0
        %2684 = vmatprep.subr.bf16.mxu0 0
        %2685 = vmatpush2.bf16.msra.mxu0 0
        %2686 = vmatprep.subr.bf16.mxu0 0
        %2687 = vmatpush2.bf16.msra.mxu0 0
        %2688 = vmatprep.subr.bf16.mxu0 0
        %2689 = vmatpush2.bf16.msra.mxu0 0
        %2690 = vmatprep.subr.bf16.mxu0 0
        %2691 = vmatpush2.bf16.msra.mxu0 0
        %2692 = vmatprep.subr.bf16.mxu0 0
        %2693 = vmatpush2.bf16.msra.mxu0 0
        %2694 = vmatprep.subr.bf16.mxu0 0
        %2695 = vmatpush2.bf16.msra.mxu0 0
        %2696 = vmatprep.mubr.bf16.mxu0 0
        %2697 = vmatmul.mubr.bf16.gmra.mxu0 %v2659
        %v2698 = vpop.f32.mrf.mxu0
        %v2699 = vadd.f32 0.0, %v2698
        %v2700 = vpop.f32.mrf.mxu0
        %v2701 = vpop.f32.mrf.mxu0
        %v2702 = vpop.f32.mrf.mxu0
        %2703 = vdwg.mxu0
        %v2704 = vlaneseq
        %v2705 = vshrl.u32 %v2704, 7
        %v2706 = vsub.s32 0, %v2705
        %v2707 = vrot.slane %v2636, %v2706
        %v2708 = vmul.f32 %v2699, %v2707
        %v2709 = vlaneseq
        %v2710 = vshrl.u32 %v2709, 7
        %v2711 = vsub.s32 1, %v2710
        %v2712 = vrot.slane %v2636, %v2711
        %v2713 = vadd.f32 %v2708, %v2712
        %v2714 = vmax.f32 %v2713, 0.0
        %v2715 = vpack.c.bf16 %v2714, %v2714
        %v2717 = vsel %vm1866, %v2715, 0
        %2719 = vmatprep.subr.bf16.mxu0 0
        %2720 = vmatpush1.bf16.msra.mxu0 0
        %2721 = vmatprep.subr.bf16.mxu0 0
        %2722 = vmatpush1.bf16.msra.mxu0 0
        %2723 = vmatprep.subr.bf16.mxu0 0
        %2724 = vmatpush1.bf16.msra.mxu0 0
        %2725 = vmatprep.subr.bf16.mxu0 0
        %2726 = vmatpush1.bf16.msra.mxu0 0
        %2727 = vmatprep.subr.bf16.mxu0 0
        %2728 = vmatpush1.bf16.msra.mxu0 0
        %2729 = vmatprep.subr.bf16.mxu0 0
        %2730 = vmatpush1.bf16.msra.mxu0 0
        %2731 = vmatprep.subr.bf16.mxu0 0
        %2732 = vmatpush1.bf16.msra.mxu0 0
        %2733 = vmatprep.subr.bf16.mxu0 0
        %2734 = vmatpush1.bf16.msra.mxu0 %v2717
        %2735 = vmatprep.subr.bf16.mxu0 0
        %2736 = vmatpush2.bf16.msra.mxu0 0
        %2737 = vmatprep.subr.bf16.mxu0 0
        %2738 = vmatpush2.bf16.msra.mxu0 0
        %2739 = vmatprep.subr.bf16.mxu0 0
        %2740 = vmatpush2.bf16.msra.mxu0 0
        %2741 = vmatprep.subr.bf16.mxu0 0
        %2742 = vmatpush2.bf16.msra.mxu0 0
        %2743 = vmatprep.subr.bf16.mxu0 0
        %2744 = vmatpush2.bf16.msra.mxu0 0
        %2745 = vmatprep.subr.bf16.mxu0 0
        %2746 = vmatpush2.bf16.msra.mxu0 0
        %2747 = vmatprep.subr.bf16.mxu0 0
        %2748 = vmatpush2.bf16.msra.mxu0 0
        %2749 = vmatprep.subr.bf16.mxu0 0
        %2750 = vmatpush2.bf16.msra.mxu0 0
        %2751 = vmatprep.mubr.bf16.mxu0 0
        %2752 = vmatmul.mubr.bf16.gmra.mxu0 %v2380
        %v2753 = vpop.f32.mrf.mxu0
        %v2754 = vadd.f32 0.0, %v2753
        %v2755 = vpop.f32.mrf.mxu0
        %v2756 = vpop.f32.mrf.mxu0
        %v2757 = vpop.f32.mrf.mxu0
        %2758 = vdwg.mxu0
        %v2759 = vpack.c.bf16 %v2754, %v2754
        %2760 = vmatprep.subr.bf16.mxu0 0
        %2761 = vmatpush1.bf16.msra.mxu0 0
        %2762 = vmatprep.subr.bf16.mxu0 0
        %2763 = vmatpush1.bf16.msra.mxu0 0
        %2764 = vmatprep.subr.bf16.mxu0 0
        %2765 = vmatpush1.bf16.msra.mxu0 0
        %2766 = vmatprep.subr.bf16.mxu0 0
        %2767 = vmatpush1.bf16.msra.mxu0 0
        %2768 = vmatprep.subr.bf16.mxu0 0
        %2769 = vmatpush1.bf16.msra.mxu0 0
        %2770 = vmatprep.subr.bf16.mxu0 0
        %2771 = vmatpush1.bf16.msra.mxu0 0
        %2772 = vmatprep.subr.bf16.mxu0 0
        %2773 = vmatpush1.bf16.msra.mxu0 0
        %2774 = vmatprep.subr.bf16.mxu0 0
        %2775 = vmatpush1.bf16.msra.mxu0 %v2717
        %2776 = vmatprep.subr.bf16.mxu0 0
        %2777 = vmatpush2.bf16.msra.mxu0 0
        %2778 = vmatprep.subr.bf16.mxu0 0
        %2779 = vmatpush2.bf16.msra.mxu0 0
        %2780 = vmatprep.subr.bf16.mxu0 0
        %2781 = vmatpush2.bf16.msra.mxu0 0
        %2782 = vmatprep.subr.bf16.mxu0 0
        %2783 = vmatpush2.bf16.msra.mxu0 0
        %2784 = vmatprep.subr.bf16.mxu0 0
        %2785 = vmatpush2.bf16.msra.mxu0 0
        %2786 = vmatprep.subr.bf16.mxu0 0
        %2787 = vmatpush2.bf16.msra.mxu0 0
        %2788 = vmatprep.subr.bf16.mxu0 0
        %2789 = vmatpush2.bf16.msra.mxu0 0
        %2790 = vmatprep.subr.bf16.mxu0 0
        %2791 = vmatpush2.bf16.msra.mxu0 0
        %2792 = vmatprep.mubr.bf16.mxu0 0
        %2793 = vmatmul.mubr.bf16.gmra.mxu0 %v2429
        %v2794 = vpop.f32.mrf.mxu0
        %v2795 = vadd.f32 0.0, %v2794
        %v2796 = vpop.f32.mrf.mxu0
        %v2797 = vpop.f32.mrf.mxu0
        %v2798 = vpop.f32.mrf.mxu0
        %2799 = vdwg.mxu0
        %v2800 = vpack.c.bf16 %v2795, %v2795
        %v2801 = vld [vmem:[%s49] sm:$0xf]
        %v2802 = vld [vmem:[%s49 + $0x4] sm:$0xf]
        %s2803 = scalar_lea.vmem %s49, 8
        %v2804 = vld [vmem:[%s2803] sm:$0xf]
        %v2805 = vld [vmem:[%s2803 + $0x4] sm:$0xf]
        %v2808 = vunpack.c.l.b16 %v2804
        %v2809 = vunpack.c.l.b16 %v2805
        %v2810 = vpack.c.b16 %v2809, %v2808
        %v2812 = vsel %vm1498, %v2715, 0
        %2814 = vmatprep.subr.bf16.mxu0 0
        %2815 = vmatpush1.bf16.msra.mxu0 0
        %2816 = vmatprep.subr.bf16.mxu0 0
        %2817 = vmatpush1.bf16.msra.mxu0 0
        %2818 = vmatprep.subr.bf16.mxu0 0
        %2819 = vmatpush1.bf16.msra.mxu0 0
        %2820 = vmatprep.subr.bf16.mxu0 0
        %2821 = vmatpush1.bf16.msra.mxu0 0
        %2822 = vmatprep.subr.bf16.mxu0 0
        %2823 = vmatpush1.bf16.msra.mxu0 0
        %2824 = vmatprep.subr.bf16.mxu0 0
        %2825 = vmatpush1.bf16.msra.mxu0 0
        %2826 = vmatprep.subr.bf16.mxu0 0
        %2827 = vmatpush1.bf16.msra.mxu0 0
        %2828 = vmatprep.subr.bf16.mxu0 0
        %2829 = vmatpush1.bf16.msra.mxu0 %v2810
        %2830 = vmatprep.subr.bf16.mxu0 0
        %2831 = vmatpush2.bf16.msra.mxu0 0
        %2832 = vmatprep.subr.bf16.mxu0 0
        %2833 = vmatpush2.bf16.msra.mxu0 0
        %2834 = vmatprep.subr.bf16.mxu0 0
        %2835 = vmatpush2.bf16.msra.mxu0 0
        %2836 = vmatprep.subr.bf16.mxu0 0
        %2837 = vmatpush2.bf16.msra.mxu0 0
        %2838 = vmatprep.subr.bf16.mxu0 0
        %2839 = vmatpush2.bf16.msra.mxu0 0
        %2840 = vmatprep.subr.bf16.mxu0 0
        %2841 = vmatpush2.bf16.msra.mxu0 0
        %2842 = vmatprep.subr.bf16.mxu0 0
        %2843 = vmatpush2.bf16.msra.mxu0 0
        %2844 = vmatprep.subr.bf16.mxu0 0
        %2845 = vmatpush2.bf16.msra.mxu0 0
        %2846 = vmatprep.mubr.bf16.mxu0 0
        %2847 = vmatmul.mubr.bf16.gmra.mxu0 %v2812
        %v2848 = vpop.f32.mrf.mxu0
        %v2849 = vadd.f32 0.0, %v2848
        %v2850 = vpop.f32.mrf.mxu0
        %v2851 = vpop.f32.mrf.mxu0
        %v2852 = vpop.f32.mrf.mxu0
        %2853 = vdwg.mxu0
        %v2856 = vunpack.c.l.b16 %v2801
        %v2857 = vunpack.c.l.b16 %v2802
        %v2858 = vpack.c.b16 %v2857, %v2856
        %v2861 = vsel %vm1498, %v2759, 0
        %2863 = vmatprep.subr.bf16.mxu0 0
        %2864 = vmatpush1.bf16.msra.mxu0 0
        %2865 = vmatprep.subr.bf16.mxu0 0
        %2866 = vmatpush1.bf16.msra.mxu0 0
        %2867 = vmatprep.subr.bf16.mxu0 0
        %2868 = vmatpush1.bf16.msra.mxu0 0
        %2869 = vmatprep.subr.bf16.mxu0 0
        %2870 = vmatpush1.bf16.msra.mxu0 0
        %2871 = vmatprep.subr.bf16.mxu0 0
        %2872 = vmatpush1.bf16.msra.mxu0 0
        %2873 = vmatprep.subr.bf16.mxu0 0
        %2874 = vmatpush1.bf16.msra.mxu0 0
        %2875 = vmatprep.subr.bf16.mxu0 0
        %2876 = vmatpush1.bf16.msra.mxu0 0
        %2877 = vmatprep.subr.bf16.mxu0 0
        %2878 = vmatpush1.bf16.msra.mxu0 %v2858
        %2879 = vmatprep.subr.bf16.mxu0 0
        %2880 = vmatpush2.bf16.msra.mxu0 0
        %2881 = vmatprep.subr.bf16.mxu0 0
        %2882 = vmatpush2.bf16.msra.mxu0 0
        %2883 = vmatprep.subr.bf16.mxu0 0
        %2884 = vmatpush2.bf16.msra.mxu0 0
        %2885 = vmatprep.subr.bf16.mxu0 0
        %2886 = vmatpush2.bf16.msra.mxu0 0
        %2887 = vmatprep.subr.bf16.mxu0 0
        %2888 = vmatpush2.bf16.msra.mxu0 0
        %2889 = vmatprep.subr.bf16.mxu0 0
        %2890 = vmatpush2.bf16.msra.mxu0 0
        %2891 = vmatprep.subr.bf16.mxu0 0
        %2892 = vmatpush2.bf16.msra.mxu0 0
        %2893 = vmatprep.subr.bf16.mxu0 0
        %2894 = vmatpush2.bf16.msra.mxu0 0
        %2895 = vmatprep.mubr.bf16.mxu0 0
        %2896 = vmatmul.mubr.bf16.gmra.mxu0 %v2861
        %v2897 = vpop.f32.mrf.mxu0
        %v2898 = vadd.f32 %v2849, %v2897
        %v2899 = vpop.f32.mrf.mxu0
        %v2900 = vpop.f32.mrf.mxu0
        %v2901 = vpop.f32.mrf.mxu0
        %2902 = vdwg.mxu0
        %s2903 = scalar_lea.vmem %s49, 16
        %v2904 = vld [vmem:[%s2903] sm:$0xf]
        %v2905 = vld [vmem:[%s2903 + $0x4] sm:$0xf]
        %v2908 = vunpack.c.l.b16 %v2904
        %v2909 = vunpack.c.l.b16 %v2905
        %v2910 = vpack.c.b16 %v2909, %v2908
        %v2913 = vsel %vm1498, %v2800, 0
        %2915 = vmatprep.subr.bf16.mxu0 0
        %2916 = vmatpush1.bf16.msra.mxu0 0
        %2917 = vmatprep.subr.bf16.mxu0 0
        %2918 = vmatpush1.bf16.msra.mxu0 0
        %2919 = vmatprep.subr.bf16.mxu0 0
        %2920 = vmatpush1.bf16.msra.mxu0 0
        %2921 = vmatprep.subr.bf16.mxu0 0
        %2922 = vmatpush1.bf16.msra.mxu0 0
        %2923 = vmatprep.subr.bf16.mxu0 0
        %2924 = vmatpush1.bf16.msra.mxu0 0
        %2925 = vmatprep.subr.bf16.mxu0 0
        %2926 = vmatpush1.bf16.msra.mxu0 0
        %2927 = vmatprep.subr.bf16.mxu0 0
        %2928 = vmatpush1.bf16.msra.mxu0 0
        %2929 = vmatprep.subr.bf16.mxu0 0
        %2930 = vmatpush1.bf16.msra.mxu0 %v2910
        %2931 = vmatprep.subr.bf16.mxu0 0
        %2932 = vmatpush2.bf16.msra.mxu0 0
        %2933 = vmatprep.subr.bf16.mxu0 0
        %2934 = vmatpush2.bf16.msra.mxu0 0
        %2935 = vmatprep.subr.bf16.mxu0 0
        %2936 = vmatpush2.bf16.msra.mxu0 0
        %2937 = vmatprep.subr.bf16.mxu0 0
        %2938 = vmatpush2.bf16.msra.mxu0 0
        %2939 = vmatprep.subr.bf16.mxu0 0
        %2940 = vmatpush2.bf16.msra.mxu0 0
        %2941 = vmatprep.subr.bf16.mxu0 0
        %2942 = vmatpush2.bf16.msra.mxu0 0
        %2943 = vmatprep.subr.bf16.mxu0 0
        %2944 = vmatpush2.bf16.msra.mxu0 0
        %2945 = vmatprep.subr.bf16.mxu0 0
        %2946 = vmatpush2.bf16.msra.mxu0 0
        %2947 = vmatprep.mubr.bf16.mxu0 0
        %2948 = vmatmul.mubr.bf16.gmra.mxu0 %v2913
        %v2949 = vpop.f32.mrf.mxu0
        %v2950 = vadd.f32 0.0, %v2949
        %v2951 = vpop.f32.mrf.mxu0
        %v2952 = vpop.f32.mrf.mxu0
        %v2953 = vpop.f32.mrf.mxu0
        %2954 = vdwg.mxu0
        %v2955 = vadd.f32 %v2898, %v2950
        %2957 = vrot.lane.b32.xlu0 %v2955, 24
        %v2958 = vpop.permute.xlu0 %2957
        %v2960 = vsel %vm1862, %v2631, %v2958
        %v2961 = vld [vmem:[%s51] sm:$0x3]
        %v2962 = vld [vmem:[%s53] sm:$0xf]
        %v2963 = vld [vmem:[%s53 + $0x4] sm:$0xf]
        %v2964 = vld [vmem:[%s53 + $0x8] sm:$0xf]
        %v2965 = vld [vmem:[%s53 + $0xc] sm:$0xf]
        %v2966 = vld [vmem:[%s55] sm:$0x3]
        %v2967 = vlaneseq
        %v2968 = vshrl.u32 %v2967, 7
        %v2969 = vsub.s32 0, %v2968
        %v2970 = vrot.slane %v2961, %v2969
        %v2971 = vmul.f32 %v2960, %v2970
        %v2972 = vlaneseq
        %v2973 = vshrl.u32 %v2972, 7
        %v2974 = vsub.s32 1, %v2973
        %v2975 = vrot.slane %v2961, %v2974
        %v2976 = vadd.f32 %v2971, %v2975
        %v2977 = vmax.f32 %v2976, 0.0
        %v2978 = vpack.c.bf16 %v2977, %v2977
        %v2980 = vsel %vm2378, %v2966, 0
        %v2983 = vsel %vm1866, %v2978, 0
        %2985 = vmatprep.subr.bf16.mxu0 0
        %2986 = vmatpush1.bf16.msra.mxu0 0
        %2987 = vmatprep.subr.bf16.mxu0 0
        %2988 = vmatpush1.bf16.msra.mxu0 0
        %2989 = vmatprep.subr.bf16.mxu0 0
        %2990 = vmatpush1.bf16.msra.mxu0 0
        %2991 = vmatprep.subr.bf16.mxu0 0
        %2992 = vmatpush1.bf16.msra.mxu0 0
        %2993 = vmatprep.subr.bf16.mxu0 0
        %2994 = vmatpush1.bf16.msra.mxu0 0
        %2995 = vmatprep.subr.bf16.mxu0 0
        %2996 = vmatpush1.bf16.msra.mxu0 0
        %2997 = vmatprep.subr.bf16.mxu0 0
        %2998 = vmatpush1.bf16.msra.mxu0 0
        %2999 = vmatprep.subr.bf16.mxu0 0
        %3000 = vmatpush1.bf16.msra.mxu0 %v2983
        %3001 = vmatprep.subr.bf16.mxu0 0
        %3002 = vmatpush2.bf16.msra.mxu0 0
        %3003 = vmatprep.subr.bf16.mxu0 0
        %3004 = vmatpush2.bf16.msra.mxu0 0
        %3005 = vmatprep.subr.bf16.mxu0 0
        %3006 = vmatpush2.bf16.msra.mxu0 0
        %3007 = vmatprep.subr.bf16.mxu0 0
        %3008 = vmatpush2.bf16.msra.mxu0 0
        %3009 = vmatprep.subr.bf16.mxu0 0
        %3010 = vmatpush2.bf16.msra.mxu0 0
        %3011 = vmatprep.subr.bf16.mxu0 0
        %3012 = vmatpush2.bf16.msra.mxu0 0
        %3013 = vmatprep.subr.bf16.mxu0 0
        %3014 = vmatpush2.bf16.msra.mxu0 0
        %3015 = vmatprep.subr.bf16.mxu0 0
        %3016 = vmatpush2.bf16.msra.mxu0 0
        %3017 = vmatprep.mubr.bf16.mxu0 0
        %3018 = vmatmul.mubr.bf16.gmra.mxu0 %v2980
        %v3019 = vpop.f32.mrf.mxu0
        %v3020 = vadd.f32 0.0, %v3019
        %v3021 = vpop.f32.mrf.mxu0
        %v3022 = vpop.f32.mrf.mxu0
        %v3023 = vpop.f32.mrf.mxu0
        %3024 = vdwg.mxu0
        %v3025 = vpack.c.bf16 %v3020, %v3020
        %v3030 = vunpack.c.l.b16 %v2962
        %v3031 = vunpack.c.l.b16 %v2963
        %v3032 = vunpack.c.l.b16 %v2964
        %v3033 = vunpack.c.l.b16 %v2965
        %v3034 = vpack.c.b16 %v3031, %v3030
        %v3035 = vpack.c.b16 %v3033, %v3032
        %v3039 = vsel %vm1320, %v3025, 0
        %3041 = vmatprep.subr.bf16.mxu0 0
        %3042 = vmatpush1.bf16.msra.mxu0 0
        %3043 = vmatprep.subr.bf16.mxu0 0
        %3044 = vmatpush1.bf16.msra.mxu0 0
        %3045 = vmatprep.subr.bf16.mxu0 0
        %3046 = vmatpush1.bf16.msra.mxu0 0
        %3047 = vmatprep.subr.bf16.mxu0 0
        %3048 = vmatpush1.bf16.msra.mxu0 0
        %3049 = vmatprep.subr.bf16.mxu0 0
        %3050 = vmatpush1.bf16.msra.mxu0 0
        %3051 = vmatprep.subr.bf16.mxu0 0
        %3052 = vmatpush1.bf16.msra.mxu0 0
        %3053 = vmatprep.subr.bf16.mxu0 0
        %3054 = vmatpush1.bf16.msra.mxu0 %v3035
        %3055 = vmatprep.subr.bf16.mxu0 0
        %3056 = vmatpush1.bf16.msra.mxu0 %v3034
        %3057 = vmatprep.subr.bf16.mxu0 0
        %3058 = vmatpush2.bf16.msra.mxu0 0
        %3059 = vmatprep.subr.bf16.mxu0 0
        %3060 = vmatpush2.bf16.msra.mxu0 0
        %3061 = vmatprep.subr.bf16.mxu0 0
        %3062 = vmatpush2.bf16.msra.mxu0 0
        %3063 = vmatprep.subr.bf16.mxu0 0
        %3064 = vmatpush2.bf16.msra.mxu0 0
        %3065 = vmatprep.subr.bf16.mxu0 0
        %3066 = vmatpush2.bf16.msra.mxu0 0
        %3067 = vmatprep.subr.bf16.mxu0 0
        %3068 = vmatpush2.bf16.msra.mxu0 0
        %3069 = vmatprep.subr.bf16.mxu0 0
        %3070 = vmatpush2.bf16.msra.mxu0 0
        %3071 = vmatprep.subr.bf16.mxu0 0
        %3072 = vmatpush2.bf16.msra.mxu0 0
        %3073 = vmatprep.mubr.bf16.mxu0 0
        %3074 = vmatmul.mubr.bf16.gmra.mxu0 %v3039
        %v3075 = vpop.f32.mrf.mxu0
        %v3076 = vadd.f32 0.0, %v3075
        %v3077 = vpop.f32.mrf.mxu0
        %v3078 = vpop.f32.mrf.mxu0
        %v3079 = vpop.f32.mrf.mxu0
        %3080 = vdwg.mxu0
        %v3081 = vld [vmem:[%s59] sm:$0x3]
        %v3082 = vld [vmem:[%s61] sm:$0xf]
        %v3083 = vld [vmem:[%s61 + $0x4] sm:$0xf]
        %v3084 = vld [vmem:[%s63] sm:$0x3]
        %v3085 = vlaneseq
        %v3086 = vshrl.u32 %v3085, 7
        %v3087 = vsub.s32 0, %v3086
        %v3088 = vrot.slane %v3081, %v3087
        %v3089 = vmul.f32 %v3076, %v3088
        %v3090 = vlaneseq
        %v3091 = vshrl.u32 %v3090, 7
        %v3092 = vsub.s32 1, %v3091
        %v3093 = vrot.slane %v3081, %v3092
        %v3094 = vadd.f32 %v3089, %v3093
        %v3095 = vmax.f32 %v3094, 0.0
        %v3096 = vpack.c.bf16 %v3095, %v3095
        %v3099 = vunpack.c.l.b16 %v3082
        %v3100 = vunpack.c.l.b16 %v3083
        %v3101 = vpack.c.b16 %v3100, %v3099
        %v3104 = vsel %vm1498, %v3096, 0
        %3106 = vmatprep.subr.bf16.mxu0 0
        %3107 = vmatpush1.bf16.msra.mxu0 0
        %3108 = vmatprep.subr.bf16.mxu0 0
        %3109 = vmatpush1.bf16.msra.mxu0 0
        %3110 = vmatprep.subr.bf16.mxu0 0
        %3111 = vmatpush1.bf16.msra.mxu0 0
        %3112 = vmatprep.subr.bf16.mxu0 0
        %3113 = vmatpush1.bf16.msra.mxu0 0
        %3114 = vmatprep.subr.bf16.mxu0 0
        %3115 = vmatpush1.bf16.msra.mxu0 0
        %3116 = vmatprep.subr.bf16.mxu0 0
        %3117 = vmatpush1.bf16.msra.mxu0 0
        %3118 = vmatprep.subr.bf16.mxu0 0
        %3119 = vmatpush1.bf16.msra.mxu0 0
        %3120 = vmatprep.subr.bf16.mxu0 0
        %3121 = vmatpush1.bf16.msra.mxu0 %v3101
        %3122 = vmatprep.subr.bf16.mxu0 0
        %3123 = vmatpush2.bf16.msra.mxu0 0
        %3124 = vmatprep.subr.bf16.mxu0 0
        %3125 = vmatpush2.bf16.msra.mxu0 0
        %3126 = vmatprep.subr.bf16.mxu0 0
        %3127 = vmatpush2.bf16.msra.mxu0 0
        %3128 = vmatprep.subr.bf16.mxu0 0
        %3129 = vmatpush2.bf16.msra.mxu0 0
        %3130 = vmatprep.subr.bf16.mxu0 0
        %3131 = vmatpush2.bf16.msra.mxu0 0
        %3132 = vmatprep.subr.bf16.mxu0 0
        %3133 = vmatpush2.bf16.msra.mxu0 0
        %3134 = vmatprep.subr.bf16.mxu0 0
        %3135 = vmatpush2.bf16.msra.mxu0 0
        %3136 = vmatprep.subr.bf16.mxu0 0
        %3137 = vmatpush2.bf16.msra.mxu0 0
        %3138 = vmatprep.mubr.bf16.mxu0 0
        %3139 = vmatmul.mubr.bf16.gmra.mxu0 %v3104
        %v3140 = vpop.f32.mrf.mxu0
        %v3141 = vadd.f32 0.0, %v3140
        %v3142 = vpop.f32.mrf.mxu0
        %v3143 = vpop.f32.mrf.mxu0
        %v3144 = vpop.f32.mrf.mxu0
        %3145 = vdwg.mxu0
        %v3146 = vlaneseq
        %v3147 = vshrl.u32 %v3146, 7
        %v3148 = vsub.s32 0, %v3147
        %v3149 = vrot.slane %v3084, %v3148
        %v3150 = vmul.f32 %v3141, %v3149
        %v3151 = vlaneseq
        %v3152 = vshrl.u32 %v3151, 7
        %v3153 = vsub.s32 1, %v3152
        %v3154 = vrot.slane %v3084, %v3153
        %v3155 = vadd.f32 %v3150, %v3154
        %v3156 = vmax.f32 %v3155, 0.0
        %v3157 = vpack.c.bf16 %v3156, %v3156
        %v3158 = vld [vmem:[%s57] sm:$0x3]
        %vm3159 = vcmask 31744
        %v3161 = vsel %vm3159, %v3158, 0
        %vm3163 = vcmask 1041408
        %v3165 = vsel %vm3163, %v3157, 0
        %3167 = vmatprep.subr.bf16.mxu0 0
        %3168 = vmatpush1.bf16.msra.mxu0 0
        %3169 = vmatprep.subr.bf16.mxu0 0
        %3170 = vmatpush1.bf16.msra.mxu0 0
        %3171 = vmatprep.subr.bf16.mxu0 0
        %3172 = vmatpush1.bf16.msra.mxu0 0
        %3173 = vmatprep.subr.bf16.mxu0 0
        %3174 = vmatpush1.bf16.msra.mxu0 0
        %3175 = vmatprep.subr.bf16.mxu0 0
        %3176 = vmatpush1.bf16.msra.mxu0 0
        %3177 = vmatprep.subr.bf16.mxu0 0
        %3178 = vmatpush1.bf16.msra.mxu0 0
        %3179 = vmatprep.subr.bf16.mxu0 0
        %3180 = vmatpush1.bf16.msra.mxu0 0
        %3181 = vmatprep.subr.bf16.mxu0 0
        %3182 = vmatpush1.bf16.msra.mxu0 %v3165
        %3183 = vmatprep.subr.bf16.mxu0 0
        %3184 = vmatpush2.bf16.msra.mxu0 0
        %3185 = vmatprep.subr.bf16.mxu0 0
        %3186 = vmatpush2.bf16.msra.mxu0 0
        %3187 = vmatprep.subr.bf16.mxu0 0
        %3188 = vmatpush2.bf16.msra.mxu0 0
        %3189 = vmatprep.subr.bf16.mxu0 0
        %3190 = vmatpush2.bf16.msra.mxu0 0
        %3191 = vmatprep.subr.bf16.mxu0 0
        %3192 = vmatpush2.bf16.msra.mxu0 0
        %3193 = vmatprep.subr.bf16.mxu0 0
        %3194 = vmatpush2.bf16.msra.mxu0 0
        %3195 = vmatprep.subr.bf16.mxu0 0
        %3196 = vmatpush2.bf16.msra.mxu0 0
        %3197 = vmatprep.subr.bf16.mxu0 0
        %3198 = vmatpush2.bf16.msra.mxu0 0
        %3199 = vmatprep.mubr.bf16.mxu0 0
        %3200 = vmatmul.mubr.bf16.gmra.mxu0 %v3161
        %v3201 = vpop.f32.mrf.mxu0
        %v3202 = vadd.f32 0.0, %v3201
        %v3203 = vpop.f32.mrf.mxu0
        %v3204 = vpop.f32.mrf.mxu0
        %v3205 = vpop.f32.mrf.mxu0
        %3206 = vdwg.mxu0
        %v3207 = vpack.c.bf16 %v3202, %v3202
        %s3208 = scalar_lea.vmem %s57, 2
        %v3209 = vld [vmem:[%s3208] sm:$0x3]
        %v3211 = vsel %vm3159, %v3209, 0
        %3213 = vmatprep.subr.bf16.mxu0 0
        %3214 = vmatpush1.bf16.msra.mxu0 0
        %3215 = vmatprep.subr.bf16.mxu0 0
        %3216 = vmatpush1.bf16.msra.mxu0 0
        %3217 = vmatprep.subr.bf16.mxu0 0
        %3218 = vmatpush1.bf16.msra.mxu0 0
        %3219 = vmatprep.subr.bf16.mxu0 0
        %3220 = vmatpush1.bf16.msra.mxu0 0
        %3221 = vmatprep.subr.bf16.mxu0 0
        %3222 = vmatpush1.bf16.msra.mxu0 0
        %3223 = vmatprep.subr.bf16.mxu0 0
        %3224 = vmatpush1.bf16.msra.mxu0 0
        %3225 = vmatprep.subr.bf16.mxu0 0
        %3226 = vmatpush1.bf16.msra.mxu0 0
        %3227 = vmatprep.subr.bf16.mxu0 0
        %3228 = vmatpush1.bf16.msra.mxu0 %v3165
        %3229 = vmatprep.subr.bf16.mxu0 0
        %3230 = vmatpush2.bf16.msra.mxu0 0
        %3231 = vmatprep.subr.bf16.mxu0 0
        %3232 = vmatpush2.bf16.msra.mxu0 0
        %3233 = vmatprep.subr.bf16.mxu0 0
        %3234 = vmatpush2.bf16.msra.mxu0 0
        %3235 = vmatprep.subr.bf16.mxu0 0
        %3236 = vmatpush2.bf16.msra.mxu0 0
        %3237 = vmatprep.subr.bf16.mxu0 0
        %3238 = vmatpush2.bf16.msra.mxu0 0
        %3239 = vmatprep.subr.bf16.mxu0 0
        %3240 = vmatpush2.bf16.msra.mxu0 0
        %3241 = vmatprep.subr.bf16.mxu0 0
        %3242 = vmatpush2.bf16.msra.mxu0 0
        %3243 = vmatprep.subr.bf16.mxu0 0
        %3244 = vmatpush2.bf16.msra.mxu0 0
        %3245 = vmatprep.mubr.bf16.mxu0 0
        %3246 = vmatmul.mubr.bf16.gmra.mxu0 %v3211
        %v3247 = vpop.f32.mrf.mxu0
        %v3248 = vadd.f32 0.0, %v3247
        %v3249 = vpop.f32.mrf.mxu0
        %v3250 = vpop.f32.mrf.mxu0
        %v3251 = vpop.f32.mrf.mxu0
        %3252 = vdwg.mxu0
        %v3253 = vpack.c.bf16 %v3248, %v3248
        %v3254 = vld [vmem:[%s65] sm:$0xf]
        %v3255 = vld [vmem:[%s65 + $0x4] sm:$0xf]
        %s3256 = scalar_lea.vmem %s65, 8
        %v3257 = vld [vmem:[%s3256] sm:$0xf]
        %v3258 = vld [vmem:[%s3256 + $0x4] sm:$0xf]
        %v3261 = vunpack.c.l.b16 %v3257
        %v3262 = vunpack.c.l.b16 %v3258
        %v3263 = vpack.c.b16 %v3262, %v3261
        %v3265 = vsel %vm1498, %v3157, 0
        %3267 = vmatprep.subr.bf16.mxu0 0
        %3268 = vmatpush1.bf16.msra.mxu0 0
        %3269 = vmatprep.subr.bf16.mxu0 0
        %3270 = vmatpush1.bf16.msra.mxu0 0
        %3271 = vmatprep.subr.bf16.mxu0 0
        %3272 = vmatpush1.bf16.msra.mxu0 0
        %3273 = vmatprep.subr.bf16.mxu0 0
        %3274 = vmatpush1.bf16.msra.mxu0 0
        %3275 = vmatprep.subr.bf16.mxu0 0
        %3276 = vmatpush1.bf16.msra.mxu0 0
        %3277 = vmatprep.subr.bf16.mxu0 0
        %3278 = vmatpush1.bf16.msra.mxu0 0
        %3279 = vmatprep.subr.bf16.mxu0 0
        %3280 = vmatpush1.bf16.msra.mxu0 0
        %3281 = vmatprep.subr.bf16.mxu0 0
        %3282 = vmatpush1.bf16.msra.mxu0 %v3263
        %3283 = vmatprep.subr.bf16.mxu0 0
        %3284 = vmatpush2.bf16.msra.mxu0 0
        %3285 = vmatprep.subr.bf16.mxu0 0
        %3286 = vmatpush2.bf16.msra.mxu0 0
        %3287 = vmatprep.subr.bf16.mxu0 0
        %3288 = vmatpush2.bf16.msra.mxu0 0
        %3289 = vmatprep.subr.bf16.mxu0 0
        %3290 = vmatpush2.bf16.msra.mxu0 0
        %3291 = vmatprep.subr.bf16.mxu0 0
        %3292 = vmatpush2.bf16.msra.mxu0 0
        %3293 = vmatprep.subr.bf16.mxu0 0
        %3294 = vmatpush2.bf16.msra.mxu0 0
        %3295 = vmatprep.subr.bf16.mxu0 0
        %3296 = vmatpush2.bf16.msra.mxu0 0
        %3297 = vmatprep.subr.bf16.mxu0 0
        %3298 = vmatpush2.bf16.msra.mxu0 0
        %3299 = vmatprep.mubr.bf16.mxu0 0
        %3300 = vmatmul.mubr.bf16.gmra.mxu0 %v3265
        %v3301 = vpop.f32.mrf.mxu0
        %v3302 = vadd.f32 0.0, %v3301
        %v3303 = vpop.f32.mrf.mxu0
        %v3304 = vpop.f32.mrf.mxu0
        %v3305 = vpop.f32.mrf.mxu0
        %3306 = vdwg.mxu0
        %v3309 = vunpack.c.l.b16 %v3254
        %v3310 = vunpack.c.l.b16 %v3255
        %v3311 = vpack.c.b16 %v3310, %v3309
        %v3314 = vsel %vm1498, %v3207, 0
        %3316 = vmatprep.subr.bf16.mxu0 0
        %3317 = vmatpush1.bf16.msra.mxu0 0
        %3318 = vmatprep.subr.bf16.mxu0 0
        %3319 = vmatpush1.bf16.msra.mxu0 0
        %3320 = vmatprep.subr.bf16.mxu0 0
        %3321 = vmatpush1.bf16.msra.mxu0 0
        %3322 = vmatprep.subr.bf16.mxu0 0
        %3323 = vmatpush1.bf16.msra.mxu0 0
        %3324 = vmatprep.subr.bf16.mxu0 0
        %3325 = vmatpush1.bf16.msra.mxu0 0
        %3326 = vmatprep.subr.bf16.mxu0 0
        %3327 = vmatpush1.bf16.msra.mxu0 0
        %3328 = vmatprep.subr.bf16.mxu0 0
        %3329 = vmatpush1.bf16.msra.mxu0 0
        %3330 = vmatprep.subr.bf16.mxu0 0
        %3331 = vmatpush1.bf16.msra.mxu0 %v3311
        %3332 = vmatprep.subr.bf16.mxu0 0
        %3333 = vmatpush2.bf16.msra.mxu0 0
        %3334 = vmatprep.subr.bf16.mxu0 0
        %3335 = vmatpush2.bf16.msra.mxu0 0
        %3336 = vmatprep.subr.bf16.mxu0 0
        %3337 = vmatpush2.bf16.msra.mxu0 0
        %3338 = vmatprep.subr.bf16.mxu0 0
        %3339 = vmatpush2.bf16.msra.mxu0 0
        %3340 = vmatprep.subr.bf16.mxu0 0
        %3341 = vmatpush2.bf16.msra.mxu0 0
        %3342 = vmatprep.subr.bf16.mxu0 0
        %3343 = vmatpush2.bf16.msra.mxu0 0
        %3344 = vmatprep.subr.bf16.mxu0 0
        %3345 = vmatpush2.bf16.msra.mxu0 0
        %3346 = vmatprep.subr.bf16.mxu0 0
        %3347 = vmatpush2.bf16.msra.mxu0 0
        %3348 = vmatprep.mubr.bf16.mxu0 0
        %3349 = vmatmul.mubr.bf16.gmra.mxu0 %v3314
        %v3350 = vpop.f32.mrf.mxu0
        %v3351 = vadd.f32 %v3302, %v3350
        %v3352 = vpop.f32.mrf.mxu0
        %v3353 = vpop.f32.mrf.mxu0
        %v3354 = vpop.f32.mrf.mxu0
        %3355 = vdwg.mxu0
        %s3356 = scalar_lea.vmem %s65, 16
        %v3357 = vld [vmem:[%s3356] sm:$0xf]
        %v3358 = vld [vmem:[%s3356 + $0x4] sm:$0xf]
        %v3361 = vunpack.c.l.b16 %v3357
        %v3362 = vunpack.c.l.b16 %v3358
        %v3363 = vpack.c.b16 %v3362, %v3361
        %v3366 = vsel %vm1498, %v3253, 0
        %3368 = vmatprep.subr.bf16.mxu0 0
        %3369 = vmatpush1.bf16.msra.mxu0 0
        %3370 = vmatprep.subr.bf16.mxu0 0
        %3371 = vmatpush1.bf16.msra.mxu0 0
        %3372 = vmatprep.subr.bf16.mxu0 0
        %3373 = vmatpush1.bf16.msra.mxu0 0
        %3374 = vmatprep.subr.bf16.mxu0 0
        %3375 = vmatpush1.bf16.msra.mxu0 0
        %3376 = vmatprep.subr.bf16.mxu0 0
        %3377 = vmatpush1.bf16.msra.mxu0 0
        %3378 = vmatprep.subr.bf16.mxu0 0
        %3379 = vmatpush1.bf16.msra.mxu0 0
        %3380 = vmatprep.subr.bf16.mxu0 0
        %3381 = vmatpush1.bf16.msra.mxu0 0
        %3382 = vmatprep.subr.bf16.mxu0 0
        %3383 = vmatpush1.bf16.msra.mxu0 %v3363
        %3384 = vmatprep.subr.bf16.mxu0 0
        %3385 = vmatpush2.bf16.msra.mxu0 0
        %3386 = vmatprep.subr.bf16.mxu0 0
        %3387 = vmatpush2.bf16.msra.mxu0 0
        %3388 = vmatprep.subr.bf16.mxu0 0
        %3389 = vmatpush2.bf16.msra.mxu0 0
        %3390 = vmatprep.subr.bf16.mxu0 0
        %3391 = vmatpush2.bf16.msra.mxu0 0
        %3392 = vmatprep.subr.bf16.mxu0 0
        %3393 = vmatpush2.bf16.msra.mxu0 0
        %3394 = vmatprep.subr.bf16.mxu0 0
        %3395 = vmatpush2.bf16.msra.mxu0 0
        %3396 = vmatprep.subr.bf16.mxu0 0
        %3397 = vmatpush2.bf16.msra.mxu0 0
        %3398 = vmatprep.subr.bf16.mxu0 0
        %3399 = vmatpush2.bf16.msra.mxu0 0
        %3400 = vmatprep.mubr.bf16.mxu0 0
        %3401 = vmatmul.mubr.bf16.gmra.mxu0 %v3366
        %v3402 = vpop.f32.mrf.mxu0
        %v3403 = vadd.f32 0.0, %v3402
        %v3404 = vpop.f32.mrf.mxu0
        %v3405 = vpop.f32.mrf.mxu0
        %v3406 = vpop.f32.mrf.mxu0
        %3407 = vdwg.mxu0
        %v3408 = vadd.f32 %v3351, %v3403
        %3410 = vrot.lane.b32.xlu0 %v3408, 16
        %v3411 = vpop.permute.xlu0 %3410
        %v3413 = vsel %vm1498, %v3076, %v3411
        %v3414 = vld [vmem:[%s67] sm:$0x3]
        %v3415 = vld [vmem:[%s69] sm:$0xf]
        %v3416 = vld [vmem:[%s69 + $0x4] sm:$0xf]
        %v3417 = vld [vmem:[%s69 + $0x8] sm:$0xf]
        %v3418 = vld [vmem:[%s71] sm:$0x3]
        %v3419 = vlaneseq
        %v3420 = vshrl.u32 %v3419, 7
        %v3421 = vsub.s32 0, %v3420
        %v3422 = vrot.slane %v3414, %v3421
        %v3423 = vmul.f32 %v3413, %v3422
        %v3424 = vlaneseq
        %v3425 = vshrl.u32 %v3424, 7
        %v3426 = vsub.s32 1, %v3425
        %v3427 = vrot.slane %v3414, %v3426
        %v3428 = vadd.f32 %v3423, %v3427
        %v3429 = vmax.f32 %v3428, 0.0
        %v3430 = vpack.c.bf16 %v3429, %v3429
        %v3434 = vunpack.c.l.b16 %v3415
        %v3435 = vunpack.c.l.b16 %v3416
        %v3436 = vunpack.c.l.b16 %v3417
        %v3437 = vpack.c.b16 %v3435, %v3434
        %v3438 = vpack.c.b16 %v3436, %v3436
        %v3441 = vsel %vm1862, %v3430, 0
        %v3444 = vsel %vm1866, %v3438, 0
        %3446 = vmatprep.subr.bf16.mxu0 0
        %3447 = vmatpush1.bf16.msra.mxu0 0
        %3448 = vmatprep.subr.bf16.mxu0 0
        %3449 = vmatpush1.bf16.msra.mxu0 0
        %3450 = vmatprep.subr.bf16.mxu0 0
        %3451 = vmatpush1.bf16.msra.mxu0 0
        %3452 = vmatprep.subr.bf16.mxu0 0
        %3453 = vmatpush1.bf16.msra.mxu0 0
        %3454 = vmatprep.subr.bf16.mxu0 0
        %3455 = vmatpush1.bf16.msra.mxu0 0
        %3456 = vmatprep.subr.bf16.mxu0 0
        %3457 = vmatpush1.bf16.msra.mxu0 0
        %3458 = vmatprep.subr.bf16.mxu0 0
        %3459 = vmatpush1.bf16.msra.mxu0 %v3444
        %3460 = vmatprep.subr.bf16.mxu0 0
        %3461 = vmatpush1.bf16.msra.mxu0 %v3437
        %3462 = vmatprep.subr.bf16.mxu0 0
        %3463 = vmatpush2.bf16.msra.mxu0 0
        %3464 = vmatprep.subr.bf16.mxu0 0
        %3465 = vmatpush2.bf16.msra.mxu0 0
        %3466 = vmatprep.subr.bf16.mxu0 0
        %3467 = vmatpush2.bf16.msra.mxu0 0
        %3468 = vmatprep.subr.bf16.mxu0 0
        %3469 = vmatpush2.bf16.msra.mxu0 0
        %3470 = vmatprep.subr.bf16.mxu0 0
        %3471 = vmatpush2.bf16.msra.mxu0 0
        %3472 = vmatprep.subr.bf16.mxu0 0
        %3473 = vmatpush2.bf16.msra.mxu0 0
        %3474 = vmatprep.subr.bf16.mxu0 0
        %3475 = vmatpush2.bf16.msra.mxu0 0
        %3476 = vmatprep.subr.bf16.mxu0 0
        %3477 = vmatpush2.bf16.msra.mxu0 0
        %3478 = vmatprep.mubr.bf16.mxu0 0
        %3479 = vmatmul.mubr.bf16.gmra.mxu0 %v3441
        %v3480 = vpop.f32.mrf.mxu0
        %v3481 = vadd.f32 0.0, %v3480
        %v3482 = vpop.f32.mrf.mxu0
        %v3483 = vpop.f32.mrf.mxu0
        %v3484 = vpop.f32.mrf.mxu0
        %3485 = vdwg.mxu0
        %v3486 = vlaneseq
        %v3487 = vshrl.u32 %v3486, 7
        %v3488 = vsub.s32 0, %v3487
        %v3489 = vrot.slane %v3418, %v3488
        %v3490 = vmul.f32 %v3481, %v3489
        %v3491 = vlaneseq
        %v3492 = vshrl.u32 %v3491, 7
        %v3493 = vsub.s32 1, %v3492
        %v3494 = vrot.slane %v3418, %v3493
        %v3495 = vadd.f32 %v3490, %v3494
        %v3496 = vmax.f32 %v3495, 0.0
        %v3497 = vpack.c.bf16 %v3496, %v3496
        %v3499 = vsel %vm3163, %v3497, 0
        %3501 = vmatprep.subr.bf16.mxu0 0
        %3502 = vmatpush1.bf16.msra.mxu0 0
        %3503 = vmatprep.subr.bf16.mxu0 0
        %3504 = vmatpush1.bf16.msra.mxu0 0
        %3505 = vmatprep.subr.bf16.mxu0 0
        %3506 = vmatpush1.bf16.msra.mxu0 0
        %3507 = vmatprep.subr.bf16.mxu0 0
        %3508 = vmatpush1.bf16.msra.mxu0 0
        %3509 = vmatprep.subr.bf16.mxu0 0
        %3510 = vmatpush1.bf16.msra.mxu0 0
        %3511 = vmatprep.subr.bf16.mxu0 0
        %3512 = vmatpush1.bf16.msra.mxu0 0
        %3513 = vmatprep.subr.bf16.mxu0 0
        %3514 = vmatpush1.bf16.msra.mxu0 0
        %3515 = vmatprep.subr.bf16.mxu0 0
        %3516 = vmatpush1.bf16.msra.mxu0 %v3499
        %3517 = vmatprep.subr.bf16.mxu0 0
        %3518 = vmatpush2.bf16.msra.mxu0 0
        %3519 = vmatprep.subr.bf16.mxu0 0
        %3520 = vmatpush2.bf16.msra.mxu0 0
        %3521 = vmatprep.subr.bf16.mxu0 0
        %3522 = vmatpush2.bf16.msra.mxu0 0
        %3523 = vmatprep.subr.bf16.mxu0 0
        %3524 = vmatpush2.bf16.msra.mxu0 0
        %3525 = vmatprep.subr.bf16.mxu0 0
        %3526 = vmatpush2.bf16.msra.mxu0 0
        %3527 = vmatprep.subr.bf16.mxu0 0
        %3528 = vmatpush2.bf16.msra.mxu0 0
        %3529 = vmatprep.subr.bf16.mxu0 0
        %3530 = vmatpush2.bf16.msra.mxu0 0
        %3531 = vmatprep.subr.bf16.mxu0 0
        %3532 = vmatpush2.bf16.msra.mxu0 0
        %3533 = vmatprep.mubr.bf16.mxu0 0
        %3534 = vmatmul.mubr.bf16.gmra.mxu0 %v3161
        %v3535 = vpop.f32.mrf.mxu0
        %v3536 = vadd.f32 0.0, %v3535
        %v3537 = vpop.f32.mrf.mxu0
        %v3538 = vpop.f32.mrf.mxu0
        %v3539 = vpop.f32.mrf.mxu0
        %3540 = vdwg.mxu0
        %v3541 = vpack.c.bf16 %v3536, %v3536
        %3542 = vmatprep.subr.bf16.mxu0 0
        %3543 = vmatpush1.bf16.msra.mxu0 0
        %3544 = vmatprep.subr.bf16.mxu0 0
        %3545 = vmatpush1.bf16.msra.mxu0 0
        %3546 = vmatprep.subr.bf16.mxu0 0
        %3547 = vmatpush1.bf16.msra.mxu0 0
        %3548 = vmatprep.subr.bf16.mxu0 0
        %3549 = vmatpush1.bf16.msra.mxu0 0
        %3550 = vmatprep.subr.bf16.mxu0 0
        %3551 = vmatpush1.bf16.msra.mxu0 0
        %3552 = vmatprep.subr.bf16.mxu0 0
        %3553 = vmatpush1.bf16.msra.mxu0 0
        %3554 = vmatprep.subr.bf16.mxu0 0
        %3555 = vmatpush1.bf16.msra.mxu0 0
        %3556 = vmatprep.subr.bf16.mxu0 0
        %3557 = vmatpush1.bf16.msra.mxu0 %v3499
        %3558 = vmatprep.subr.bf16.mxu0 0
        %3559 = vmatpush2.bf16.msra.mxu0 0
        %3560 = vmatprep.subr.bf16.mxu0 0
        %3561 = vmatpush2.bf16.msra.mxu0 0
        %3562 = vmatprep.subr.bf16.mxu0 0
        %3563 = vmatpush2.bf16.msra.mxu0 0
        %3564 = vmatprep.subr.bf16.mxu0 0
        %3565 = vmatpush2.bf16.msra.mxu0 0
        %3566 = vmatprep.subr.bf16.mxu0 0
        %3567 = vmatpush2.bf16.msra.mxu0 0
        %3568 = vmatprep.subr.bf16.mxu0 0
        %3569 = vmatpush2.bf16.msra.mxu0 0
        %3570 = vmatprep.subr.bf16.mxu0 0
        %3571 = vmatpush2.bf16.msra.mxu0 0
        %3572 = vmatprep.subr.bf16.mxu0 0
        %3573 = vmatpush2.bf16.msra.mxu0 0
        %3574 = vmatprep.mubr.bf16.mxu0 0
        %3575 = vmatmul.mubr.bf16.gmra.mxu0 %v3211
        %v3576 = vpop.f32.mrf.mxu0
        %v3577 = vadd.f32 0.0, %v3576
        %v3578 = vpop.f32.mrf.mxu0
        %v3579 = vpop.f32.mrf.mxu0
        %v3580 = vpop.f32.mrf.mxu0
        %3581 = vdwg.mxu0
        %v3582 = vpack.c.bf16 %v3577, %v3577
        %v3583 = vld [vmem:[%s73] sm:$0xf]
        %v3584 = vld [vmem:[%s73 + $0x4] sm:$0xf]
        %s3585 = scalar_lea.vmem %s73, 8
        %v3586 = vld [vmem:[%s3585] sm:$0xf]
        %v3587 = vld [vmem:[%s3585 + $0x4] sm:$0xf]
        %v3590 = vunpack.c.l.b16 %v3586
        %v3591 = vunpack.c.l.b16 %v3587
        %v3592 = vpack.c.b16 %v3591, %v3590
        %v3594 = vsel %vm1498, %v3497, 0
        %3596 = vmatprep.subr.bf16.mxu0 0
        %3597 = vmatpush1.bf16.msra.mxu0 0
        %3598 = vmatprep.subr.bf16.mxu0 0
        %3599 = vmatpush1.bf16.msra.mxu0 0
        %3600 = vmatprep.subr.bf16.mxu0 0
        %3601 = vmatpush1.bf16.msra.mxu0 0
        %3602 = vmatprep.subr.bf16.mxu0 0
        %3603 = vmatpush1.bf16.msra.mxu0 0
        %3604 = vmatprep.subr.bf16.mxu0 0
        %3605 = vmatpush1.bf16.msra.mxu0 0
        %3606 = vmatprep.subr.bf16.mxu0 0
        %3607 = vmatpush1.bf16.msra.mxu0 0
        %3608 = vmatprep.subr.bf16.mxu0 0
        %3609 = vmatpush1.bf16.msra.mxu0 0
        %3610 = vmatprep.subr.bf16.mxu0 0
        %3611 = vmatpush1.bf16.msra.mxu0 %v3592
        %3612 = vmatprep.subr.bf16.mxu0 0
        %3613 = vmatpush2.bf16.msra.mxu0 0
        %3614 = vmatprep.subr.bf16.mxu0 0
        %3615 = vmatpush2.bf16.msra.mxu0 0
        %3616 = vmatprep.subr.bf16.mxu0 0
        %3617 = vmatpush2.bf16.msra.mxu0 0
        %3618 = vmatprep.subr.bf16.mxu0 0
        %3619 = vmatpush2.bf16.msra.mxu0 0
        %3620 = vmatprep.subr.bf16.mxu0 0
        %3621 = vmatpush2.bf16.msra.mxu0 0
        %3622 = vmatprep.subr.bf16.mxu0 0
        %3623 = vmatpush2.bf16.msra.mxu0 0
        %3624 = vmatprep.subr.bf16.mxu0 0
        %3625 = vmatpush2.bf16.msra.mxu0 0
        %3626 = vmatprep.subr.bf16.mxu0 0
        %3627 = vmatpush2.bf16.msra.mxu0 0
        %3628 = vmatprep.mubr.bf16.mxu0 0
        %3629 = vmatmul.mubr.bf16.gmra.mxu0 %v3594
        %v3630 = vpop.f32.mrf.mxu0
        %v3631 = vadd.f32 0.0, %v3630
        %v3632 = vpop.f32.mrf.mxu0
        %v3633 = vpop.f32.mrf.mxu0
        %v3634 = vpop.f32.mrf.mxu0
        %3635 = vdwg.mxu0
        %v3638 = vunpack.c.l.b16 %v3583
        %v3639 = vunpack.c.l.b16 %v3584
        %v3640 = vpack.c.b16 %v3639, %v3638
        %v3643 = vsel %vm1498, %v3541, 0
        %3645 = vmatprep.subr.bf16.mxu0 0
        %3646 = vmatpush1.bf16.msra.mxu0 0
        %3647 = vmatprep.subr.bf16.mxu0 0
        %3648 = vmatpush1.bf16.msra.mxu0 0
        %3649 = vmatprep.subr.bf16.mxu0 0
        %3650 = vmatpush1.bf16.msra.mxu0 0
        %3651 = vmatprep.subr.bf16.mxu0 0
        %3652 = vmatpush1.bf16.msra.mxu0 0
        %3653 = vmatprep.subr.bf16.mxu0 0
        %3654 = vmatpush1.bf16.msra.mxu0 0
        %3655 = vmatprep.subr.bf16.mxu0 0
        %3656 = vmatpush1.bf16.msra.mxu0 0
        %3657 = vmatprep.subr.bf16.mxu0 0
        %3658 = vmatpush1.bf16.msra.mxu0 0
        %3659 = vmatprep.subr.bf16.mxu0 0
        %3660 = vmatpush1.bf16.msra.mxu0 %v3640
        %3661 = vmatprep.subr.bf16.mxu0 0
        %3662 = vmatpush2.bf16.msra.mxu0 0
        %3663 = vmatprep.subr.bf16.mxu0 0
        %3664 = vmatpush2.bf16.msra.mxu0 0
        %3665 = vmatprep.subr.bf16.mxu0 0
        %3666 = vmatpush2.bf16.msra.mxu0 0
        %3667 = vmatprep.subr.bf16.mxu0 0
        %3668 = vmatpush2.bf16.msra.mxu0 0
        %3669 = vmatprep.subr.bf16.mxu0 0
        %3670 = vmatpush2.bf16.msra.mxu0 0
        %3671 = vmatprep.subr.bf16.mxu0 0
        %3672 = vmatpush2.bf16.msra.mxu0 0
        %3673 = vmatprep.subr.bf16.mxu0 0
        %3674 = vmatpush2.bf16.msra.mxu0 0
        %3675 = vmatprep.subr.bf16.mxu0 0
        %3676 = vmatpush2.bf16.msra.mxu0 0
        %3677 = vmatprep.mubr.bf16.mxu0 0
        %3678 = vmatmul.mubr.bf16.gmra.mxu0 %v3643
        %v3679 = vpop.f32.mrf.mxu0
        %v3680 = vadd.f32 %v3631, %v3679
        %v3681 = vpop.f32.mrf.mxu0
        %v3682 = vpop.f32.mrf.mxu0
        %v3683 = vpop.f32.mrf.mxu0
        %3684 = vdwg.mxu0
        %s3685 = scalar_lea.vmem %s73, 16
        %v3686 = vld [vmem:[%s3685] sm:$0xf]
        %v3687 = vld [vmem:[%s3685 + $0x4] sm:$0xf]
        %v3690 = vunpack.c.l.b16 %v3686
        %v3691 = vunpack.c.l.b16 %v3687
        %v3692 = vpack.c.b16 %v3691, %v3690
        %v3695 = vsel %vm1498, %v3582, 0
        %3697 = vmatprep.subr.bf16.mxu0 0
        %3698 = vmatpush1.bf16.msra.mxu0 0
        %3699 = vmatprep.subr.bf16.mxu0 0
        %3700 = vmatpush1.bf16.msra.mxu0 0
        %3701 = vmatprep.subr.bf16.mxu0 0
        %3702 = vmatpush1.bf16.msra.mxu0 0
        %3703 = vmatprep.subr.bf16.mxu0 0
        %3704 = vmatpush1.bf16.msra.mxu0 0
        %3705 = vmatprep.subr.bf16.mxu0 0
        %3706 = vmatpush1.bf16.msra.mxu0 0
        %3707 = vmatprep.subr.bf16.mxu0 0
        %3708 = vmatpush1.bf16.msra.mxu0 0
        %3709 = vmatprep.subr.bf16.mxu0 0
        %3710 = vmatpush1.bf16.msra.mxu0 0
        %3711 = vmatprep.subr.bf16.mxu0 0
        %3712 = vmatpush1.bf16.msra.mxu0 %v3692
        %3713 = vmatprep.subr.bf16.mxu0 0
        %3714 = vmatpush2.bf16.msra.mxu0 0
        %3715 = vmatprep.subr.bf16.mxu0 0
        %3716 = vmatpush2.bf16.msra.mxu0 0
        %3717 = vmatprep.subr.bf16.mxu0 0
        %3718 = vmatpush2.bf16.msra.mxu0 0
        %3719 = vmatprep.subr.bf16.mxu0 0
        %3720 = vmatpush2.bf16.msra.mxu0 0
        %3721 = vmatprep.subr.bf16.mxu0 0
        %3722 = vmatpush2.bf16.msra.mxu0 0
        %3723 = vmatprep.subr.bf16.mxu0 0
        %3724 = vmatpush2.bf16.msra.mxu0 0
        %3725 = vmatprep.subr.bf16.mxu0 0
        %3726 = vmatpush2.bf16.msra.mxu0 0
        %3727 = vmatprep.subr.bf16.mxu0 0
        %3728 = vmatpush2.bf16.msra.mxu0 0
        %3729 = vmatprep.mubr.bf16.mxu0 0
        %3730 = vmatmul.mubr.bf16.gmra.mxu0 %v3695
        %v3731 = vpop.f32.mrf.mxu0
        %v3732 = vadd.f32 0.0, %v3731
        %v3733 = vpop.f32.mrf.mxu0
        %v3734 = vpop.f32.mrf.mxu0
        %v3735 = vpop.f32.mrf.mxu0
        %3736 = vdwg.mxu0
        %v3737 = vadd.f32 %v3680, %v3732
        %3739 = vrot.lane.b32.xlu0 %v3737, 24
        %v3740 = vpop.permute.xlu0 %3739
        %v3742 = vsel %vm1862, %v3413, %v3740
        %v3743 = vld [vmem:[%s75] sm:$0x3]
        %v3744 = vld [vmem:[%s77] sm:$0xf]
        %v3745 = vld [vmem:[%s77 + $0x4] sm:$0xf]
        %v3746 = vld [vmem:[%s77 + $0x8] sm:$0xf]
        %v3747 = vld [vmem:[%s77 + $0xc] sm:$0xf]
        %v3748 = vld [vmem:[%s79] sm:$0x1]
        %v3749 = vlaneseq
        %v3750 = vshrl.u32 %v3749, 7
        %v3751 = vsub.s32 0, %v3750
        %v3752 = vrot.slane %v3743, %v3751
        %v3753 = vmul.f32 %v3742, %v3752
        %v3754 = vlaneseq
        %v3755 = vshrl.u32 %v3754, 7
        %v3756 = vsub.s32 1, %v3755
        %v3757 = vrot.slane %v3743, %v3756
        %v3758 = vadd.f32 %v3753, %v3757
        %v3759 = vmax.f32 %v3758, 0.0
        %vm3760 = vcmask 257024
        %v3761 = vsel %vm3760, %v3759, 0.0
        %v3762 = vrot.slane %v3761, 4
        %v3763 = vadd.f32 %v3761, %v3762
        %v3764 = vrot.slane %v3763, 2
        %v3765 = vadd.f32 %v3763, %v3764
        %v3766 = vrot.slane %v3765, 1
        %v3767 = vadd.f32 %v3765, %v3766
        %v3768 = vmul.f32 %v3767, 0.25
        %v3769 = vpack.c.bf16 %v3768, %v3768
        %v3774 = vunpack.c.l.b16 %v3744
        %v3775 = vunpack.c.l.b16 %v3745
        %v3776 = vunpack.c.l.b16 %v3746
        %v3777 = vunpack.c.l.b16 %v3747
        %v3778 = vpack.c.b16 %v3775, %v3774
        %v3779 = vpack.c.b16 %v3777, %v3776
        %v3783 = vsel %vm1320, %v3769, 0
        %3785 = vmatprep.subr.bf16.mxu0 0
        %3786 = vmatpush1.bf16.msra.mxu0 0
        %3787 = vmatprep.subr.bf16.mxu0 0
        %3788 = vmatpush1.bf16.msra.mxu0 0
        %3789 = vmatprep.subr.bf16.mxu0 0
        %3790 = vmatpush1.bf16.msra.mxu0 0
        %3791 = vmatprep.subr.bf16.mxu0 0
        %3792 = vmatpush1.bf16.msra.mxu0 0
        %3793 = vmatprep.subr.bf16.mxu0 0
        %3794 = vmatpush1.bf16.msra.mxu0 0
        %3795 = vmatprep.subr.bf16.mxu0 0
        %3796 = vmatpush1.bf16.msra.mxu0 0
        %3797 = vmatprep.subr.bf16.mxu0 0
        %3798 = vmatpush1.bf16.msra.mxu0 %v3779
        %3799 = vmatprep.subr.bf16.mxu0 0
        %3800 = vmatpush1.bf16.msra.mxu0 %v3778
        %3801 = vmatprep.subr.bf16.mxu0 0
        %3802 = vmatpush2.bf16.msra.mxu0 0
        %3803 = vmatprep.subr.bf16.mxu0 0
        %3804 = vmatpush2.bf16.msra.mxu0 0
        %3805 = vmatprep.subr.bf16.mxu0 0
        %3806 = vmatpush2.bf16.msra.mxu0 0
        %3807 = vmatprep.subr.bf16.mxu0 0
        %3808 = vmatpush2.bf16.msra.mxu0 0
        %3809 = vmatprep.subr.bf16.mxu0 0
        %3810 = vmatpush2.bf16.msra.mxu0 0
        %3811 = vmatprep.subr.bf16.mxu0 0
        %3812 = vmatpush2.bf16.msra.mxu0 0
        %3813 = vmatprep.subr.bf16.mxu0 0
        %3814 = vmatpush2.bf16.msra.mxu0 0
        %3815 = vmatprep.subr.bf16.mxu0 0
        %3816 = vmatpush2.bf16.msra.mxu0 0
        %3817 = vmatprep.mubr.bf16.mxu0 0
        %3818 = vmatmul.mubr.bf16.gmra.mxu0 %v3783
        %v3819 = vpop.f32.mrf.mxu0
        %v3820 = vadd.f32 %v3748, %v3819
        %v3821 = vpop.f32.mrf.mxu0
        %v3822 = vpop.f32.mrf.mxu0
        %v3823 = vpop.f32.mrf.mxu0
        %3824 = vdwg.mxu0
        %vm3825 = vcmask 73728
        %3826 = vst.msk [vmem:[%s1202] sm:$0x1] %vm3825, %v3820
        %s3827 = sand.u32 %s948, 1
        %s3828 = scalar_lea.sflag [#allocation3], %s3827
        %s3829 = sand.u32 %s948, 1
        %s3830 = scalar_lea.vmem [#allocation2], %s3829
        // Predicated region
        $region181: #{densenet_forward.1} parent=179 // pred_check
          %p3831 = pneg %p958
        $region182: #{densenet_forward.1} parent=179 // pred_check_branch
          %3833 = sbr.rel (%p3831) target = $region184
        $region183: #{densenet_forward.1} parent=179 // pred_region
          %s3835 = ssub.s32 16, 16
          %3836 = vsyncadd %s3828, %s3835
          %s3837 = smul.addr %s95, 16
          %s3838 = scalar_lea.hbm %s81, %s3837
          %s3840 = sshll.u32 %s3830, 4
          %s3841 = int_to_ptr.vmem [resolvable:$true] %s3840
          %3843 = dma.vmem_to_hbm [thread:$0]  %s3841, 16, %s3838, %s3828
        $region184: #{densenet_forward.1} parent=179 // pred_fallthru
          _
      $region180: #{densenet_forward.1} parent=5 // pred_fallthru
        _
      %p3844 = scmp.le.s32.totalorder 2, %s90
      // Predicated region
      $region185: #{densenet_forward.1} parent=5 // pred_check
        %p3845 = pneg %p3844
      $region186: #{densenet_forward.1} parent=5 // pred_check_branch
        %3847 = sbr.rel (%p3845) target = $region188
      $region187: #{densenet_forward.1} parent=5 // pred_region
        %s3848 = ssub.s32 %s90, 2
        // Predicated region
        $region189: #{densenet_forward.1} parent=187 // pred_check
          %p3849 = pneg %p964
        $region190: #{densenet_forward.1} parent=187 // pred_check_branch
          %3851 = sbr.rel (%p3849) target = $region192
        $region191: #{densenet_forward.1} parent=187 // pred_region
          %s3852 = sand.u32 %s949, 1
          %s3853 = scalar_lea.sflag [#allocation3], %s3852
          %s3854 = sand.u32 %s949, 1
          %s3855 = scalar_lea.vmem [#allocation2], %s3854
          %3856 = dma.done %s3853, 16
        $region192: #{densenet_forward.1} parent=187 // pred_fallthru
          _
      $region188: #{densenet_forward.1} parent=5 // pred_fallthru
        _
    $region6: #{densenet_forward.1} parent=1 // loop_footer
      %s94 = sadd.s32 1, %s90
    $region7: #{densenet_forward.1} parent=1 // loop_footer_branch
      %89 = sbr.rel target = $region3
    $region8: #{densenet_forward.1} parent=1 // loop_exit
      _
    %3857 = vsyncpa [#allocation3], 1
    %s3858 = scalar_lea.sflag [#allocation3], 1
    %3859 = vsyncpa %s3858, 1

</llo_original>
